<compile_context>
chip_gen: v5e
topology: v5e:2x2
jax: 0.10.0
libtpu: 0.0.40
codegen_flags: <defaults>
</compile_context>

<pallas_src>
import math

import jax
import jax.numpy as jnp
import numpy as np
from jax.experimental import pallas as pl
from jax.experimental.pallas import tpu as pltpu

_SQRT_2_OVER_PI = 0.7978845608028654


def _gelu_tanh(x):
    # tanh-approximate GELU: one EUP tanh + a few VALU ops.  Max absolute
    # deviation from torch's exact (erf-based) nn.GELU is ~4e-4.
    inner = _SQRT_2_OVER_PI * (x + 0.044715 * (x * x * x))
    return 0.5 * x * (1.0 + jnp.tanh(inner))


def posmlp_kernel(x_ref, ln_g_ref, ln_b_ref, avg_ref, w1_ref, b1_ref,
                  pexp_ref, tbias_ref, w2_ref, b2_ref, o_ref):
    T = x_ref.shape[1]
    SP = x_ref.shape[2]
    L = x_ref.shape[3]          # = pack * C lanes (128 for C=32)

    # (1, T, SP, L) block -> flat (T*SP, L) rows; each 128-lane row holds
    # `pack` spatial positions x C channels, so everything below is lane-dense.
    x = x_ref[0].reshape(T * SP, L)

    # LayerNorm over each C-channel segment (torch default eps=1e-5, biased
    # variance).  Segment mean / variance are computed on the MXU with a
    # block-diagonal averaging matrix (bf16 operands, f32 accumulation) so the
    # cross-lane reduction stays off the VPU/XLU and data never leaves the
    # packed layout.
    avg = avg_ref[...]
    mu = jnp.dot(x.astype(jnp.bfloat16), avg, preferred_element_type=jnp.float32)
    xc = x - mu
    var = jnp.dot((xc * xc).astype(jnp.bfloat16), avg,
                  preferred_element_type=jnp.float32)
    xn = xc * jax.lax.rsqrt(var + 1e-5)
    xn = xn * ln_g_ref[...] + ln_b_ref[...]

    # Fused fc1 (C -> 2C per position, packed block-diagonal weight): bf16 MXU,
    # f32 accumulation, then GELU on both gate chunks.  The u/v split lands on
    # the 128-lane (vreg) boundary, so it is free.
    h = jnp.dot(xn.astype(jnp.bfloat16), w1_ref[...],
                preferred_element_type=jnp.float32) + b1_ref[...]
    h = _gelu_tanh(h)
    u = h[:, :L]                 # gate "u" chunk, rows grouped by token t
    v = h[:, L:]                 # gate "v" chunk

    w2 = w2_ref[...]
    b2 = b2_ref[...]
    # LearnedPosMapT mixing along T fused with gating, fc2 and the store:
    #   out[m] = (((sum_n pexp[m,n,:] * u[n]) + tbias[m]) * v[m]) @ w2 + b2
    # The live accumulator is a single (SP, L) tile; stores stream per token.
    for m in range(T):
        pm = pexp_ref[m]                            # (T, L), packed posmap row
        acc = pm[0:1, :] * u[0:SP, :]
        for n in range(1, T):
            acc = acc + pm[n:n + 1, :] * u[n * SP:(n + 1) * SP, :]
        g = (acc + tbias_ref[m]) * v[m * SP:(m + 1) * SP, :]
        out_m = jnp.dot(g.astype(jnp.bfloat16), w2,
                        preferred_element_type=jnp.float32) + b2
        o_ref[0, m] = out_m                         # dropout(p=0) is identity


def _pick_block(n_rows, cap):
    """Largest multiple-of-8 divisor of n_rows that is <= cap (or n_rows)."""
    if n_rows <= cap:
        return n_rows
    for d in range(cap, 7, -1):
        if n_rows % d == 0 and d % 8 == 0:
            return d
    # No 8-aligned divisor <= cap.  Fall back to the full extent (always a
    # legal block shape), accepting one large block.
    # TODO(synk): pad the spatial dim instead so badly-factored hw cannot blow
    # the per-block VMEM budget on v7x (64 MiB VMEM / 32 MiB scoped default).
    return n_rows


def _prepare_packed_params(params, win_size, gamma, C, pack):
    """Pre-tile / block-diagonalize all parameters for the packed-lane layout."""
    f32 = jnp.float32
    T = win_size
    L = pack * C
    eye = jnp.eye(pack, dtype=f32)

    # Channel-expanded relative-position map, tiled across the packed lanes:
    #   rel[m, n] = m - n + (T - 1);  pexp[m, n, c] = table[rel[m, n], c % gamma]
    rel = jnp.arange(T)[:, None] - jnp.arange(T)[None, :] + (T - 1)
    pexp = params["table"].astype(f32)[rel][:, :, jnp.arange(C) % gamma]  # (T,T,C)
    pexp_packed = jnp.tile(pexp, (1, 1, pack))                            # (T,T,L)

    ln_g = jnp.tile(params["ln_g"].reshape(1, C).astype(f32), (1, pack))  # (1,L)
    ln_b = jnp.tile(params["ln_b"].reshape(1, C).astype(f32), (1, pack))  # (1,L)

    w1 = params["w1"].astype(f32)
    w1_packed = jnp.concatenate(
        [jnp.kron(eye, w1[:, :C]), jnp.kron(eye, w1[:, C:])],
        axis=1).astype(jnp.bfloat16)                                      # (L,2L)
    b1 = params["b1"].astype(f32)
    b1_packed = jnp.concatenate(
        [jnp.tile(b1[:C].reshape(1, C), (1, pack)),
         jnp.tile(b1[C:].reshape(1, C), (1, pack))], axis=1)              # (1,2L)

    w2_packed = jnp.kron(eye, params["w2"].astype(f32)).astype(jnp.bfloat16)  # (L,L)
    b2_packed = jnp.tile(params["b2"].reshape(1, C).astype(f32), (1, pack))   # (1,L)

    # Block-diagonal per-C-channel averaging matrix (segment mean on the MXU).
    # 1/C is a power of two for C=32, so the bf16 cast is exact.
    seg_avg = jnp.kron(eye, jnp.full((C, C), 1.0 / C, dtype=f32)).astype(jnp.bfloat16)

    tbias = params["tbias"].astype(f32)                                   # (T,) SMEM
    return (ln_g, ln_b, seg_avg, w1_packed, b1_packed, pexp_packed, tbias,
            w2_packed, b2_packed)


def posmlp_level_pallas(x, params, win_size, gamma, spatial_block=2048):
    B, T, H, W, C = x.shape
    assert T == win_size and C % gamma == 0
    hw = H * W

    # Lane-packing factor: pack spatial positions so the minor dim is 128.
    if C <= 128 and 128 % C == 0 and hw % (128 // C) == 0:
        pack = 128 // C
    else:
        pack = 1        # TODO(synk): pad hw or C for lane-density in this case
    L = pack * C
    n_rows = hw // pack

    # Free, contiguous reshape — no HBM transpose on input or output.
    x_packed = x.reshape(B, T, n_rows, L)

    (ln_g, ln_b, seg_avg, w1_p, b1_p, pexp_p, tbias, w2_p, b2_p) = \
        _prepare_packed_params(params, win_size, gamma, C, pack)

    cap_rows = max(8, spatial_block // pack)
    sp_blk = _pick_block(n_rows, cap_rows)
    grid = (B, n_rows // sp_blk)

    def _rep(shape):
        nd = len(shape)
        return pl.BlockSpec(shape, lambda b, s, _nd=nd: (0,) * _nd)

    out = pl.pallas_call(
        posmlp_kernel,
        out_shape=jax.ShapeDtypeStruct((B, T, n_rows, L), jnp.float32),
        grid=grid,
        in_specs=[
            pl.BlockSpec((1, T, sp_blk, L), lambda b, s: (b, 0, s, 0)),
            _rep((1, L)), _rep((1, L)),                 # LayerNorm gamma/beta (packed)
            _rep((L, L)),                               # segment-averaging matrix (bf16)
            _rep((L, 2 * L)), _rep((1, 2 * L)),         # packed fc1 weight/bias
            _rep((T, T, L)),                            # packed channel-expanded posmap
            pl.BlockSpec(memory_space=pltpu.MemorySpace.SMEM),   # token bias (T,)
            _rep((L, L)), _rep((1, L)),                 # packed fc2 weight/bias
        ],
        out_specs=pl.BlockSpec((1, T, sp_blk, L), lambda b, s: (b, 0, s, 0)),
        compiler_params=pltpu.CompilerParams(
            dimension_semantics=("parallel", "parallel"),
            vmem_limit_bytes=40 * 1024 * 1024),
    )(x_packed, ln_g, ln_b, seg_avg, w1_p, b1_p, pexp_p, tbias, w2_p, b2_p)

    return out.reshape(B, T, H, W, C)


def reference_forward(x, params, win_size, gamma):
    """Pure-JAX reference replicating the PyTorch module semantics (f32, exact GELU)."""
    B, T, H, W, C = x.shape
    hw = H * W
    xw = x.reshape(B, T, hw, C).transpose(0, 2, 1, 3)                # (B, hw, T, C)
    mu = xw.mean(-1, keepdims=True)
    var = ((xw - mu) ** 2).mean(-1, keepdims=True)
    xn = (xw - mu) / jnp.sqrt(var + 1e-5) * params["ln_g"] + params["ln_b"]
    h = jnp.dot(xn, params["w1"], precision=jax.lax.Precision.HIGHEST) + params["b1"]
    h = 0.5 * h * (1.0 + jax.scipy.special.erf(h / jnp.sqrt(2.0)))   # exact GELU
    u, v = h[..., :C], h[..., C:]
    rel = jnp.arange(T)[:, None] - jnp.arange(T)[None, :] + (T - 1)
    posmap = params["table"][rel]                                    # (T, T, gamma)
    u5 = u.reshape(B, hw, T, C // gamma, gamma)
    mixed = jnp.einsum("mns,bwnvs->bwmvs", posmap, u5,
                       precision=jax.lax.Precision.HIGHEST)
    mixed = mixed + params["tbias"][None, None, :, None, None]
    mixed = mixed.reshape(B, hw, T, C)
    g = mixed * v
    out = jnp.dot(g, params["w2"], precision=jax.lax.Precision.HIGHEST) + params["b2"]
    return out.transpose(0, 2, 1, 3).reshape(B, T, H, W, C)


if __name__ == "__main__":
    B, T, H, W, C = 2, 8, 16, 16, 32      # win_size_t = T = 8, embed_dim = 32
    gamma = 8
    key = jax.random.PRNGKey(0)
    ks = jax.random.split(key, 9)
    params = {
        "ln_g": 1.0 + 0.02 * jax.random.normal(ks[0], (C,), jnp.float32),
        "ln_b": 0.02 * jax.random.normal(ks[1], (C,), jnp.float32),
        "w1": jax.random.normal(ks[2], (C, 2 * C), jnp.float32) / math.sqrt(C),
        "b1": 0.02 * jax.random.normal(ks[3], (2 * C,), jnp.float32),
        "w2": jax.random.normal(ks[4], (C, C), jnp.float32) / math.sqrt(C),
        "b2": 0.02 * jax.random.normal(ks[5], (C,), jnp.float32),
        # window_relative_position_bias_table: (2*win_size-1, gamma), std=0.02
        "table": 0.02 * jax.random.normal(ks[6], (2 * T - 1, gamma), jnp.float32),
        # token_proj_n_bias is zeros in __init__; randomized here to exercise the path
        "tbias": 0.02 * jax.random.normal(ks[7], (T,), jnp.float32),
    }
    x = jax.random.normal(ks[8], (B, T, H, W, C), jnp.float32)

    # spatial_block=128 -> 32 packed rows per block -> grid=(B, 2): exercises
    # both grid axes on this small case.
    out = jax.block_until_ready(
        posmlp_level_pallas(x, params, win_size=T, gamma=gamma, spatial_block=128))
    ref = jax.block_until_ready(reference_forward(x, params, win_size=T, gamma=gamma))
    # Tolerance relaxed vs the pure-f32 version: bf16 MXU operands (f32 accum)
    # and tanh-approx GELU contribute ~1e-3 worst-case absolute deviation.
    np.testing.assert_allclose(np.asarray(out), np.asarray(ref), rtol=5e-3, atol=5e-3)
    print("KERNEL_OK")
</pallas_src>

<mosaic_0001>
module attributes {stable_mosaic.version = 11 : i64} {
  func.func @posmlp_kernel(%arg0: i32, %arg1: i32, %arg2: memref<1x8x32x128xf32, #tpu.memory_space<vmem>>, %arg3: memref<1x128xf32, #tpu.memory_space<vmem>>, %arg4: memref<1x128xf32, #tpu.memory_space<vmem>>, %arg5: memref<128x128xbf16, #tpu.memory_space<vmem>>, %arg6: memref<128x256xbf16, #tpu.memory_space<vmem>>, %arg7: memref<1x256xf32, #tpu.memory_space<vmem>>, %arg8: memref<8x8x128xf32, #tpu.memory_space<vmem>>, %arg9: memref<8xf32, #tpu.memory_space<smem>>, %arg10: memref<128x128xbf16, #tpu.memory_space<vmem>>, %arg11: memref<1x128xf32, #tpu.memory_space<vmem>>, %arg12: memref<1x8x32x128xf32, #tpu.memory_space<vmem>>) attributes {dimension_semantics = [#tpu.dimension_semantics<parallel>, #tpu.dimension_semantics<parallel>], iteration_bounds = array<i64: 2, 2>, scalar_prefetch = 0 : i64, scratch_operands = 0 : i64, tpu.core_type = #tpu.core_type<tc>, window_params = [{transform_indices = @transform_0, window_bounds = array<i64: 1, 8, 32, 128>}, {pipeline_mode = #tpu.pipeline_mode<synchronous>, transform_indices = @transform_1, window_bounds = array<i64: 1, 128>}, {pipeline_mode = #tpu.pipeline_mode<synchronous>, transform_indices = @transform_2, window_bounds = array<i64: 1, 128>}, {pipeline_mode = #tpu.pipeline_mode<synchronous>, transform_indices = @transform_3, window_bounds = array<i64: 128, 128>}, {pipeline_mode = #tpu.pipeline_mode<synchronous>, transform_indices = @transform_4, window_bounds = array<i64: 128, 256>}, {pipeline_mode = #tpu.pipeline_mode<synchronous>, transform_indices = @transform_5, window_bounds = array<i64: 1, 256>}, {pipeline_mode = #tpu.pipeline_mode<synchronous>, transform_indices = @transform_6, window_bounds = array<i64: 8, 8, 128>}, {transform_indices = @transform_7, window_bounds = array<i64: 8>}, {pipeline_mode = #tpu.pipeline_mode<synchronous>, transform_indices = @transform_8, window_bounds = array<i64: 128, 128>}, {pipeline_mode = #tpu.pipeline_mode<synchronous>, transform_indices = @transform_9, window_bounds = array<i64: 1, 128>}, {transform_indices = @transform_10, window_bounds = array<i64: 1, 8, 32, 128>}]} {
    %c0 = arith.constant 0 : index
    %c0_0 = arith.constant 0 : index
    %c0_1 = arith.constant 0 : index
    %c0_2 = arith.constant 0 : index
    %0 = vector.load %arg2[%c0, %c0_0, %c0_1, %c0_2] : memref<1x8x32x128xf32, #tpu.memory_space<vmem>>, vector<1x8x32x128xf32>
    %1 = vector.shape_cast %0 : vector<1x8x32x128xf32> to vector<8x32x128xf32>
    %2 = vector.shape_cast %1 : vector<8x32x128xf32> to vector<256x128xf32>
    %c0_3 = arith.constant 0 : index
    %c0_4 = arith.constant 0 : index
    %3 = vector.load %arg5[%c0_3, %c0_4] : memref<128x128xbf16, #tpu.memory_space<vmem>>, vector<128x128xbf16>
    %4 = arith.truncf %2 : vector<256x128xf32> to vector<256x128xbf16>
    %cst = arith.constant dense<0.000000e+00> : vector<256x128xf32>
    %5 = tpu.matmul %4, %3, %cst {dimension_numbers = #tpu.dot_dimension_numbers<[1], [0], [0], [1], [0, 0, 1, 1], [], []>} : vector<256x128xbf16>, vector<128x128xbf16>, vector<256x128xf32> -> vector<256x128xf32>
    %6 = arith.subf %2, %5 : vector<256x128xf32>
    %7 = arith.mulf %6, %6 : vector<256x128xf32>
    %8 = arith.truncf %7 : vector<256x128xf32> to vector<256x128xbf16>
    %cst_5 = arith.constant dense<0.000000e+00> : vector<256x128xf32>
    %9 = tpu.matmul %8, %3, %cst_5 {dimension_numbers = #tpu.dot_dimension_numbers<[1], [0], [0], [1], [0, 0, 1, 1], [], []>} : vector<256x128xbf16>, vector<128x128xbf16>, vector<256x128xf32> -> vector<256x128xf32>
    %cst_6 = arith.constant 9.99999974E-6 : f32
    %10 = vector.broadcast %cst_6 : f32 to vector<256x128xf32>
    %11 = arith.addf %9, %10 : vector<256x128xf32>
    %12 = math.rsqrt %11 : vector<256x128xf32>
    %13 = arith.mulf %6, %12 : vector<256x128xf32>
    %c0_7 = arith.constant 0 : index
    %c0_8 = arith.constant 0 : index
    %14 = vector.load %arg3[%c0_7, %c0_8] : memref<1x128xf32, #tpu.memory_space<vmem>>, vector<1x128xf32>
    %15 = vector.broadcast %14 : vector<1x128xf32> to vector<256x128xf32>
    %16 = arith.mulf %13, %15 : vector<256x128xf32>
    %c0_9 = arith.constant 0 : index
    %c0_10 = arith.constant 0 : index
    %17 = vector.load %arg4[%c0_9, %c0_10] : memref<1x128xf32, #tpu.memory_space<vmem>>, vector<1x128xf32>
    %18 = vector.broadcast %17 : vector<1x128xf32> to vector<256x128xf32>
    %19 = arith.addf %16, %18 : vector<256x128xf32>
    %20 = arith.truncf %19 : vector<256x128xf32> to vector<256x128xbf16>
    %c0_11 = arith.constant 0 : index
    %c0_12 = arith.constant 0 : index
    %21 = vector.load %arg6[%c0_11, %c0_12] : memref<128x256xbf16, #tpu.memory_space<vmem>>, vector<128x256xbf16>
    %cst_13 = arith.constant dense<0.000000e+00> : vector<256x256xf32>
    %22 = tpu.matmul %20, %21, %cst_13 {dimension_numbers = #tpu.dot_dimension_numbers<[1], [0], [0], [1], [0, 0, 1, 1], [], []>} : vector<256x128xbf16>, vector<128x256xbf16>, vector<256x256xf32> -> vector<256x256xf32>
    %c0_14 = arith.constant 0 : index
    %c0_15 = arith.constant 0 : index
    %23 = vector.load %arg7[%c0_14, %c0_15] : memref<1x256xf32, #tpu.memory_space<vmem>>, vector<1x256xf32>
    %24 = vector.broadcast %23 : vector<1x256xf32> to vector<256x256xf32>
    %25 = arith.addf %22, %24 : vector<256x256xf32>
    %26 = arith.mulf %25, %25 : vector<256x256xf32>
    %27 = arith.mulf %26, %25 : vector<256x256xf32>
    %cst_16 = arith.constant 4.471500e-02 : f32
    %28 = vector.broadcast %cst_16 : f32 to vector<256x256xf32>
    %29 = arith.mulf %28, %27 : vector<256x256xf32>
    %30 = arith.addf %25, %29 : vector<256x256xf32>
    %cst_17 = arith.constant 0.797884583 : f32
    %31 = vector.broadcast %cst_17 : f32 to vector<256x256xf32>
    %32 = arith.mulf %31, %30 : vector<256x256xf32>
    %cst_18 = arith.constant 5.000000e-01 : f32
    %33 = vector.broadcast %cst_18 : f32 to vector<256x256xf32>
    %34 = arith.mulf %33, %25 : vector<256x256xf32>
    %35 = math.tanh %32 : vector<256x256xf32>
    %cst_19 = arith.constant 1.000000e+00 : f32
    %36 = vector.broadcast %cst_19 : f32 to vector<256x256xf32>
    %37 = arith.addf %36, %35 : vector<256x256xf32>
    %38 = arith.mulf %34, %37 : vector<256x256xf32>
    %39 = vector.extract_strided_slice %38 {offsets = [0, 0], sizes = [256, 128], strides = [1, 1]} : vector<256x256xf32> to vector<256x128xf32>
    %40 = vector.extract_strided_slice %38 {offsets = [0, 128], sizes = [256, 128], strides = [1, 1]} : vector<256x256xf32> to vector<256x128xf32>
    %c0_20 = arith.constant 0 : index
    %c0_21 = arith.constant 0 : index
    %41 = vector.load %arg10[%c0_20, %c0_21] : memref<128x128xbf16, #tpu.memory_space<vmem>>, vector<128x128xbf16>
    %c0_22 = arith.constant 0 : index
    %c0_23 = arith.constant 0 : index
    %42 = vector.load %arg11[%c0_22, %c0_23] : memref<1x128xf32, #tpu.memory_space<vmem>>, vector<1x128xf32>
    %c0_24 = arith.constant 0 : index
    %c0_25 = arith.constant 0 : index
    %c0_26 = arith.constant 0 : index
    %43 = vector.load %arg8[%c0_24, %c0_25, %c0_26] : memref<8x8x128xf32, #tpu.memory_space<vmem>>, vector<1x8x128xf32>
    %44 = vector.shape_cast %43 : vector<1x8x128xf32> to vector<8x128xf32>
    %45 = vector.extract_strided_slice %44 {offsets = [0, 0], sizes = [1, 128], strides = [1, 1]} : vector<8x128xf32> to vector<1x128xf32>
    %46 = vector.extract_strided_slice %39 {offsets = [0, 0], sizes = [32, 128], strides = [1, 1]} : vector<256x128xf32> to vector<32x128xf32>
    %47 = vector.broadcast %45 : vector<1x128xf32> to vector<32x128xf32>
    %48 = arith.mulf %47, %46 : vector<32x128xf32>
    %49 = vector.extract_strided_slice %44 {offsets = [1, 0], sizes = [1, 128], strides = [1, 1]} : vector<8x128xf32> to vector<1x128xf32>
    %50 = vector.extract_strided_slice %39 {offsets = [32, 0], sizes = [32, 128], strides = [1, 1]} : vector<256x128xf32> to vector<32x128xf32>
    %51 = vector.broadcast %49 : vector<1x128xf32> to vector<32x128xf32>
    %52 = arith.mulf %51, %50 : vector<32x128xf32>
    %53 = arith.addf %48, %52 : vector<32x128xf32>
    %54 = vector.extract_strided_slice %44 {offsets = [2, 0], sizes = [1, 128], strides = [1, 1]} : vector<8x128xf32> to vector<1x128xf32>
    %55 = vector.extract_strided_slice %39 {offsets = [64, 0], sizes = [32, 128], strides = [1, 1]} : vector<256x128xf32> to vector<32x128xf32>
    %56 = vector.broadcast %54 : vector<1x128xf32> to vector<32x128xf32>
    %57 = arith.mulf %56, %55 : vector<32x128xf32>
    %58 = arith.addf %53, %57 : vector<32x128xf32>
    %59 = vector.extract_strided_slice %44 {offsets = [3, 0], sizes = [1, 128], strides = [1, 1]} : vector<8x128xf32> to vector<1x128xf32>
    %60 = vector.extract_strided_slice %39 {offsets = [96, 0], sizes = [32, 128], strides = [1, 1]} : vector<256x128xf32> to vector<32x128xf32>
    %61 = vector.broadcast %59 : vector<1x128xf32> to vector<32x128xf32>
    %62 = arith.mulf %61, %60 : vector<32x128xf32>
    %63 = arith.addf %58, %62 : vector<32x128xf32>
    %64 = vector.extract_strided_slice %44 {offsets = [4, 0], sizes = [1, 128], strides = [1, 1]} : vector<8x128xf32> to vector<1x128xf32>
    %65 = vector.extract_strided_slice %39 {offsets = [128, 0], sizes = [32, 128], strides = [1, 1]} : vector<256x128xf32> to vector<32x128xf32>
    %66 = vector.broadcast %64 : vector<1x128xf32> to vector<32x128xf32>
    %67 = arith.mulf %66, %65 : vector<32x128xf32>
    %68 = arith.addf %63, %67 : vector<32x128xf32>
    %69 = vector.extract_strided_slice %44 {offsets = [5, 0], sizes = [1, 128], strides = [1, 1]} : vector<8x128xf32> to vector<1x128xf32>
    %70 = vector.extract_strided_slice %39 {offsets = [160, 0], sizes = [32, 128], strides = [1, 1]} : vector<256x128xf32> to vector<32x128xf32>
    %71 = vector.broadcast %69 : vector<1x128xf32> to vector<32x128xf32>
    %72 = arith.mulf %71, %70 : vector<32x128xf32>
    %73 = arith.addf %68, %72 : vector<32x128xf32>
    %74 = vector.extract_strided_slice %44 {offsets = [6, 0], sizes = [1, 128], strides = [1, 1]} : vector<8x128xf32> to vector<1x128xf32>
    %75 = vector.extract_strided_slice %39 {offsets = [192, 0], sizes = [32, 128], strides = [1, 1]} : vector<256x128xf32> to vector<32x128xf32>
    %76 = vector.broadcast %74 : vector<1x128xf32> to vector<32x128xf32>
    %77 = arith.mulf %76, %75 : vector<32x128xf32>
    %78 = arith.addf %73, %77 : vector<32x128xf32>
    %79 = vector.extract_strided_slice %44 {offsets = [7, 0], sizes = [1, 128], strides = [1, 1]} : vector<8x128xf32> to vector<1x128xf32>
    %80 = vector.extract_strided_slice %39 {offsets = [224, 0], sizes = [32, 128], strides = [1, 1]} : vector<256x128xf32> to vector<32x128xf32>
    %81 = vector.broadcast %79 : vector<1x128xf32> to vector<32x128xf32>
    %82 = arith.mulf %81, %80 : vector<32x128xf32>
    %83 = arith.addf %78, %82 : vector<32x128xf32>
    %c0_27 = arith.constant 0 : index
    %84 = memref.load %arg9[%c0_27] : memref<8xf32, #tpu.memory_space<smem>>
    %85 = vector.broadcast %84 : f32 to vector<32x128xf32>
    %86 = arith.addf %83, %85 : vector<32x128xf32>
    %87 = vector.extract_strided_slice %40 {offsets = [0, 0], sizes = [32, 128], strides = [1, 1]} : vector<256x128xf32> to vector<32x128xf32>
    %88 = arith.mulf %86, %87 : vector<32x128xf32>
    %89 = arith.truncf %88 : vector<32x128xf32> to vector<32x128xbf16>
    %cst_28 = arith.constant dense<0.000000e+00> : vector<32x128xf32>
    %90 = tpu.matmul %89, %41, %cst_28 {dimension_numbers = #tpu.dot_dimension_numbers<[1], [0], [0], [1], [0, 0, 1, 1], [], []>} : vector<32x128xbf16>, vector<128x128xbf16>, vector<32x128xf32> -> vector<32x128xf32>
    %91 = vector.broadcast %42 : vector<1x128xf32> to vector<32x128xf32>
    %92 = arith.addf %90, %91 : vector<32x128xf32>
    %c0_29 = arith.constant 0 : index
    %c0_30 = arith.constant 0 : index
    %c0_31 = arith.constant 0 : index
    %c0_32 = arith.constant 0 : index
    %93 = vector.load %arg12[%c0_29, %c0_30, %c0_31, %c0_32] : memref<1x8x32x128xf32, #tpu.memory_space<vmem>>, vector<1x1x32x128xf32>
    %94 = vector.shape_cast %93 : vector<1x1x32x128xf32> to vector<32x128xf32>
    %95 = vector.shape_cast %92 : vector<32x128xf32> to vector<1x1x32x128xf32>
    tpu.vector_store %arg12[%c0_29, %c0_30, %c0_31, %c0_32], %95 {strides = array<i32>} : memref<1x8x32x128xf32, #tpu.memory_space<vmem>>, vector<1x1x32x128xf32>,
    %c1 = arith.constant 1 : index
    %c0_33 = arith.constant 0 : index
    %c0_34 = arith.constant 0 : index
    %96 = vector.load %arg8[%c1, %c0_33, %c0_34] : memref<8x8x128xf32, #tpu.memory_space<vmem>>, vector<1x8x128xf32>
    %97 = vector.shape_cast %96 : vector<1x8x128xf32> to vector<8x128xf32>
    %98 = vector.extract_strided_slice %97 {offsets = [0, 0], sizes = [1, 128], strides = [1, 1]} : vector<8x128xf32> to vector<1x128xf32>
    %99 = vector.extract_strided_slice %39 {offsets = [0, 0], sizes = [32, 128], strides = [1, 1]} : vector<256x128xf32> to vector<32x128xf32>
    %100 = vector.broadcast %98 : vector<1x128xf32> to vector<32x128xf32>
    %101 = arith.mulf %100, %99 : vector<32x128xf32>
    %102 = vector.extract_strided_slice %97 {offsets = [1, 0], sizes = [1, 128], strides = [1, 1]} : vector<8x128xf32> to vector<1x128xf32>
    %103 = vector.extract_strided_slice %39 {offsets = [32, 0], sizes = [32, 128], strides = [1, 1]} : vector<256x128xf32> to vector<32x128xf32>
    %104 = vector.broadcast %102 : vector<1x128xf32> to vector<32x128xf32>
    %105 = arith.mulf %104, %103 : vector<32x128xf32>
    %106 = arith.addf %101, %105 : vector<32x128xf32>
    %107 = vector.extract_strided_slice %97 {offsets = [2, 0], sizes = [1, 128], strides = [1, 1]} : vector<8x128xf32> to vector<1x128xf32>
    %108 = vector.extract_strided_slice %39 {offsets = [64, 0], sizes = [32, 128], strides = [1, 1]} : vector<256x128xf32> to vector<32x128xf32>
    %109 = vector.broadcast %107 : vector<1x128xf32> to vector<32x128xf32>
    %110 = arith.mulf %109, %108 : vector<32x128xf32>
    %111 = arith.addf %106, %110 : vector<32x128xf32>
    %112 = vector.extract_strided_slice %97 {offsets = [3, 0], sizes = [1, 128], strides = [1, 1]} : vector<8x128xf32> to vector<1x128xf32>
    %113 = vector.extract_strided_slice %39 {offsets = [96, 0], sizes = [32, 128], strides = [1, 1]} : vector<256x128xf32> to vector<32x128xf32>
    %114 = vector.broadcast %112 : vector<1x128xf32> to vector<32x128xf32>
    %115 = arith.mulf %114, %113 : vector<32x128xf32>
    %116 = arith.addf %111, %115 : vector<32x128xf32>
    %117 = vector.extract_strided_slice %97 {offsets = [4, 0], sizes = [1, 128], strides = [1, 1]} : vector<8x128xf32> to vector<1x128xf32>
    %118 = vector.extract_strided_slice %39 {offsets = [128, 0], sizes = [32, 128], strides = [1, 1]} : vector<256x128xf32> to vector<32x128xf32>
    %119 = vector.broadcast %117 : vector<1x128xf32> to vector<32x128xf32>
    %120 = arith.mulf %119, %118 : vector<32x128xf32>
    %121 = arith.addf %116, %120 : vector<32x128xf32>
    %122 = vector.extract_strided_slice %97 {offsets = [5, 0], sizes = [1, 128], strides = [1, 1]} : vector<8x128xf32> to vector<1x128xf32>
    %123 = vector.extract_strided_slice %39 {offsets = [160, 0], sizes = [32, 128], strides = [1, 1]} : vector<256x128xf32> to vector<32x128xf32>
    %124 = vector.broadcast %122 : vector<1x128xf32> to vector<32x128xf32>
    %125 = arith.mulf %124, %123 : vector<32x128xf32>
    %126 = arith.addf %121, %125 : vector<32x128xf32>
    %127 = vector.extract_strided_slice %97 {offsets = [6, 0], sizes = [1, 128], strides = [1, 1]} : vector<8x128xf32> to vector<1x128xf32>
    %128 = vector.extract_strided_slice %39 {offsets = [192, 0], sizes = [32, 128], strides = [1, 1]} : vector<256x128xf32> to vector<32x128xf32>
    %129 = vector.broadcast %127 : vector<1x128xf32> to vector<32x128xf32>
    %130 = arith.mulf %129, %128 : vector<32x128xf32>
    %131 = arith.addf %126, %130 : vector<32x128xf32>
    %132 = vector.extract_strided_slice %97 {offsets = [7, 0], sizes = [1, 128], strides = [1, 1]} : vector<8x128xf32> to vector<1x128xf32>
    %133 = vector.extract_strided_slice %39 {offsets = [224, 0], sizes = [32, 128], strides = [1, 1]} : vector<256x128xf32> to vector<32x128xf32>
    %134 = vector.broadcast %132 : vector<1x128xf32> to vector<32x128xf32>
    %135 = arith.mulf %134, %133 : vector<32x128xf32>
    %136 = arith.addf %131, %135 : vector<32x128xf32>
    %c1_35 = arith.constant 1 : index
    %137 = memref.load %arg9[%c1_35] : memref<8xf32, #tpu.memory_space<smem>>
    %138 = vector.broadcast %137 : f32 to vector<32x128xf32>
    %139 = arith.addf %136, %138 : vector<32x128xf32>
    %140 = vector.extract_strided_slice %40 {offsets = [32, 0], sizes = [32, 128], strides = [1, 1]} : vector<256x128xf32> to vector<32x128xf32>
    %141 = arith.mulf %139, %140 : vector<32x128xf32>
    %142 = arith.truncf %141 : vector<32x128xf32> to vector<32x128xbf16>
    %cst_36 = arith.constant dense<0.000000e+00> : vector<32x128xf32>
    %143 = tpu.matmul %142, %41, %cst_36 {dimension_numbers = #tpu.dot_dimension_numbers<[1], [0], [0], [1], [0, 0, 1, 1], [], []>} : vector<32x128xbf16>, vector<128x128xbf16>, vector<32x128xf32> -> vector<32x128xf32>
    %144 = vector.broadcast %42 : vector<1x128xf32> to vector<32x128xf32>
    %145 = arith.addf %143, %144 : vector<32x128xf32>
    %c0_37 = arith.constant 0 : index
    %c1_38 = arith.constant 1 : index
    %c0_39 = arith.constant 0 : index
    %c0_40 = arith.constant 0 : index
    %146 = vector.load %arg12[%c0_37, %c1_38, %c0_39, %c0_40] : memref<1x8x32x128xf32, #tpu.memory_space<vmem>>, vector<1x1x32x128xf32>
    %147 = vector.shape_cast %146 : vector<1x1x32x128xf32> to vector<32x128xf32>
    %148 = vector.shape_cast %145 : vector<32x128xf32> to vector<1x1x32x128xf32>
    tpu.vector_store %arg12[%c0_37, %c1_38, %c0_39, %c0_40], %148 {strides = array<i32>} : memref<1x8x32x128xf32, #tpu.memory_space<vmem>>, vector<1x1x32x128xf32>,
    %c2 = arith.constant 2 : index
    %c0_41 = arith.constant 0 : index
    %c0_42 = arith.constant 0 : index
    %149 = vector.load %arg8[%c2, %c0_41, %c0_42] : memref<8x8x128xf32, #tpu.memory_space<vmem>>, vector<1x8x128xf32>
    %150 = vector.shape_cast %149 : vector<1x8x128xf32> to vector<8x128xf32>
    %151 = vector.extract_strided_slice %150 {offsets = [0, 0], sizes = [1, 128], strides = [1, 1]} : vector<8x128xf32> to vector<1x128xf32>
    %152 = vector.extract_strided_slice %39 {offsets = [0, 0], sizes = [32, 128], strides = [1, 1]} : vector<256x128xf32> to vector<32x128xf32>
    %153 = vector.broadcast %151 : vector<1x128xf32> to vector<32x128xf32>
    %154 = arith.mulf %153, %152 : vector<32x128xf32>
    %155 = vector.extract_strided_slice %150 {offsets = [1, 0], sizes = [1, 128], strides = [1, 1]} : vector<8x128xf32> to vector<1x128xf32>
    %156 = vector.extract_strided_slice %39 {offsets = [32, 0], sizes = [32, 128], strides = [1, 1]} : vector<256x128xf32> to vector<32x128xf32>
    %157 = vector.broadcast %155 : vector<1x128xf32> to vector<32x128xf32>
    %158 = arith.mulf %157, %156 : vector<32x128xf32>
    %159 = arith.addf %154, %158 : vector<32x128xf32>
    %160 = vector.extract_strided_slice %150 {offsets = [2, 0], sizes = [1, 128], strides = [1, 1]} : vector<8x128xf32> to vector<1x128xf32>
    %161 = vector.extract_strided_slice %39 {offsets = [64, 0], sizes = [32, 128], strides = [1, 1]} : vector<256x128xf32> to vector<32x128xf32>
    %162 = vector.broadcast %160 : vector<1x128xf32> to vector<32x128xf32>
    %163 = arith.mulf %162, %161 : vector<32x128xf32>
    %164 = arith.addf %159, %163 : vector<32x128xf32>
    %165 = vector.extract_strided_slice %150 {offsets = [3, 0], sizes = [1, 128], strides = [1, 1]} : vector<8x128xf32> to vector<1x128xf32>
    %166 = vector.extract_strided_slice %39 {offsets = [96, 0], sizes = [32, 128], strides = [1, 1]} : vector<256x128xf32> to vector<32x128xf32>
    %167 = vector.broadcast %165 : vector<1x128xf32> to vector<32x128xf32>
    %168 = arith.mulf %167, %166 : vector<32x128xf32>
    %169 = arith.addf %164, %168 : vector<32x128xf32>
    %170 = vector.extract_strided_slice %150 {offsets = [4, 0], sizes = [1, 128], strides = [1, 1]} : vector<8x128xf32> to vector<1x128xf32>
    %171 = vector.extract_strided_slice %39 {offsets = [128, 0], sizes = [32, 128], strides = [1, 1]} : vector<256x128xf32> to vector<32x128xf32>
    %172 = vector.broadcast %170 : vector<1x128xf32> to vector<32x128xf32>
    %173 = arith.mulf %172, %171 : vector<32x128xf32>
    %174 = arith.addf %169, %173 : vector<32x128xf32>
    %175 = vector.extract_strided_slice %150 {offsets = [5, 0], sizes = [1, 128], strides = [1, 1]} : vector<8x128xf32> to vector<1x128xf32>
    %176 = vector.extract_strided_slice %39 {offsets = [160, 0], sizes = [32, 128], strides = [1, 1]} : vector<256x128xf32> to vector<32x128xf32>
    %177 = vector.broadcast %175 : vector<1x128xf32> to vector<32x128xf32>
    %178 = arith.mulf %177, %176 : vector<32x128xf32>
    %179 = arith.addf %174, %178 : vector<32x128xf32>
    %180 = vector.extract_strided_slice %150 {offsets = [6, 0], sizes = [1, 128], strides = [1, 1]} : vector<8x128xf32> to vector<1x128xf32>
    %181 = vector.extract_strided_slice %39 {offsets = [192, 0], sizes = [32, 128], strides = [1, 1]} : vector<256x128xf32> to vector<32x128xf32>
    %182 = vector.broadcast %180 : vector<1x128xf32> to vector<32x128xf32>
    %183 = arith.mulf %182, %181 : vector<32x128xf32>
    %184 = arith.addf %179, %183 : vector<32x128xf32>
    %185 = vector.extract_strided_slice %150 {offsets = [7, 0], sizes = [1, 128], strides = [1, 1]} : vector<8x128xf32> to vector<1x128xf32>
    %186 = vector.extract_strided_slice %39 {offsets = [224, 0], sizes = [32, 128], strides = [1, 1]} : vector<256x128xf32> to vector<32x128xf32>
    %187 = vector.broadcast %185 : vector<1x128xf32> to vector<32x128xf32>
    %188 = arith.mulf %187, %186 : vector<32x128xf32>
    %189 = arith.addf %184, %188 : vector<32x128xf32>
    %c2_43 = arith.constant 2 : index
    %190 = memref.load %arg9[%c2_43] : memref<8xf32, #tpu.memory_space<smem>>
    %191 = vector.broadcast %190 : f32 to vector<32x128xf32>
    %192 = arith.addf %189, %191 : vector<32x128xf32>
    %193 = vector.extract_strided_slice %40 {offsets = [64, 0], sizes = [32, 128], strides = [1, 1]} : vector<256x128xf32> to vector<32x128xf32>
    %194 = arith.mulf %192, %193 : vector<32x128xf32>
    %195 = arith.truncf %194 : vector<32x128xf32> to vector<32x128xbf16>
    %cst_44 = arith.constant dense<0.000000e+00> : vector<32x128xf32>
    %196 = tpu.matmul %195, %41, %cst_44 {dimension_numbers = #tpu.dot_dimension_numbers<[1], [0], [0], [1], [0, 0, 1, 1], [], []>} : vector<32x128xbf16>, vector<128x128xbf16>, vector<32x128xf32> -> vector<32x128xf32>
    %197 = vector.broadcast %42 : vector<1x128xf32> to vector<32x128xf32>
    %198 = arith.addf %196, %197 : vector<32x128xf32>
    %c0_45 = arith.constant 0 : index
    %c2_46 = arith.constant 2 : index
    %c0_47 = arith.constant 0 : index
    %c0_48 = arith.constant 0 : index
    %199 = vector.load %arg12[%c0_45, %c2_46, %c0_47, %c0_48] : memref<1x8x32x128xf32, #tpu.memory_space<vmem>>, vector<1x1x32x128xf32>
    %200 = vector.shape_cast %199 : vector<1x1x32x128xf32> to vector<32x128xf32>
    %201 = vector.shape_cast %198 : vector<32x128xf32> to vector<1x1x32x128xf32>
    tpu.vector_store %arg12[%c0_45, %c2_46, %c0_47, %c0_48], %201 {strides = array<i32>} : memref<1x8x32x128xf32, #tpu.memory_space<vmem>>, vector<1x1x32x128xf32>,
    %c3 = arith.constant 3 : index
    %c0_49 = arith.constant 0 : index
    %c0_50 = arith.constant 0 : index
    %202 = vector.load %arg8[%c3, %c0_49, %c0_50] : memref<8x8x128xf32, #tpu.memory_space<vmem>>, vector<1x8x128xf32>
    %203 = vector.shape_cast %202 : vector<1x8x128xf32> to vector<8x128xf32>
    %204 = vector.extract_strided_slice %203 {offsets = [0, 0], sizes = [1, 128], strides = [1, 1]} : vector<8x128xf32> to vector<1x128xf32>
    %205 = vector.extract_strided_slice %39 {offsets = [0, 0], sizes = [32, 128], strides = [1, 1]} : vector<256x128xf32> to vector<32x128xf32>
    %206 = vector.broadcast %204 : vector<1x128xf32> to vector<32x128xf32>
    %207 = arith.mulf %206, %205 : vector<32x128xf32>
    %208 = vector.extract_strided_slice %203 {offsets = [1, 0], sizes = [1, 128], strides = [1, 1]} : vector<8x128xf32> to vector<1x128xf32>
    %209 = vector.extract_strided_slice %39 {offsets = [32, 0], sizes = [32, 128], strides = [1, 1]} : vector<256x128xf32> to vector<32x128xf32>
    %210 = vector.broadcast %208 : vector<1x128xf32> to vector<32x128xf32>
    %211 = arith.mulf %210, %209 : vector<32x128xf32>
    %212 = arith.addf %207, %211 : vector<32x128xf32>
    %213 = vector.extract_strided_slice %203 {offsets = [2, 0], sizes = [1, 128], strides = [1, 1]} : vector<8x128xf32> to vector<1x128xf32>
    %214 = vector.extract_strided_slice %39 {offsets = [64, 0], sizes = [32, 128], strides = [1, 1]} : vector<256x128xf32> to vector<32x128xf32>
    %215 = vector.broadcast %213 : vector<1x128xf32> to vector<32x128xf32>
    %216 = arith.mulf %215, %214 : vector<32x128xf32>
    %217 = arith.addf %212, %216 : vector<32x128xf32>
    %218 = vector.extract_strided_slice %203 {offsets = [3, 0], sizes = [1, 128], strides = [1, 1]} : vector<8x128xf32> to vector<1x128xf32>
    %219 = vector.extract_strided_slice %39 {offsets = [96, 0], sizes = [32, 128], strides = [1, 1]} : vector<256x128xf32> to vector<32x128xf32>
    %220 = vector.broadcast %218 : vector<1x128xf32> to vector<32x128xf32>
    %221 = arith.mulf %220, %219 : vector<32x128xf32>
    %222 = arith.addf %217, %221 : vector<32x128xf32>
    %223 = vector.extract_strided_slice %203 {offsets = [4, 0], sizes = [1, 128], strides = [1, 1]} : vector<8x128xf32> to vector<1x128xf32>
    %224 = vector.extract_strided_slice %39 {offsets = [128, 0], sizes = [32, 128], strides = [1, 1]} : vector<256x128xf32> to vector<32x128xf32>
    %225 = vector.broadcast %223 : vector<1x128xf32> to vector<32x128xf32>
    %226 = arith.mulf %225, %224 : vector<32x128xf32>
    %227 = arith.addf %222, %226 : vector<32x128xf32>
    %228 = vector.extract_strided_slice %203 {offsets = [5, 0], sizes = [1, 128], strides = [1, 1]} : vector<8x128xf32> to vector<1x128xf32>
    %229 = vector.extract_strided_slice %39 {offsets = [160, 0], sizes = [32, 128], strides = [1, 1]} : vector<256x128xf32> to vector<32x128xf32>
    %230 = vector.broadcast %228 : vector<1x128xf32> to vector<32x128xf32>
    %231 = arith.mulf %230, %229 : vector<32x128xf32>
    %232 = arith.addf %227, %231 : vector<32x128xf32>
    %233 = vector.extract_strided_slice %203 {offsets = [6, 0], sizes = [1, 128], strides = [1, 1]} : vector<8x128xf32> to vector<1x128xf32>
    %234 = vector.extract_strided_slice %39 {offsets = [192, 0], sizes = [32, 128], strides = [1, 1]} : vector<256x128xf32> to vector<32x128xf32>
    %235 = vector.broadcast %233 : vector<1x128xf32> to vector<32x128xf32>
    %236 = arith.mulf %235, %234 : vector<32x128xf32>
    %237 = arith.addf %232, %236 : vector<32x128xf32>
    %238 = vector.extract_strided_slice %203 {offsets = [7, 0], sizes = [1, 128], strides = [1, 1]} : vector<8x128xf32> to vector<1x128xf32>
    %239 = vector.extract_strided_slice %39 {offsets = [224, 0], sizes = [32, 128], strides = [1, 1]} : vector<256x128xf32> to vector<32x128xf32>
    %240 = vector.broadcast %238 : vector<1x128xf32> to vector<32x128xf32>
    %241 = arith.mulf %240, %239 : vector<32x128xf32>
    %242 = arith.addf %237, %241 : vector<32x128xf32>
    %c3_51 = arith.constant 3 : index
    %243 = memref.load %arg9[%c3_51] : memref<8xf32, #tpu.memory_space<smem>>
    %244 = vector.broadcast %243 : f32 to vector<32x128xf32>
    %245 = arith.addf %242, %244 : vector<32x128xf32>
    %246 = vector.extract_strided_slice %40 {offsets = [96, 0], sizes = [32, 128], strides = [1, 1]} : vector<256x128xf32> to vector<32x128xf32>
    %247 = arith.mulf %245, %246 : vector<32x128xf32>
    %248 = arith.truncf %247 : vector<32x128xf32> to vector<32x128xbf16>
    %cst_52 = arith.constant dense<0.000000e+00> : vector<32x128xf32>
    %249 = tpu.matmul %248, %41, %cst_52 {dimension_numbers = #tpu.dot_dimension_numbers<[1], [0], [0], [1], [0, 0, 1, 1], [], []>} : vector<32x128xbf16>, vector<128x128xbf16>, vector<32x128xf32> -> vector<32x128xf32>
    %250 = vector.broadcast %42 : vector<1x128xf32> to vector<32x128xf32>
    %251 = arith.addf %249, %250 : vector<32x128xf32>
    %c0_53 = arith.constant 0 : index
    %c3_54 = arith.constant 3 : index
    %c0_55 = arith.constant 0 : index
    %c0_56 = arith.constant 0 : index
    %252 = vector.load %arg12[%c0_53, %c3_54, %c0_55, %c0_56] : memref<1x8x32x128xf32, #tpu.memory_space<vmem>>, vector<1x1x32x128xf32>
    %253 = vector.shape_cast %252 : vector<1x1x32x128xf32> to vector<32x128xf32>
    %254 = vector.shape_cast %251 : vector<32x128xf32> to vector<1x1x32x128xf32>
    tpu.vector_store %arg12[%c0_53, %c3_54, %c0_55, %c0_56], %254 {strides = array<i32>} : memref<1x8x32x128xf32, #tpu.memory_space<vmem>>, vector<1x1x32x128xf32>,
    %c4 = arith.constant 4 : index
    %c0_57 = arith.constant 0 : index
    %c0_58 = arith.constant 0 : index
    %255 = vector.load %arg8[%c4, %c0_57, %c0_58] : memref<8x8x128xf32, #tpu.memory_space<vmem>>, vector<1x8x128xf32>
    %256 = vector.shape_cast %255 : vector<1x8x128xf32> to vector<8x128xf32>
    %257 = vector.extract_strided_slice %256 {offsets = [0, 0], sizes = [1, 128], strides = [1, 1]} : vector<8x128xf32> to vector<1x128xf32>
    %258 = vector.extract_strided_slice %39 {offsets = [0, 0], sizes = [32, 128], strides = [1, 1]} : vector<256x128xf32> to vector<32x128xf32>
    %259 = vector.broadcast %257 : vector<1x128xf32> to vector<32x128xf32>
    %260 = arith.mulf %259, %258 : vector<32x128xf32>
    %261 = vector.extract_strided_slice %256 {offsets = [1, 0], sizes = [1, 128], strides = [1, 1]} : vector<8x128xf32> to vector<1x128xf32>
    %262 = vector.extract_strided_slice %39 {offsets = [32, 0], sizes = [32, 128], strides = [1, 1]} : vector<256x128xf32> to vector<32x128xf32>
    %263 = vector.broadcast %261 : vector<1x128xf32> to vector<32x128xf32>
    %264 = arith.mulf %263, %262 : vector<32x128xf32>
    %265 = arith.addf %260, %264 : vector<32x128xf32>
    %266 = vector.extract_strided_slice %256 {offsets = [2, 0], sizes = [1, 128], strides = [1, 1]} : vector<8x128xf32> to vector<1x128xf32>
    %267 = vector.extract_strided_slice %39 {offsets = [64, 0], sizes = [32, 128], strides = [1, 1]} : vector<256x128xf32> to vector<32x128xf32>
    %268 = vector.broadcast %266 : vector<1x128xf32> to vector<32x128xf32>
    %269 = arith.mulf %268, %267 : vector<32x128xf32>
    %270 = arith.addf %265, %269 : vector<32x128xf32>
    %271 = vector.extract_strided_slice %256 {offsets = [3, 0], sizes = [1, 128], strides = [1, 1]} : vector<8x128xf32> to vector<1x128xf32>
    %272 = vector.extract_strided_slice %39 {offsets = [96, 0], sizes = [32, 128], strides = [1, 1]} : vector<256x128xf32> to vector<32x128xf32>
    %273 = vector.broadcast %271 : vector<1x128xf32> to vector<32x128xf32>
    %274 = arith.mulf %273, %272 : vector<32x128xf32>
    %275 = arith.addf %270, %274 : vector<32x128xf32>
    %276 = vector.extract_strided_slice %256 {offsets = [4, 0], sizes = [1, 128], strides = [1, 1]} : vector<8x128xf32> to vector<1x128xf32>
    %277 = vector.extract_strided_slice %39 {offsets = [128, 0], sizes = [32, 128], strides = [1, 1]} : vector<256x128xf32> to vector<32x128xf32>
    %278 = vector.broadcast %276 : vector<1x128xf32> to vector<32x128xf32>
    %279 = arith.mulf %278, %277 : vector<32x128xf32>
    %280 = arith.addf %275, %279 : vector<32x128xf32>
    %281 = vector.extract_strided_slice %256 {offsets = [5, 0], sizes = [1, 128], strides = [1, 1]} : vector<8x128xf32> to vector<1x128xf32>
    %282 = vector.extract_strided_slice %39 {offsets = [160, 0], sizes = [32, 128], strides = [1, 1]} : vector<256x128xf32> to vector<32x128xf32>
    %283 = vector.broadcast %281 : vector<1x128xf32> to vector<32x128xf32>
    %284 = arith.mulf %283, %282 : vector<32x128xf32>
    %285 = arith.addf %280, %284 : vector<32x128xf32>
    %286 = vector.extract_strided_slice %256 {offsets = [6, 0], sizes = [1, 128], strides = [1, 1]} : vector<8x128xf32> to vector<1x128xf32>
    %287 = vector.extract_strided_slice %39 {offsets = [192, 0], sizes = [32, 128], strides = [1, 1]} : vector<256x128xf32> to vector<32x128xf32>
    %288 = vector.broadcast %286 : vector<1x128xf32> to vector<32x128xf32>
    %289 = arith.mulf %288, %287 : vector<32x128xf32>
    %290 = arith.addf %285, %289 : vector<32x128xf32>
    %291 = vector.extract_strided_slice %256 {offsets = [7, 0], sizes = [1, 128], strides = [1, 1]} : vector<8x128xf32> to vector<1x128xf32>
    %292 = vector.extract_strided_slice %39 {offsets = [224, 0], sizes = [32, 128], strides = [1, 1]} : vector<256x128xf32> to vector<32x128xf32>
    %293 = vector.broadcast %291 : vector<1x128xf32> to vector<32x128xf32>
    %294 = arith.mulf %293, %292 : vector<32x128xf32>
    %295 = arith.addf %290, %294 : vector<32x128xf32>
    %c4_59 = arith.constant 4 : index
    %296 = memref.load %arg9[%c4_59] : memref<8xf32, #tpu.memory_space<smem>>
    %297 = vector.broadcast %296 : f32 to vector<32x128xf32>
    %298 = arith.addf %295, %297 : vector<32x128xf32>
    %299 = vector.extract_strided_slice %40 {offsets = [128, 0], sizes = [32, 128], strides = [1, 1]} : vector<256x128xf32> to vector<32x128xf32>
    %300 = arith.mulf %298, %299 : vector<32x128xf32>
    %301 = arith.truncf %300 : vector<32x128xf32> to vector<32x128xbf16>
    %cst_60 = arith.constant dense<0.000000e+00> : vector<32x128xf32>
    %302 = tpu.matmul %301, %41, %cst_60 {dimension_numbers = #tpu.dot_dimension_numbers<[1], [0], [0], [1], [0, 0, 1, 1], [], []>} : vector<32x128xbf16>, vector<128x128xbf16>, vector<32x128xf32> -> vector<32x128xf32>
    %303 = vector.broadcast %42 : vector<1x128xf32> to vector<32x128xf32>
    %304 = arith.addf %302, %303 : vector<32x128xf32>
    %c0_61 = arith.constant 0 : index
    %c4_62 = arith.constant 4 : index
    %c0_63 = arith.constant 0 : index
    %c0_64 = arith.constant 0 : index
    %305 = vector.load %arg12[%c0_61, %c4_62, %c0_63, %c0_64] : memref<1x8x32x128xf32, #tpu.memory_space<vmem>>, vector<1x1x32x128xf32>
    %306 = vector.shape_cast %305 : vector<1x1x32x128xf32> to vector<32x128xf32>
    %307 = vector.shape_cast %304 : vector<32x128xf32> to vector<1x1x32x128xf32>
    tpu.vector_store %arg12[%c0_61, %c4_62, %c0_63, %c0_64], %307 {strides = array<i32>} : memref<1x8x32x128xf32, #tpu.memory_space<vmem>>, vector<1x1x32x128xf32>,
    %c5 = arith.constant 5 : index
    %c0_65 = arith.constant 0 : index
    %c0_66 = arith.constant 0 : index
    %308 = vector.load %arg8[%c5, %c0_65, %c0_66] : memref<8x8x128xf32, #tpu.memory_space<vmem>>, vector<1x8x128xf32>
    %309 = vector.shape_cast %308 : vector<1x8x128xf32> to vector<8x128xf32>
    %310 = vector.extract_strided_slice %309 {offsets = [0, 0], sizes = [1, 128], strides = [1, 1]} : vector<8x128xf32> to vector<1x128xf32>
    %311 = vector.extract_strided_slice %39 {offsets = [0, 0], sizes = [32, 128], strides = [1, 1]} : vector<256x128xf32> to vector<32x128xf32>
    %312 = vector.broadcast %310 : vector<1x128xf32> to vector<32x128xf32>
    %313 = arith.mulf %312, %311 : vector<32x128xf32>
    %314 = vector.extract_strided_slice %309 {offsets = [1, 0], sizes = [1, 128], strides = [1, 1]} : vector<8x128xf32> to vector<1x128xf32>
    %315 = vector.extract_strided_slice %39 {offsets = [32, 0], sizes = [32, 128], strides = [1, 1]} : vector<256x128xf32> to vector<32x128xf32>
    %316 = vector.broadcast %314 : vector<1x128xf32> to vector<32x128xf32>
    %317 = arith.mulf %316, %315 : vector<32x128xf32>
    %318 = arith.addf %313, %317 : vector<32x128xf32>
    %319 = vector.extract_strided_slice %309 {offsets = [2, 0], sizes = [1, 128], strides = [1, 1]} : vector<8x128xf32> to vector<1x128xf32>
    %320 = vector.extract_strided_slice %39 {offsets = [64, 0], sizes = [32, 128], strides = [1, 1]} : vector<256x128xf32> to vector<32x128xf32>
    %321 = vector.broadcast %319 : vector<1x128xf32> to vector<32x128xf32>
    %322 = arith.mulf %321, %320 : vector<32x128xf32>
    %323 = arith.addf %318, %322 : vector<32x128xf32>
    %324 = vector.extract_strided_slice %309 {offsets = [3, 0], sizes = [1, 128], strides = [1, 1]} : vector<8x128xf32> to vector<1x128xf32>
    %325 = vector.extract_strided_slice %39 {offsets = [96, 0], sizes = [32, 128], strides = [1, 1]} : vector<256x128xf32> to vector<32x128xf32>
    %326 = vector.broadcast %324 : vector<1x128xf32> to vector<32x128xf32>
    %327 = arith.mulf %326, %325 : vector<32x128xf32>
    %328 = arith.addf %323, %327 : vector<32x128xf32>
    %329 = vector.extract_strided_slice %309 {offsets = [4, 0], sizes = [1, 128], strides = [1, 1]} : vector<8x128xf32> to vector<1x128xf32>
    %330 = vector.extract_strided_slice %39 {offsets = [128, 0], sizes = [32, 128], strides = [1, 1]} : vector<256x128xf32> to vector<32x128xf32>
    %331 = vector.broadcast %329 : vector<1x128xf32> to vector<32x128xf32>
    %332 = arith.mulf %331, %330 : vector<32x128xf32>
    %333 = arith.addf %328, %332 : vector<32x128xf32>
    %334 = vector.extract_strided_slice %309 {offsets = [5, 0], sizes = [1, 128], strides = [1, 1]} : vector<8x128xf32> to vector<1x128xf32>
    %335 = vector.extract_strided_slice %39 {offsets = [160, 0], sizes = [32, 128], strides = [1, 1]} : vector<256x128xf32> to vector<32x128xf32>
    %336 = vector.broadcast %334 : vector<1x128xf32> to vector<32x128xf32>
    %337 = arith.mulf %336, %335 : vector<32x128xf32>
    %338 = arith.addf %333, %337 : vector<32x128xf32>
    %339 = vector.extract_strided_slice %309 {offsets = [6, 0], sizes = [1, 128], strides = [1, 1]} : vector<8x128xf32> to vector<1x128xf32>
    %340 = vector.extract_strided_slice %39 {offsets = [192, 0], sizes = [32, 128], strides = [1, 1]} : vector<256x128xf32> to vector<32x128xf32>
    %341 = vector.broadcast %339 : vector<1x128xf32> to vector<32x128xf32>
    %342 = arith.mulf %341, %340 : vector<32x128xf32>
    %343 = arith.addf %338, %342 : vector<32x128xf32>
    %344 = vector.extract_strided_slice %309 {offsets = [7, 0], sizes = [1, 128], strides = [1, 1]} : vector<8x128xf32> to vector<1x128xf32>
    %345 = vector.extract_strided_slice %39 {offsets = [224, 0], sizes = [32, 128], strides = [1, 1]} : vector<256x128xf32> to vector<32x128xf32>
    %346 = vector.broadcast %344 : vector<1x128xf32> to vector<32x128xf32>
    %347 = arith.mulf %346, %345 : vector<32x128xf32>
    %348 = arith.addf %343, %347 : vector<32x128xf32>
    %c5_67 = arith.constant 5 : index
    %349 = memref.load %arg9[%c5_67] : memref<8xf32, #tpu.memory_space<smem>>
    %350 = vector.broadcast %349 : f32 to vector<32x128xf32>
    %351 = arith.addf %348, %350 : vector<32x128xf32>
    %352 = vector.extract_strided_slice %40 {offsets = [160, 0], sizes = [32, 128], strides = [1, 1]} : vector<256x128xf32> to vector<32x128xf32>
    %353 = arith.mulf %351, %352 : vector<32x128xf32>
    %354 = arith.truncf %353 : vector<32x128xf32> to vector<32x128xbf16>
    %cst_68 = arith.constant dense<0.000000e+00> : vector<32x128xf32>
    %355 = tpu.matmul %354, %41, %cst_68 {dimension_numbers = #tpu.dot_dimension_numbers<[1], [0], [0], [1], [0, 0, 1, 1], [], []>} : vector<32x128xbf16>, vector<128x128xbf16>, vector<32x128xf32> -> vector<32x128xf32>
    %356 = vector.broadcast %42 : vector<1x128xf32> to vector<32x128xf32>
    %357 = arith.addf %355, %356 : vector<32x128xf32>
    %c0_69 = arith.constant 0 : index
    %c5_70 = arith.constant 5 : index
    %c0_71 = arith.constant 0 : index
    %c0_72 = arith.constant 0 : index
    %358 = vector.load %arg12[%c0_69, %c5_70, %c0_71, %c0_72] : memref<1x8x32x128xf32, #tpu.memory_space<vmem>>, vector<1x1x32x128xf32>
    %359 = vector.shape_cast %358 : vector<1x1x32x128xf32> to vector<32x128xf32>
    %360 = vector.shape_cast %357 : vector<32x128xf32> to vector<1x1x32x128xf32>
    tpu.vector_store %arg12[%c0_69, %c5_70, %c0_71, %c0_72], %360 {strides = array<i32>} : memref<1x8x32x128xf32, #tpu.memory_space<vmem>>, vector<1x1x32x128xf32>,
    %c6 = arith.constant 6 : index
    %c0_73 = arith.constant 0 : index
    %c0_74 = arith.constant 0 : index
    %361 = vector.load %arg8[%c6, %c0_73, %c0_74] : memref<8x8x128xf32, #tpu.memory_space<vmem>>, vector<1x8x128xf32>
    %362 = vector.shape_cast %361 : vector<1x8x128xf32> to vector<8x128xf32>
    %363 = vector.extract_strided_slice %362 {offsets = [0, 0], sizes = [1, 128], strides = [1, 1]} : vector<8x128xf32> to vector<1x128xf32>
    %364 = vector.extract_strided_slice %39 {offsets = [0, 0], sizes = [32, 128], strides = [1, 1]} : vector<256x128xf32> to vector<32x128xf32>
    %365 = vector.broadcast %363 : vector<1x128xf32> to vector<32x128xf32>
    %366 = arith.mulf %365, %364 : vector<32x128xf32>
    %367 = vector.extract_strided_slice %362 {offsets = [1, 0], sizes = [1, 128], strides = [1, 1]} : vector<8x128xf32> to vector<1x128xf32>
    %368 = vector.extract_strided_slice %39 {offsets = [32, 0], sizes = [32, 128], strides = [1, 1]} : vector<256x128xf32> to vector<32x128xf32>
    %369 = vector.broadcast %367 : vector<1x128xf32> to vector<32x128xf32>
    %370 = arith.mulf %369, %368 : vector<32x128xf32>
    %371 = arith.addf %366, %370 : vector<32x128xf32>
    %372 = vector.extract_strided_slice %362 {offsets = [2, 0], sizes = [1, 128], strides = [1, 1]} : vector<8x128xf32> to vector<1x128xf32>
    %373 = vector.extract_strided_slice %39 {offsets = [64, 0], sizes = [32, 128], strides = [1, 1]} : vector<256x128xf32> to vector<32x128xf32>
    %374 = vector.broadcast %372 : vector<1x128xf32> to vector<32x128xf32>
    %375 = arith.mulf %374, %373 : vector<32x128xf32>
    %376 = arith.addf %371, %375 : vector<32x128xf32>
    %377 = vector.extract_strided_slice %362 {offsets = [3, 0], sizes = [1, 128], strides = [1, 1]} : vector<8x128xf32> to vector<1x128xf32>
    %378 = vector.extract_strided_slice %39 {offsets = [96, 0], sizes = [32, 128], strides = [1, 1]} : vector<256x128xf32> to vector<32x128xf32>
    %379 = vector.broadcast %377 : vector<1x128xf32> to vector<32x128xf32>
    %380 = arith.mulf %379, %378 : vector<32x128xf32>
    %381 = arith.addf %376, %380 : vector<32x128xf32>
    %382 = vector.extract_strided_slice %362 {offsets = [4, 0], sizes = [1, 128], strides = [1, 1]} : vector<8x128xf32> to vector<1x128xf32>
    %383 = vector.extract_strided_slice %39 {offsets = [128, 0], sizes = [32, 128], strides = [1, 1]} : vector<256x128xf32> to vector<32x128xf32>
    %384 = vector.broadcast %382 : vector<1x128xf32> to vector<32x128xf32>
    %385 = arith.mulf %384, %383 : vector<32x128xf32>
    %386 = arith.addf %381, %385 : vector<32x128xf32>
    %387 = vector.extract_strided_slice %362 {offsets = [5, 0], sizes = [1, 128], strides = [1, 1]} : vector<8x128xf32> to vector<1x128xf32>
    %388 = vector.extract_strided_slice %39 {offsets = [160, 0], sizes = [32, 128], strides = [1, 1]} : vector<256x128xf32> to vector<32x128xf32>
    %389 = vector.broadcast %387 : vector<1x128xf32> to vector<32x128xf32>
    %390 = arith.mulf %389, %388 : vector<32x128xf32>
    %391 = arith.addf %386, %390 : vector<32x128xf32>
    %392 = vector.extract_strided_slice %362 {offsets = [6, 0], sizes = [1, 128], strides = [1, 1]} : vector<8x128xf32> to vector<1x128xf32>
    %393 = vector.extract_strided_slice %39 {offsets = [192, 0], sizes = [32, 128], strides = [1, 1]} : vector<256x128xf32> to vector<32x128xf32>
    %394 = vector.broadcast %392 : vector<1x128xf32> to vector<32x128xf32>
    %395 = arith.mulf %394, %393 : vector<32x128xf32>
    %396 = arith.addf %391, %395 : vector<32x128xf32>
    %397 = vector.extract_strided_slice %362 {offsets = [7, 0], sizes = [1, 128], strides = [1, 1]} : vector<8x128xf32> to vector<1x128xf32>
    %398 = vector.extract_strided_slice %39 {offsets = [224, 0], sizes = [32, 128], strides = [1, 1]} : vector<256x128xf32> to vector<32x128xf32>
    %399 = vector.broadcast %397 : vector<1x128xf32> to vector<32x128xf32>
    %400 = arith.mulf %399, %398 : vector<32x128xf32>
    %401 = arith.addf %396, %400 : vector<32x128xf32>
    %c6_75 = arith.constant 6 : index
    %402 = memref.load %arg9[%c6_75] : memref<8xf32, #tpu.memory_space<smem>>
    %403 = vector.broadcast %402 : f32 to vector<32x128xf32>
    %404 = arith.addf %401, %403 : vector<32x128xf32>
    %405 = vector.extract_strided_slice %40 {offsets = [192, 0], sizes = [32, 128], strides = [1, 1]} : vector<256x128xf32> to vector<32x128xf32>
    %406 = arith.mulf %404, %405 : vector<32x128xf32>
    %407 = arith.truncf %406 : vector<32x128xf32> to vector<32x128xbf16>
    %cst_76 = arith.constant dense<0.000000e+00> : vector<32x128xf32>
    %408 = tpu.matmul %407, %41, %cst_76 {dimension_numbers = #tpu.dot_dimension_numbers<[1], [0], [0], [1], [0, 0, 1, 1], [], []>} : vector<32x128xbf16>, vector<128x128xbf16>, vector<32x128xf32> -> vector<32x128xf32>
    %409 = vector.broadcast %42 : vector<1x128xf32> to vector<32x128xf32>
    %410 = arith.addf %408, %409 : vector<32x128xf32>
    %c0_77 = arith.constant 0 : index
    %c6_78 = arith.constant 6 : index
    %c0_79 = arith.constant 0 : index
    %c0_80 = arith.constant 0 : index
    %411 = vector.load %arg12[%c0_77, %c6_78, %c0_79, %c0_80] : memref<1x8x32x128xf32, #tpu.memory_space<vmem>>, vector<1x1x32x128xf32>
    %412 = vector.shape_cast %411 : vector<1x1x32x128xf32> to vector<32x128xf32>
    %413 = vector.shape_cast %410 : vector<32x128xf32> to vector<1x1x32x128xf32>
    tpu.vector_store %arg12[%c0_77, %c6_78, %c0_79, %c0_80], %413 {strides = array<i32>} : memref<1x8x32x128xf32, #tpu.memory_space<vmem>>, vector<1x1x32x128xf32>,
    %c7 = arith.constant 7 : index
    %c0_81 = arith.constant 0 : index
    %c0_82 = arith.constant 0 : index
    %414 = vector.load %arg8[%c7, %c0_81, %c0_82] : memref<8x8x128xf32, #tpu.memory_space<vmem>>, vector<1x8x128xf32>
    %415 = vector.shape_cast %414 : vector<1x8x128xf32> to vector<8x128xf32>
    %416 = vector.extract_strided_slice %415 {offsets = [0, 0], sizes = [1, 128], strides = [1, 1]} : vector<8x128xf32> to vector<1x128xf32>
    %417 = vector.extract_strided_slice %39 {offsets = [0, 0], sizes = [32, 128], strides = [1, 1]} : vector<256x128xf32> to vector<32x128xf32>
    %418 = vector.broadcast %416 : vector<1x128xf32> to vector<32x128xf32>
    %419 = arith.mulf %418, %417 : vector<32x128xf32>
    %420 = vector.extract_strided_slice %415 {offsets = [1, 0], sizes = [1, 128], strides = [1, 1]} : vector<8x128xf32> to vector<1x128xf32>
    %421 = vector.extract_strided_slice %39 {offsets = [32, 0], sizes = [32, 128], strides = [1, 1]} : vector<256x128xf32> to vector<32x128xf32>
    %422 = vector.broadcast %420 : vector<1x128xf32> to vector<32x128xf32>
    %423 = arith.mulf %422, %421 : vector<32x128xf32>
    %424 = arith.addf %419, %423 : vector<32x128xf32>
    %425 = vector.extract_strided_slice %415 {offsets = [2, 0], sizes = [1, 128], strides = [1, 1]} : vector<8x128xf32> to vector<1x128xf32>
    %426 = vector.extract_strided_slice %39 {offsets = [64, 0], sizes = [32, 128], strides = [1, 1]} : vector<256x128xf32> to vector<32x128xf32>
    %427 = vector.broadcast %425 : vector<1x128xf32> to vector<32x128xf32>
    %428 = arith.mulf %427, %426 : vector<32x128xf32>
    %429 = arith.addf %424, %428 : vector<32x128xf32>
    %430 = vector.extract_strided_slice %415 {offsets = [3, 0], sizes = [1, 128], strides = [1, 1]} : vector<8x128xf32> to vector<1x128xf32>
    %431 = vector.extract_strided_slice %39 {offsets = [96, 0], sizes = [32, 128], strides = [1, 1]} : vector<256x128xf32> to vector<32x128xf32>
    %432 = vector.broadcast %430 : vector<1x128xf32> to vector<32x128xf32>
    %433 = arith.mulf %432, %431 : vector<32x128xf32>
    %434 = arith.addf %429, %433 : vector<32x128xf32>
    %435 = vector.extract_strided_slice %415 {offsets = [4, 0], sizes = [1, 128], strides = [1, 1]} : vector<8x128xf32> to vector<1x128xf32>
    %436 = vector.extract_strided_slice %39 {offsets = [128, 0], sizes = [32, 128], strides = [1, 1]} : vector<256x128xf32> to vector<32x128xf32>
    %437 = vector.broadcast %435 : vector<1x128xf32> to vector<32x128xf32>
    %438 = arith.mulf %437, %436 : vector<32x128xf32>
    %439 = arith.addf %434, %438 : vector<32x128xf32>
    %440 = vector.extract_strided_slice %415 {offsets = [5, 0], sizes = [1, 128], strides = [1, 1]} : vector<8x128xf32> to vector<1x128xf32>
    %441 = vector.extract_strided_slice %39 {offsets = [160, 0], sizes = [32, 128], strides = [1, 1]} : vector<256x128xf32> to vector<32x128xf32>
    %442 = vector.broadcast %440 : vector<1x128xf32> to vector<32x128xf32>
    %443 = arith.mulf %442, %441 : vector<32x128xf32>
    %444 = arith.addf %439, %443 : vector<32x128xf32>
    %445 = vector.extract_strided_slice %415 {offsets = [6, 0], sizes = [1, 128], strides = [1, 1]} : vector<8x128xf32> to vector<1x128xf32>
    %446 = vector.extract_strided_slice %39 {offsets = [192, 0], sizes = [32, 128], strides = [1, 1]} : vector<256x128xf32> to vector<32x128xf32>
    %447 = vector.broadcast %445 : vector<1x128xf32> to vector<32x128xf32>
    %448 = arith.mulf %447, %446 : vector<32x128xf32>
    %449 = arith.addf %444, %448 : vector<32x128xf32>
    %450 = vector.extract_strided_slice %415 {offsets = [7, 0], sizes = [1, 128], strides = [1, 1]} : vector<8x128xf32> to vector<1x128xf32>
    %451 = vector.extract_strided_slice %39 {offsets = [224, 0], sizes = [32, 128], strides = [1, 1]} : vector<256x128xf32> to vector<32x128xf32>
    %452 = vector.broadcast %450 : vector<1x128xf32> to vector<32x128xf32>
    %453 = arith.mulf %452, %451 : vector<32x128xf32>
    %454 = arith.addf %449, %453 : vector<32x128xf32>
    %c7_83 = arith.constant 7 : index
    %455 = memref.load %arg9[%c7_83] : memref<8xf32, #tpu.memory_space<smem>>
    %456 = vector.broadcast %455 : f32 to vector<32x128xf32>
    %457 = arith.addf %454, %456 : vector<32x128xf32>
    %458 = vector.extract_strided_slice %40 {offsets = [224, 0], sizes = [32, 128], strides = [1, 1]} : vector<256x128xf32> to vector<32x128xf32>
    %459 = arith.mulf %457, %458 : vector<32x128xf32>
    %460 = arith.truncf %459 : vector<32x128xf32> to vector<32x128xbf16>
    %cst_84 = arith.constant dense<0.000000e+00> : vector<32x128xf32>
    %461 = tpu.matmul %460, %41, %cst_84 {dimension_numbers = #tpu.dot_dimension_numbers<[1], [0], [0], [1], [0, 0, 1, 1], [], []>} : vector<32x128xbf16>, vector<128x128xbf16>, vector<32x128xf32> -> vector<32x128xf32>
    %462 = vector.broadcast %42 : vector<1x128xf32> to vector<32x128xf32>
    %463 = arith.addf %461, %462 : vector<32x128xf32>
    %c0_85 = arith.constant 0 : index
    %c7_86 = arith.constant 7 : index
    %c0_87 = arith.constant 0 : index
    %c0_88 = arith.constant 0 : index
    %464 = vector.load %arg12[%c0_85, %c7_86, %c0_87, %c0_88] : memref<1x8x32x128xf32, #tpu.memory_space<vmem>>, vector<1x1x32x128xf32>
    %465 = vector.shape_cast %464 : vector<1x1x32x128xf32> to vector<32x128xf32>
    %466 = vector.shape_cast %463 : vector<32x128xf32> to vector<1x1x32x128xf32>
    tpu.vector_store %arg12[%c0_85, %c7_86, %c0_87, %c0_88], %466 {strides = array<i32>} : memref<1x8x32x128xf32, #tpu.memory_space<vmem>>, vector<1x1x32x128xf32>,
    return
  }
  func.func @transform_0(%arg0: i32, %arg1: i32) -> (i32, i32, i32, i32) {
    %c0_i32 = arith.constant 0 : i32
    %c0_i32_0 = arith.constant 0 : i32
    %c0_i32_1 = arith.constant 0 : i32
    return %arg0, %c0_i32, %arg1, %c0_i32_0 : i32, i32, i32, i32
  }
  func.func @transform_1(%arg0: i32, %arg1: i32) -> (i32, i32) {
    %c0_i32 = arith.constant 0 : i32
    %c0_i32_0 = arith.constant 0 : i32
    %c0_i32_1 = arith.constant 0 : i32
    return %c0_i32, %c0_i32_0 : i32, i32
  }
  func.func @transform_2(%arg0: i32, %arg1: i32) -> (i32, i32) {
    %c0_i32 = arith.constant 0 : i32
    %c0_i32_0 = arith.constant 0 : i32
    %c0_i32_1 = arith.constant 0 : i32
    return %c0_i32, %c0_i32_0 : i32, i32
  }
  func.func @transform_3(%arg0: i32, %arg1: i32) -> (i32, i32) {
    %c0_i32 = arith.constant 0 : i32
    %c0_i32_0 = arith.constant 0 : i32
    %c0_i32_1 = arith.constant 0 : i32
    return %c0_i32, %c0_i32_0 : i32, i32
  }
  func.func @transform_4(%arg0: i32, %arg1: i32) -> (i32, i32) {
    %c0_i32 = arith.constant 0 : i32
    %c0_i32_0 = arith.constant 0 : i32
    %c0_i32_1 = arith.constant 0 : i32
    return %c0_i32, %c0_i32_0 : i32, i32
  }
  func.func @transform_5(%arg0: i32, %arg1: i32) -> (i32, i32) {
    %c0_i32 = arith.constant 0 : i32
    %c0_i32_0 = arith.constant 0 : i32
    %c0_i32_1 = arith.constant 0 : i32
    return %c0_i32, %c0_i32_0 : i32, i32
  }
  func.func @transform_6(%arg0: i32, %arg1: i32) -> (i32, i32, i32) {
    %c0_i32 = arith.constant 0 : i32
    %c0_i32_0 = arith.constant 0 : i32
    %c0_i32_1 = arith.constant 0 : i32
    %c0_i32_2 = arith.constant 0 : i32
    return %c0_i32, %c0_i32_0, %c0_i32_1 : i32, i32, i32
  }
  func.func @transform_7(%arg0: i32, %arg1: i32) -> i32 {
    %c0_i32 = arith.constant 0 : i32
    %c0_i32_0 = arith.constant 0 : i32
    return %c0_i32 : i32
  }
  func.func @transform_8(%arg0: i32, %arg1: i32) -> (i32, i32) {
    %c0_i32 = arith.constant 0 : i32
    %c0_i32_0 = arith.constant 0 : i32
    %c0_i32_1 = arith.constant 0 : i32
    return %c0_i32, %c0_i32_0 : i32, i32
  }
  func.func @transform_9(%arg0: i32, %arg1: i32) -> (i32, i32) {
    %c0_i32 = arith.constant 0 : i32
    %c0_i32_0 = arith.constant 0 : i32
    %c0_i32_1 = arith.constant 0 : i32
    return %c0_i32, %c0_i32_0 : i32, i32
  }
  func.func @transform_10(%arg0: i32, %arg1: i32) -> (i32, i32, i32, i32) {
    %c0_i32 = arith.constant 0 : i32
    %c0_i32_0 = arith.constant 0 : i32
    %c0_i32_1 = arith.constant 0 : i32
    return %arg0, %c0_i32, %arg1, %c0_i32_0 : i32, i32, i32, i32
  }
}

</mosaic_0001>

<llo_original>
// kernel: tpu_custom_call.1
$region0: #{tpu_custom_call.1}
  #allocation0 [shape = 'u32[]', space=smem, size = 0x4, offset = 0x4, fixed_abs, tag = 'smem constant byte address 0x4 - core index']
  #allocation1 [shape = 'u32[72,128]{1,0:T(1,128)}', space=vmem, size = 0x9000, scoped, tag = 'internal scratch']
  #allocation16 [shape = 's32[]', space=sflag, size = 0x4, offset = 0, fixed_abs, tag = 'sflag constant byte address 0x0 - dummy sync flag']
  #allocation18 [shape = 's32[]', space=sflag, size = 0x4, offset = 0, fixed_abs, tag = 'sflag constant byte address 0x0 - dummy sync flag']
  %s0 = inlined_call_operand.hbm [shape: f32[2,8,64,128], index: 0, kind: input, shape index: {}]
  %s1 = inlined_call_operand.hbm [shape: f32[1,128], index: 1, kind: input, shape index: {}]
  %s2 = inlined_call_operand.vmem [shape: f32[1,128], index: 2, kind: input, shape index: {}]
  %s3 = inlined_call_operand.hbm [shape: bf16[128,128], index: 3, kind: input, shape index: {}]
  %s4 = inlined_call_operand.hbm [shape: bf16[128,256], index: 4, kind: input, shape index: {}]
  %s5 = inlined_call_operand.vmem [shape: f32[1,256], index: 5, kind: input, shape index: {}]
  %s6 = inlined_call_operand.hbm [shape: f32[8,8,128], index: 6, kind: input, shape index: {}]
  %s7 = inlined_call_operand.vmem [shape: f32[8], index: 7, kind: input, shape index: {}]
  %s8 = inlined_call_operand.hbm [shape: bf16[128,128], index: 8, kind: input, shape index: {}]
  %s9 = inlined_call_operand.vmem [shape: f32[1,128], index: 9, kind: input, shape index: {}]
  %s10 = inlined_call_operand.hbm [shape: f32[2,8,64,128], index: 10, kind: output, shape index: {}]
  %s11 = sld [smem:[#allocation0]]
  $region101: #{tpu_custom_call.1} parent=0
    _
  %s13 = ssub.s32 1, %s11
  %s14 = scalar_select 0, %s13, %s11
  $region1: #{tpu_custom_call.1} parent=0
    #allocation2 [shape = 'u8[262144]{0}', space=vmem, size = 0x40000, scoped, tag = 'input window, operand 0']
    #allocation3 [shape = 's32[2]{0}', space=sflag, size = 0x8, scoped, tag = 'scoped memory for tpu_custom_call.1']
    #allocation4 [shape = 's32[2]{0}', space=sflag, size = 0x8, scoped, tag = 'scoped memory for tpu_custom_call.1']
    #allocation5 [shape = 's32[2]{0}', space=sflag, size = 0x8, scoped, tag = 'scoped memory for tpu_custom_call.1']
    #allocation6 [shape = 'u8[512]{0}', space=vmem, size = 0x400, scoped, tag = 'input window, operand 1, single buffered']
    #allocation7 [shape = 's32[1]{0}', space=sflag, size = 0x4, scoped, tag = 'scoped memory for tpu_custom_call.1']
    #allocation8 [shape = 'u8[32768]{0}', space=vmem, size = 0x8000, scoped, tag = 'input window, operand 3, single buffered']
    #allocation9 [shape = 'u8[65536]{0}', space=vmem, size = 0x10000, scoped, tag = 'input window, operand 4, single buffered']
    #allocation10 [shape = 's32[1]{0}', space=sflag, size = 0x4, scoped, tag = 'scoped memory for tpu_custom_call.1']
    #allocation11 [shape = 'u8[32768]{0}', space=vmem, size = 0x8000, scoped, tag = 'input window, operand 6, single buffered']
    #allocation12 [shape = 'u8[512]{0}', space=smem, size = 0x200, scoped, tag = 'input window, operand 7, single buffered']
    #allocation13 [shape = 'u8[32768]{0}', space=vmem, size = 0x8000, scoped, tag = 'input window, operand 8, single buffered']
    #allocation14 [shape = 's32[1]{0}', space=sflag, size = 0x4, scoped, tag = 'scoped memory for tpu_custom_call.1']
    #allocation15 [shape = 'u8[262144]{0}', space=vmem, size = 0x40000, scoped, tag = 'output window, operand 0']
    %15 = vsyncpa [#allocation3], 0
    %s16 = scalar_lea.sflag [#allocation3], 1
    %17 = vsyncpa %s16, 0
    %18 = vsyncpa [#allocation7], 0
    %19 = vsyncpa [#allocation10], 0
    %20 = vsyncpa [#allocation5], 0
    %21 = vsyncpa [#allocation14], 0
    %22 = vsyncpa [#allocation4], 0
    %s23 = scalar_lea.sflag [#allocation4], 1
    %24 = vsyncpa %s23, 0
    loop: start=0, step=1, limit=6
    $region2: #{tpu_custom_call.1} parent=1 // loop_pre_header
      _
    $region3: #{tpu_custom_call.1} parent=1 // loop_header
      %s26 = sphi 0, %s30
      %p27 = scmp.ge.s32.totalorder %s26, 6
      %s33 = sphi 0, %s45
      %s34 = sphi 0, %s41
      %s35 = sphi 0, %s33
      %s36 = sphi 0, %s34
      %s37 = sphi 0, %s35
      %s38 = sphi 0, %s36
      %s50 = sphi 0, %s52
      %s53 = sphi 0, %s50
      %s54 = sphi 0, %s53
      %s70 = sphi 0, %s54
      %s74 = sphi 0, %s74
      %s76 = sphi 0, %s74
      %s77 = sphi 0, %s76
      %s91 = sphi 0, %s77
      %s95 = sphi 0, %s95
      %s97 = sphi 0, %s95
      %s98 = sphi 0, %s97
      %s112 = sphi 0, %s98
      %s116 = sphi 0, %s116
      %s118 = sphi 0, %s116
      %s119 = sphi 0, %s118
      %s133 = sphi 0, %s119
      %s137 = sphi 0, %s137
      %s139 = sphi 0, %s137
      %s140 = sphi 0, %s139
      %s154 = sphi 0, %s140
      %s158 = sphi 0, %s158
      %s160 = sphi 0, %s158
      %s161 = sphi 0, %s160
      %s175 = sphi 0, %s161
      %s179 = sphi 0, %s179
      %s181 = sphi 0, %s179
      %s182 = sphi 0, %s181
      %s196 = sphi 0, %s182
      %s200 = sphi 0, %s200
      %s202 = sphi 0, %s200
      %s203 = sphi 0, %s202
      %s217 = sphi 0, %s203
      %s221 = sphi 0, %s221
      %s223 = sphi 0, %s221
      %s224 = sphi 0, %s223
      %s238 = sphi 0, %s224
      %s242 = sphi 0, %s242
      %s244 = sphi 0, %s242
      %s245 = sphi 0, %s244
      %s259 = sphi 0, %s245
      %s267 = sphi 0, %s269
      %s270 = sphi 0, %s267
      %s271 = sphi 0, %s270
      %s287 = sphi 0, %s271
    $region4: #{tpu_custom_call.1} parent=1 // loop_header_branch
      %29 = sbr.rel (%p27) target = $region8
    $region5: #{tpu_custom_call.1} parent=1 // loop_body
      %s31 = ssub.s32 %s26, 1
      %s32 = ssub.s32 %s26, 2
      %s39 = sadd.s32 1, %s34
      %p40 = scmp.ge.s32.totalorder %s39, 2
      %s41 = scalar_select %p40, 0, %s39
      %s42 = sadd.s32 1, %s33
      %s43 = scalar_select %p40, %s42, %s33
      %p44 = scmp.ge.s32.totalorder %s43, 2
      %s45 = scalar_select %p44, 0, %s43
      %s46 = ssub.s32 %s33, %s45
      %s47 = ssub.s32 %s34, %s41
      %s48 = sor.u32 %s46, %s47
      %p49 = scmp.eq.s32.totalorder %s48, 0
      %s51 = sadd.s32 %s50, 1
      %s52 = scalar_select %p49, %s50, %s51
      %p55 = pneg %p49
      %p56 = scmp.eq.s32.totalorder %s26, 3
      %p57 = por %p55, %p56
      %p58 = scmp.ne.s32.totalorder %s50, %s53
      %p59 = scmp.eq.s32.totalorder %s26, 0
      %p60 = por %p58, %p59
      %p61 = scmp.ne.s32.totalorder %s50, %s53
      %p62 = scmp.eq.s32.totalorder %s31, 3
      %p63 = por %p61, %p62
      %p64 = scmp.ne.s32.totalorder %s53, %s54
      %p65 = scmp.eq.s32.totalorder %s31, 0
      %p66 = por %p64, %p65
      %p67 = scmp.ne.s32.totalorder %s53, %s54
      %p68 = scmp.eq.s32.totalorder %s32, 3
      %p69 = por %p67, %p68
      %p71 = scmp.ne.s32.totalorder %s54, %s70
      %p72 = scmp.eq.s32.totalorder %s32, 0
      %p73 = por %p71, %p72
      %s75 = sadd.s32 %s74, 1
      %p78 = scmp.eq.s32.totalorder %s26, 3
      %p79 = scmp.ne.s32.totalorder %s74, %s76
      %p80 = scmp.eq.s32.totalorder %s26, 0
      %p81 = por %p79, %p80
      %p82 = scmp.ne.s32.totalorder %s74, %s76
      %p83 = scmp.eq.s32.totalorder %s31, 3
      %p84 = por %p82, %p83
      %p85 = scmp.ne.s32.totalorder %s76, %s77
      %p86 = scmp.eq.s32.totalorder %s31, 0
      %p87 = por %p85, %p86
      %p88 = scmp.ne.s32.totalorder %s76, %s77
      %p89 = scmp.eq.s32.totalorder %s32, 3
      %p90 = por %p88, %p89
      %p92 = scmp.ne.s32.totalorder %s77, %s91
      %p93 = scmp.eq.s32.totalorder %s32, 0
      %p94 = por %p92, %p93
      %s96 = sadd.s32 %s95, 1
      %p99 = scmp.eq.s32.totalorder %s26, 3
      %p100 = scmp.ne.s32.totalorder %s95, %s97
      %p101 = scmp.eq.s32.totalorder %s26, 0
      %p102 = por %p100, %p101
      %p103 = scmp.ne.s32.totalorder %s95, %s97
      %p104 = scmp.eq.s32.totalorder %s31, 3
      %p105 = por %p103, %p104
      %p106 = scmp.ne.s32.totalorder %s97, %s98
      %p107 = scmp.eq.s32.totalorder %s31, 0
      %p108 = por %p106, %p107
      %p109 = scmp.ne.s32.totalorder %s97, %s98
      %p110 = scmp.eq.s32.totalorder %s32, 3
      %p111 = por %p109, %p110
      %p113 = scmp.ne.s32.totalorder %s98, %s112
      %p114 = scmp.eq.s32.totalorder %s32, 0
      %p115 = por %p113, %p114
      %s117 = sadd.s32 %s116, 1
      %p120 = scmp.eq.s32.totalorder %s26, 3
      %p121 = scmp.ne.s32.totalorder %s116, %s118
      %p122 = scmp.eq.s32.totalorder %s26, 0
      %p123 = por %p121, %p122
      %p124 = scmp.ne.s32.totalorder %s116, %s118
      %p125 = scmp.eq.s32.totalorder %s31, 3
      %p126 = por %p124, %p125
      %p127 = scmp.ne.s32.totalorder %s118, %s119
      %p128 = scmp.eq.s32.totalorder %s31, 0
      %p129 = por %p127, %p128
      %p130 = scmp.ne.s32.totalorder %s118, %s119
      %p131 = scmp.eq.s32.totalorder %s32, 3
      %p132 = por %p130, %p131
      %p134 = scmp.ne.s32.totalorder %s119, %s133
      %p135 = scmp.eq.s32.totalorder %s32, 0
      %p136 = por %p134, %p135
      %s138 = sadd.s32 %s137, 1
      %p141 = scmp.eq.s32.totalorder %s26, 3
      %p142 = scmp.ne.s32.totalorder %s137, %s139
      %p143 = scmp.eq.s32.totalorder %s26, 0
      %p144 = por %p142, %p143
      %p145 = scmp.ne.s32.totalorder %s137, %s139
      %p146 = scmp.eq.s32.totalorder %s31, 3
      %p147 = por %p145, %p146
      %p148 = scmp.ne.s32.totalorder %s139, %s140
      %p149 = scmp.eq.s32.totalorder %s31, 0
      %p150 = por %p148, %p149
      %p151 = scmp.ne.s32.totalorder %s139, %s140
      %p152 = scmp.eq.s32.totalorder %s32, 3
      %p153 = por %p151, %p152
      %p155 = scmp.ne.s32.totalorder %s140, %s154
      %p156 = scmp.eq.s32.totalorder %s32, 0
      %p157 = por %p155, %p156
      %s159 = sadd.s32 %s158, 1
      %p162 = scmp.eq.s32.totalorder %s26, 3
      %p163 = scmp.ne.s32.totalorder %s158, %s160
      %p164 = scmp.eq.s32.totalorder %s26, 0
      %p165 = por %p163, %p164
      %p166 = scmp.ne.s32.totalorder %s158, %s160
      %p167 = scmp.eq.s32.totalorder %s31, 3
      %p168 = por %p166, %p167
      %p169 = scmp.ne.s32.totalorder %s160, %s161
      %p170 = scmp.eq.s32.totalorder %s31, 0
      %p171 = por %p169, %p170
      %p172 = scmp.ne.s32.totalorder %s160, %s161
      %p173 = scmp.eq.s32.totalorder %s32, 3
      %p174 = por %p172, %p173
      %p176 = scmp.ne.s32.totalorder %s161, %s175
      %p177 = scmp.eq.s32.totalorder %s32, 0
      %p178 = por %p176, %p177
      %s180 = sadd.s32 %s179, 1
      %p183 = scmp.eq.s32.totalorder %s26, 3
      %p184 = scmp.ne.s32.totalorder %s179, %s181
      %p185 = scmp.eq.s32.totalorder %s26, 0
      %p186 = por %p184, %p185
      %p187 = scmp.ne.s32.totalorder %s179, %s181
      %p188 = scmp.eq.s32.totalorder %s31, 3
      %p189 = por %p187, %p188
      %p190 = scmp.ne.s32.totalorder %s181, %s182
      %p191 = scmp.eq.s32.totalorder %s31, 0
      %p192 = por %p190, %p191
      %p193 = scmp.ne.s32.totalorder %s181, %s182
      %p194 = scmp.eq.s32.totalorder %s32, 3
      %p195 = por %p193, %p194
      %p197 = scmp.ne.s32.totalorder %s182, %s196
      %p198 = scmp.eq.s32.totalorder %s32, 0
      %p199 = por %p197, %p198
      %s201 = sadd.s32 %s200, 1
      %p204 = scmp.eq.s32.totalorder %s26, 3
      %p205 = scmp.ne.s32.totalorder %s200, %s202
      %p206 = scmp.eq.s32.totalorder %s26, 0
      %p207 = por %p205, %p206
      %p208 = scmp.ne.s32.totalorder %s200, %s202
      %p209 = scmp.eq.s32.totalorder %s31, 3
      %p210 = por %p208, %p209
      %p211 = scmp.ne.s32.totalorder %s202, %s203
      %p212 = scmp.eq.s32.totalorder %s31, 0
      %p213 = por %p211, %p212
      %p214 = scmp.ne.s32.totalorder %s202, %s203
      %p215 = scmp.eq.s32.totalorder %s32, 3
      %p216 = por %p214, %p215
      %p218 = scmp.ne.s32.totalorder %s203, %s217
      %p219 = scmp.eq.s32.totalorder %s32, 0
      %p220 = por %p218, %p219
      %s222 = sadd.s32 %s221, 1
      %p225 = scmp.eq.s32.totalorder %s26, 3
      %p226 = scmp.ne.s32.totalorder %s221, %s223
      %p227 = scmp.eq.s32.totalorder %s26, 0
      %p228 = por %p226, %p227
      %p229 = scmp.ne.s32.totalorder %s221, %s223
      %p230 = scmp.eq.s32.totalorder %s31, 3
      %p231 = por %p229, %p230
      %p232 = scmp.ne.s32.totalorder %s223, %s224
      %p233 = scmp.eq.s32.totalorder %s31, 0
      %p234 = por %p232, %p233
      %p235 = scmp.ne.s32.totalorder %s223, %s224
      %p236 = scmp.eq.s32.totalorder %s32, 3
      %p237 = por %p235, %p236
      %p239 = scmp.ne.s32.totalorder %s224, %s238
      %p240 = scmp.eq.s32.totalorder %s32, 0
      %p241 = por %p239, %p240
      %s243 = sadd.s32 %s242, 1
      %p246 = scmp.eq.s32.totalorder %s26, 3
      %p247 = scmp.ne.s32.totalorder %s242, %s244
      %p248 = scmp.eq.s32.totalorder %s26, 0
      %p249 = por %p247, %p248
      %p250 = scmp.ne.s32.totalorder %s242, %s244
      %p251 = scmp.eq.s32.totalorder %s31, 3
      %p252 = por %p250, %p251
      %p253 = scmp.ne.s32.totalorder %s244, %s245
      %p254 = scmp.eq.s32.totalorder %s31, 0
      %p255 = por %p253, %p254
      %p256 = scmp.ne.s32.totalorder %s244, %s245
      %p257 = scmp.eq.s32.totalorder %s32, 3
      %p258 = por %p256, %p257
      %p260 = scmp.ne.s32.totalorder %s245, %s259
      %p261 = scmp.eq.s32.totalorder %s32, 0
      %p262 = por %p260, %p261
      %s263 = ssub.s32 %s33, %s45
      %s264 = ssub.s32 %s34, %s41
      %s265 = sor.u32 %s263, %s264
      %p266 = scmp.eq.s32.totalorder %s265, 0
      %s268 = sadd.s32 %s267, 1
      %s269 = scalar_select %p266, %s267, %s268
      %p272 = pneg %p266
      %p273 = scmp.eq.s32.totalorder %s26, 3
      %p274 = por %p272, %p273
      %p275 = scmp.ne.s32.totalorder %s267, %s270
      %p276 = scmp.eq.s32.totalorder %s26, 0
      %p277 = por %p275, %p276
      %p278 = scmp.ne.s32.totalorder %s267, %s270
      %p279 = scmp.eq.s32.totalorder %s31, 3
      %p280 = por %p278, %p279
      %p281 = scmp.ne.s32.totalorder %s270, %s271
      %p282 = scmp.eq.s32.totalorder %s31, 0
      %p283 = por %p281, %p282
      %p284 = scmp.ne.s32.totalorder %s270, %s271
      %p285 = scmp.eq.s32.totalorder %s32, 3
      %p286 = por %p284, %p285
      %p288 = scmp.ne.s32.totalorder %s271, %s287
      %p289 = scmp.eq.s32.totalorder %s32, 0
      %p290 = por %p288, %p289
      %p291 = scmp.le.s32.totalorder 1, %s26
      %p292 = scmp.lt.s32.totalorder %s26, 5
      %p293 = pnand %p291, %p292
      %p294 = pneg %p293
      // Predicated region
      $region9: #{tpu_custom_call.1} parent=5 // pred_check
        _
      $region10: #{tpu_custom_call.1} parent=5 // pred_check_branch
        %296 = sbr.rel (%p293) target = $region12
      $region11: #{tpu_custom_call.1} parent=5 // pred_region
        %s297 = ssub.s32 %s26, 1
        // Predicated region
        $region13: #{tpu_custom_call.1} parent=11 // pred_check
          %p298 = pneg %p87
        $region14: #{tpu_custom_call.1} parent=11 // pred_check_branch
          %300 = sbr.rel (%p298) target = $region16
        $region15: #{tpu_custom_call.1} parent=11 // pred_region
          %302 = vsyncadd [#allocation7], 0
          %s304 = sshll.u32 %s1, 4
          %s305 = int_to_ptr.hbm [resolvable:$true] %s304
          %s306 = sshll.u32 [#allocation6], 4
          %s307 = int_to_ptr.vmem [resolvable:$true] %s306
          %309 = dma.hbm_to_vmem [thread:$0]  %s305, 16, %s307, [#allocation7]
        $region16: #{tpu_custom_call.1} parent=11 // pred_fallthru
          _
        // Predicated region
        $region17: #{tpu_custom_call.1} parent=11 // pred_check
          %p310 = pneg %p108
        $region18: #{tpu_custom_call.1} parent=11 // pred_check_branch
          %312 = sbr.rel (%p310) target = $region20
        $region19: #{tpu_custom_call.1} parent=11 // pred_region
          _
        $region20: #{tpu_custom_call.1} parent=11 // pred_fallthru
          _
        // Predicated region
        $region21: #{tpu_custom_call.1} parent=11 // pred_check
          %p313 = pneg %p129
        $region22: #{tpu_custom_call.1} parent=11 // pred_check_branch
          %315 = sbr.rel (%p313) target = $region24
        $region23: #{tpu_custom_call.1} parent=11 // pred_region
          %317 = vsyncadd [#allocation7], 0
          %s318 = sshll.u32 %s3, 4
          %s319 = int_to_ptr.hbm [resolvable:$true] %s318
          %s320 = sshll.u32 [#allocation8], 4
          %s321 = int_to_ptr.vmem [resolvable:$true] %s320
          %326 = dma.hbm_to_vmem [thread:$0]  %s319, 1024, %s321, [#allocation7], 64, 64, 4
        $region24: #{tpu_custom_call.1} parent=11 // pred_fallthru
          _
        // Predicated region
        $region25: #{tpu_custom_call.1} parent=11 // pred_check
          %p327 = pneg %p150
        $region26: #{tpu_custom_call.1} parent=11 // pred_check_branch
          %329 = sbr.rel (%p327) target = $region28
        $region27: #{tpu_custom_call.1} parent=11 // pred_region
          %331 = vsyncadd [#allocation10], 0
          %s332 = sshll.u32 %s4, 4
          %s333 = int_to_ptr.hbm [resolvable:$true] %s332
          %s334 = sshll.u32 [#allocation9], 4
          %s335 = int_to_ptr.vmem [resolvable:$true] %s334
          %340 = dma.hbm_to_vmem [thread:$0]  %s333, 2048, %s335, [#allocation10], 128, 128, 8
        $region28: #{tpu_custom_call.1} parent=11 // pred_fallthru
          _
        // Predicated region
        $region29: #{tpu_custom_call.1} parent=11 // pred_check
          %p341 = pneg %p171
        $region30: #{tpu_custom_call.1} parent=11 // pred_check_branch
          %343 = sbr.rel (%p341) target = $region32
        $region31: #{tpu_custom_call.1} parent=11 // pred_region
          _
        $region32: #{tpu_custom_call.1} parent=11 // pred_fallthru
          _
        // Predicated region
        $region33: #{tpu_custom_call.1} parent=11 // pred_check
          %p344 = pneg %p192
        $region34: #{tpu_custom_call.1} parent=11 // pred_check_branch
          %346 = sbr.rel (%p344) target = $region36
        $region35: #{tpu_custom_call.1} parent=11 // pred_region
          %348 = vsyncadd [#allocation10], 0
          %s349 = sshll.u32 %s6, 4
          %s350 = int_to_ptr.hbm [resolvable:$true] %s349
          %s351 = sshll.u32 [#allocation11], 4
          %s352 = int_to_ptr.vmem [resolvable:$true] %s351
          %357 = dma.hbm_to_vmem [thread:$0]  %s350, 1024, %s352, [#allocation10], 128, 128, 8
        $region36: #{tpu_custom_call.1} parent=11 // pred_fallthru
          _
        // Predicated region
        $region37: #{tpu_custom_call.1} parent=11 // pred_check
          %p358 = pneg %p213
        $region38: #{tpu_custom_call.1} parent=11 // pred_check_branch
          %360 = sbr.rel (%p358) target = $region40
        $region39: #{tpu_custom_call.1} parent=11 // pred_region
          %362 = vsyncadd [#allocation5], 0
          %s364 = sshll.u32 %s7, 4
          %s365 = int_to_ptr.vmem [resolvable:$true] %s364
          %367 = dma.vmem_to_smem %s365, 16, [#allocation12], [#allocation5]
        $region40: #{tpu_custom_call.1} parent=11 // pred_fallthru
          _
        // Predicated region
        $region41: #{tpu_custom_call.1} parent=11 // pred_check
          %p368 = pneg %p234
        $region42: #{tpu_custom_call.1} parent=11 // pred_check_branch
          %370 = sbr.rel (%p368) target = $region44
        $region43: #{tpu_custom_call.1} parent=11 // pred_region
          %372 = vsyncadd [#allocation14], 0
          %s373 = sshll.u32 %s8, 4
          %s374 = int_to_ptr.hbm [resolvable:$true] %s373
          %s375 = sshll.u32 [#allocation13], 4
          %s376 = int_to_ptr.vmem [resolvable:$true] %s375
          %381 = dma.hbm_to_vmem [thread:$0]  %s374, 1024, %s376, [#allocation14], 64, 64, 4
        $region44: #{tpu_custom_call.1} parent=11 // pred_fallthru
          _
        // Predicated region
        $region45: #{tpu_custom_call.1} parent=11 // pred_check
          %p382 = pneg %p255
        $region46: #{tpu_custom_call.1} parent=11 // pred_check_branch
          %384 = sbr.rel (%p382) target = $region48
        $region47: #{tpu_custom_call.1} parent=11 // pred_region
          _
        $region48: #{tpu_custom_call.1} parent=11 // pred_fallthru
          _
      $region12: #{tpu_custom_call.1} parent=5 // pred_fallthru
        _
      %p385 = scmp.lt.s32.totalorder %s26, 4
      // Predicated region
      $region49: #{tpu_custom_call.1} parent=5 // pred_check
        %p386 = pneg %p385
      $region50: #{tpu_custom_call.1} parent=5 // pred_check_branch
        %388 = sbr.rel (%p386) target = $region52
      $region51: #{tpu_custom_call.1} parent=5 // pred_region
        // Predicated region
        $region53: #{tpu_custom_call.1} parent=51 // pred_check
          %p389 = pneg %p60
        $region54: #{tpu_custom_call.1} parent=51 // pred_check_branch
          %391 = sbr.rel (%p389) target = $region56
        $region55: #{tpu_custom_call.1} parent=51 // pred_region
          #allocation17 [shape = 'u32[6]{0}', space=smem, size = 0x18, scoped, tag = 'DMA stride descriptor']
          %s392 = sand.u32 %s50, 1
          %s393 = scalar_lea.sflag [#allocation3], %s392
          %s394 = sand.u32 %s50, 1
          %s395 = smul.addr %s394, 256
          %s396 = scalar_lea.vmem [#allocation2], %s395
          %s397 = smul.u32 4, %s34
          %399 = vsyncadd %s393, 0
          %s400 = smul.addr %s33, 64
          %s401 = sadd.s32 %s397, %s400
          %s402 = smul.addr %s401, 8
          %s403 = scalar_lea.hbm %s0, %s402
          %s405 = sshll.u32 1, 14
          %s406 = sxor.u32 4294967295, %s405
          %s408 = sld [smem:[#allocation0]]
          %s409 = sadd.s32 2, %s408
          %s411 = sshll.u32 7, 26
          %s412 = sxor.u32 4294967295, %s411
          %s413 = sand.u32 0, %s412
          %s414 = sshll.u32 %s409, 26
          %s415 = sor.u32 %s413, %s414
          %s416 = sshll.u32 %s403, 4
          %s417 = int_to_ptr.hbm [resolvable:$true] %s416
          %s418 = sshll.u32 %s396, 4
          %s419 = int_to_ptr.vmem [resolvable:$true] %s418
          %425 = sst [smem:[#allocation17]] 1024
          %s426 = scalar_lea.smem [#allocation17], 1
          %427 = sst [smem:[%s426]] 512
          %s428 = scalar_lea.smem [#allocation17], 2
          %429 = sst [smem:[%s428]] 4
          %s430 = scalar_lea.smem [#allocation17], 3
          %431 = sst [smem:[%s430]] 128
          %s432 = scalar_lea.smem [#allocation17], 4
          %433 = sst [smem:[%s432]] 128
          %s434 = scalar_lea.smem [#allocation17], 5
          %435 = sst [smem:[%s434]] 8
          %437 = dma.general %s417, 4096, %s419, %s393, [#allocation16], [#allocation17], %s415, 0
        $region56: #{tpu_custom_call.1} parent=51 // pred_fallthru
          _
      $region52: #{tpu_custom_call.1} parent=5 // pred_fallthru
        _
      %p438 = scmp.le.s32.totalorder 1, %s26
      %p439 = scmp.lt.s32.totalorder %s26, 5
      %p440 = pnand %p438, %p439
      %p441 = pneg %p440
      // Predicated region
      $region57: #{tpu_custom_call.1} parent=5 // pred_check
        _
      $region58: #{tpu_custom_call.1} parent=5 // pred_check_branch
        %443 = sbr.rel (%p440) target = $region60
      $region59: #{tpu_custom_call.1} parent=5 // pred_region
        %s444 = ssub.s32 %s26, 1
        %s445 = sand.u32 %s53, 1
        %s446 = scalar_lea.sflag [#allocation3], %s445
        %s447 = sand.u32 %s53, 1
        %s448 = smul.addr %s447, 256
        %s449 = scalar_lea.vmem [#allocation2], %s448
        // Predicated region
        $region61: #{tpu_custom_call.1} parent=59 // pred_check
          %p450 = pneg %p66
        $region62: #{tpu_custom_call.1} parent=59 // pred_check_branch
          %452 = sbr.rel (%p450) target = $region64
        $region63: #{tpu_custom_call.1} parent=59 // pred_region
          %454 = dma.done %s446, 4096
        $region64: #{tpu_custom_call.1} parent=59 // pred_fallthru
          _
        // Predicated region
        $region65: #{tpu_custom_call.1} parent=59 // pred_check
          %p455 = pneg %p87
        $region66: #{tpu_custom_call.1} parent=59 // pred_check_branch
          %457 = sbr.rel (%p455) target = $region68
        $region67: #{tpu_custom_call.1} parent=59 // pred_region
          %459 = dma.done [#allocation7], 16
        $region68: #{tpu_custom_call.1} parent=59 // pred_fallthru
          _
        // Predicated region
        $region69: #{tpu_custom_call.1} parent=59 // pred_check
          %p460 = pneg %p129
        $region70: #{tpu_custom_call.1} parent=59 // pred_check_branch
          %462 = sbr.rel (%p460) target = $region72
        $region71: #{tpu_custom_call.1} parent=59 // pred_region
          %464 = dma.done [#allocation7], 1024
        $region72: #{tpu_custom_call.1} parent=59 // pred_fallthru
          _
        // Predicated region
        $region73: #{tpu_custom_call.1} parent=59 // pred_check
          %p465 = pneg %p150
        $region74: #{tpu_custom_call.1} parent=59 // pred_check_branch
          %467 = sbr.rel (%p465) target = $region76
        $region75: #{tpu_custom_call.1} parent=59 // pred_region
          %469 = dma.done [#allocation10], 2048
        $region76: #{tpu_custom_call.1} parent=59 // pred_fallthru
          _
        // Predicated region
        $region77: #{tpu_custom_call.1} parent=59 // pred_check
          %p470 = pneg %p192
        $region78: #{tpu_custom_call.1} parent=59 // pred_check_branch
          %472 = sbr.rel (%p470) target = $region80
        $region79: #{tpu_custom_call.1} parent=59 // pred_region
          %474 = dma.done [#allocation10], 1024
        $region80: #{tpu_custom_call.1} parent=59 // pred_fallthru
          _
        // Predicated region
        $region81: #{tpu_custom_call.1} parent=59 // pred_check
          %p475 = pneg %p213
        $region82: #{tpu_custom_call.1} parent=59 // pred_check_branch
          %477 = sbr.rel (%p475) target = $region84
        $region83: #{tpu_custom_call.1} parent=59 // pred_region
          %479 = dma.done [#allocation5], 16
        $region84: #{tpu_custom_call.1} parent=59 // pred_fallthru
          _
        // Predicated region
        $region85: #{tpu_custom_call.1} parent=59 // pred_check
          %p480 = pneg %p234
        $region86: #{tpu_custom_call.1} parent=59 // pred_check_branch
          %482 = sbr.rel (%p480) target = $region88
        $region87: #{tpu_custom_call.1} parent=59 // pred_region
          %484 = dma.done [#allocation14], 1024
        $region88: #{tpu_custom_call.1} parent=59 // pred_fallthru
          _
        %485 = sfence
        %s486 = sand.u32 %s53, 1
        %s487 = scalar_lea.sflag [#allocation3], %s486
        %s488 = sand.u32 %s53, 1
        %s489 = smul.addr %s488, 256
        %s490 = scalar_lea.vmem [#allocation2], %s489
        %p491 = pneg %p66
        %p492 = pneg %p63
        %p493 = pneg %p87
        %p494 = pneg %p84
        %p495 = pneg %p108
        %p496 = pneg %p105
        %p497 = pneg %p129
        %p498 = pneg %p126
        %p499 = pneg %p150
        %p500 = pneg %p147
        %p501 = pneg %p171
        %p502 = pneg %p168
        %p503 = pneg %p192
        %p504 = pneg %p189
        %p505 = pneg %p213
        %p506 = pneg %p210
        %p507 = pneg %p234
        %p508 = pneg %p231
        %p509 = pneg %p255
        %p510 = pneg %p252
        %p511 = pneg %p283
        %p512 = pneg %p280
        %s513 = sand.u32 %s270, 1
        %s514 = scalar_lea.sflag [#allocation4], %s513
        %s515 = sand.u32 %s270, 1
        %s516 = smul.addr %s515, 256
        %s517 = scalar_lea.vmem [#allocation15], %s516
        %s518 = smul.u32 4, %s36
        %s519 = smul.u32 4, %s36
        %v520 = vld [vmem:[%s449] sm:$0xff]
        %v521 = vld [vmem:[%s449 + $0x8] sm:$0xff]
        %v522 = vld [vmem:[%s449 + $0x10] sm:$0xff]
        %v523 = vld [vmem:[%s449 + $0x18] sm:$0xff]
        %v524 = vld [vmem:[%s449 + $0x20] sm:$0xff]
        %v525 = vld [vmem:[%s449 + $0x28] sm:$0xff]
        %v526 = vld [vmem:[%s449 + $0x30] sm:$0xff]
        %v527 = vld [vmem:[%s449 + $0x38] sm:$0xff]
        %v528 = vld [vmem:[%s449 + $0x40] sm:$0xff]
        %v529 = vld [vmem:[%s449 + $0x48] sm:$0xff]
        %v530 = vld [vmem:[%s449 + $0x50] sm:$0xff]
        %v531 = vld [vmem:[%s449 + $0x58] sm:$0xff]
        %v532 = vld [vmem:[%s449 + $0x60] sm:$0xff]
        %v533 = vld [vmem:[%s449 + $0x68] sm:$0xff]
        %v534 = vld [vmem:[%s449 + $0x70] sm:$0xff]
        %v535 = vld [vmem:[%s449 + $0x78] sm:$0xff]
        %v536 = vld [vmem:[%s449 + $0x80] sm:$0xff]
        %v537 = vld [vmem:[%s449 + $0x88] sm:$0xff]
        %v538 = vld [vmem:[%s449 + $0x90] sm:$0xff]
        %v539 = vld [vmem:[%s449 + $0x98] sm:$0xff]
        %v540 = vld [vmem:[%s449 + $0xa0] sm:$0xff]
        %v541 = vld [vmem:[%s449 + $0xa8] sm:$0xff]
        %v542 = vld [vmem:[%s449 + $0xb0] sm:$0xff]
        %v543 = vld [vmem:[%s449 + $0xb8] sm:$0xff]
        %v544 = vld [vmem:[%s449 + $0xc0] sm:$0xff]
        %v545 = vld [vmem:[%s449 + $0xc8] sm:$0xff]
        %v546 = vld [vmem:[%s449 + $0xd0] sm:$0xff]
        %v547 = vld [vmem:[%s449 + $0xd8] sm:$0xff]
        %v548 = vld [vmem:[%s449 + $0xe0] sm:$0xff]
        %v549 = vld [vmem:[%s449 + $0xe8] sm:$0xff]
        %v550 = vld [vmem:[%s449 + $0xf0] sm:$0xff]
        %v551 = vld [vmem:[%s449 + $0xf8] sm:$0xff]
        %v552 = vld [vmem:[#allocation8] sm:$0xf]
        %v553 = vld [vmem:[#allocation8 + $0x4] sm:$0xf]
        %v554 = vld [vmem:[#allocation8 + $0x8] sm:$0xf]
        %v555 = vld [vmem:[#allocation8 + $0xc] sm:$0xf]
        %v556 = vld [vmem:[#allocation8 + $0x10] sm:$0xf]
        %v557 = vld [vmem:[#allocation8 + $0x14] sm:$0xf]
        %v558 = vld [vmem:[#allocation8 + $0x18] sm:$0xf]
        %v559 = vld [vmem:[#allocation8 + $0x1c] sm:$0xf]
        %v560 = vld [vmem:[#allocation8 + $0x20] sm:$0xf]
        %v561 = vld [vmem:[#allocation8 + $0x24] sm:$0xf]
        %v562 = vld [vmem:[#allocation8 + $0x28] sm:$0xf]
        %v563 = vld [vmem:[#allocation8 + $0x2c] sm:$0xf]
        %v564 = vld [vmem:[#allocation8 + $0x30] sm:$0xf]
        %v565 = vld [vmem:[#allocation8 + $0x34] sm:$0xf]
        %v566 = vld [vmem:[#allocation8 + $0x38] sm:$0xf]
        %v567 = vld [vmem:[#allocation8 + $0x3c] sm:$0xf]
        %v568 = vpack.c.bf16 %v521, %v520
        %v569 = vpack.c.bf16 %v523, %v522
        %v570 = vpack.c.bf16 %v525, %v524
        %v571 = vpack.c.bf16 %v527, %v526
        %v572 = vpack.c.bf16 %v529, %v528
        %v573 = vpack.c.bf16 %v531, %v530
        %v574 = vpack.c.bf16 %v533, %v532
        %v575 = vpack.c.bf16 %v535, %v534
        %v576 = vpack.c.bf16 %v537, %v536
        %v577 = vpack.c.bf16 %v539, %v538
        %v578 = vpack.c.bf16 %v541, %v540
        %v579 = vpack.c.bf16 %v543, %v542
        %v580 = vpack.c.bf16 %v545, %v544
        %v581 = vpack.c.bf16 %v547, %v546
        %v582 = vpack.c.bf16 %v549, %v548
        %v583 = vpack.c.bf16 %v551, %v550
        %v600 = vunpack.c.l.b16 %v552
        %v601 = vunpack.c.l.b16 %v553
        %v602 = vunpack.c.l.b16 %v554
        %v603 = vunpack.c.l.b16 %v555
        %v604 = vunpack.c.l.b16 %v556
        %v605 = vunpack.c.l.b16 %v557
        %v606 = vunpack.c.l.b16 %v558
        %v607 = vunpack.c.l.b16 %v559
        %v608 = vunpack.c.l.b16 %v560
        %v609 = vunpack.c.l.b16 %v561
        %v610 = vunpack.c.l.b16 %v562
        %v611 = vunpack.c.l.b16 %v563
        %v612 = vunpack.c.l.b16 %v564
        %v613 = vunpack.c.l.b16 %v565
        %v614 = vunpack.c.l.b16 %v566
        %v615 = vunpack.c.l.b16 %v567
        %v616 = vpack.c.b16 %v601, %v600
        %v617 = vpack.c.b16 %v603, %v602
        %v618 = vpack.c.b16 %v605, %v604
        %v619 = vpack.c.b16 %v607, %v606
        %v620 = vpack.c.b16 %v609, %v608
        %v621 = vpack.c.b16 %v611, %v610
        %v622 = vpack.c.b16 %v613, %v612
        %v623 = vpack.c.b16 %v615, %v614
        %632 = vmatpush.bf16.msra.mxu0 %v623
        %633 = vmatpush.bf16.msra.mxu0 %v622
        %634 = vmatpush.bf16.msra.mxu0 %v621
        %635 = vmatpush.bf16.msra.mxu0 %v620
        %636 = vmatpush.bf16.msra.mxu0 %v619
        %637 = vmatpush.bf16.msra.mxu0 %v618
        %638 = vmatpush.bf16.msra.mxu0 %v617
        %639 = vmatpush.bf16.msra.mxu0 %v616
        %640 = vmatmul.bf16.gmra.mxu0 %v568
        %v641 = vpop.f32.mrf.mxu0
        %v642 = vadd.f32 0.0, %v641
        %v643 = vpop.f32.mrf.mxu0
        %v644 = vadd.f32 0.0, %v643
        %645 = vmatmul.bf16.gmra.mxu0 %v569
        %v646 = vpop.f32.mrf.mxu0
        %v647 = vadd.f32 0.0, %v646
        %v648 = vpop.f32.mrf.mxu0
        %v649 = vadd.f32 0.0, %v648
        %650 = vmatmul.bf16.gmra.mxu0 %v570
        %v651 = vpop.f32.mrf.mxu0
        %v652 = vadd.f32 0.0, %v651
        %v653 = vpop.f32.mrf.mxu0
        %v654 = vadd.f32 0.0, %v653
        %655 = vmatmul.bf16.gmra.mxu0 %v571
        %v656 = vpop.f32.mrf.mxu0
        %v657 = vadd.f32 0.0, %v656
        %v658 = vpop.f32.mrf.mxu0
        %v659 = vadd.f32 0.0, %v658
        %660 = vmatmul.bf16.gmra.mxu0 %v572
        %v661 = vpop.f32.mrf.mxu0
        %v662 = vadd.f32 0.0, %v661
        %v663 = vpop.f32.mrf.mxu0
        %v664 = vadd.f32 0.0, %v663
        %665 = vmatmul.bf16.gmra.mxu0 %v573
        %v666 = vpop.f32.mrf.mxu0
        %v667 = vadd.f32 0.0, %v666
        %v668 = vpop.f32.mrf.mxu0
        %v669 = vadd.f32 0.0, %v668
        %670 = vmatmul.bf16.gmra.mxu0 %v574
        %v671 = vpop.f32.mrf.mxu0
        %v672 = vadd.f32 0.0, %v671
        %v673 = vpop.f32.mrf.mxu0
        %v674 = vadd.f32 0.0, %v673
        %675 = vmatmul.bf16.gmra.mxu0 %v575
        %v676 = vpop.f32.mrf.mxu0
        %v677 = vadd.f32 0.0, %v676
        %v678 = vpop.f32.mrf.mxu0
        %v679 = vadd.f32 0.0, %v678
        %680 = vmatmul.bf16.gmra.mxu0 %v576
        %v681 = vpop.f32.mrf.mxu0
        %v682 = vadd.f32 0.0, %v681
        %v683 = vpop.f32.mrf.mxu0
        %v684 = vadd.f32 0.0, %v683
        %685 = vmatmul.bf16.gmra.mxu0 %v577
        %v686 = vpop.f32.mrf.mxu0
        %v687 = vadd.f32 0.0, %v686
        %v688 = vpop.f32.mrf.mxu0
        %v689 = vadd.f32 0.0, %v688
        %690 = vmatmul.bf16.gmra.mxu0 %v578
        %v691 = vpop.f32.mrf.mxu0
        %v692 = vadd.f32 0.0, %v691
        %v693 = vpop.f32.mrf.mxu0
        %v694 = vadd.f32 0.0, %v693
        %695 = vmatmul.bf16.gmra.mxu0 %v579
        %v696 = vpop.f32.mrf.mxu0
        %v697 = vadd.f32 0.0, %v696
        %v698 = vpop.f32.mrf.mxu0
        %v699 = vadd.f32 0.0, %v698
        %700 = vmatmul.bf16.gmra.mxu0 %v580
        %v701 = vpop.f32.mrf.mxu0
        %v702 = vadd.f32 0.0, %v701
        %v703 = vpop.f32.mrf.mxu0
        %v704 = vadd.f32 0.0, %v703
        %705 = vmatmul.bf16.gmra.mxu0 %v581
        %v706 = vpop.f32.mrf.mxu0
        %v707 = vadd.f32 0.0, %v706
        %v708 = vpop.f32.mrf.mxu0
        %v709 = vadd.f32 0.0, %v708
        %710 = vmatmul.bf16.gmra.mxu0 %v582
        %v711 = vpop.f32.mrf.mxu0
        %v712 = vadd.f32 0.0, %v711
        %v713 = vpop.f32.mrf.mxu0
        %v714 = vadd.f32 0.0, %v713
        %715 = vmatmul.bf16.gmra.mxu0 %v583
        %v716 = vpop.f32.mrf.mxu0
        %v717 = vadd.f32 0.0, %v716
        %v718 = vpop.f32.mrf.mxu0
        %v719 = vadd.f32 0.0, %v718
        %720 = vdwg.mxu0
        %v721 = vsub.f32 %v520, %v642
        %v722 = vsub.f32 %v521, %v644
        %v723 = vsub.f32 %v522, %v647
        %v724 = vsub.f32 %v523, %v649
        %v725 = vsub.f32 %v524, %v652
        %v726 = vsub.f32 %v525, %v654
        %v727 = vsub.f32 %v526, %v657
        %v728 = vsub.f32 %v527, %v659
        %v729 = vsub.f32 %v528, %v662
        %v730 = vsub.f32 %v529, %v664
        %v731 = vsub.f32 %v530, %v667
        %v732 = vsub.f32 %v531, %v669
        %v733 = vsub.f32 %v532, %v672
        %v734 = vsub.f32 %v533, %v674
        %v735 = vsub.f32 %v534, %v677
        %v736 = vsub.f32 %v535, %v679
        %v737 = vsub.f32 %v536, %v682
        %v738 = vsub.f32 %v537, %v684
        %v739 = vsub.f32 %v538, %v687
        %v740 = vsub.f32 %v539, %v689
        %v741 = vsub.f32 %v540, %v692
        %v742 = vsub.f32 %v541, %v694
        %v743 = vsub.f32 %v542, %v697
        %v744 = vsub.f32 %v543, %v699
        %v745 = vsub.f32 %v544, %v702
        %v746 = vsub.f32 %v545, %v704
        %v747 = vsub.f32 %v546, %v707
        %v748 = vsub.f32 %v547, %v709
        %v749 = vsub.f32 %v548, %v712
        %v750 = vsub.f32 %v549, %v714
        %v751 = vsub.f32 %v550, %v717
        %v752 = vsub.f32 %v551, %v719
        %v753 = vmul.f32 %v721, %v721
        %v754 = vmul.f32 %v722, %v722
        %v755 = vmul.f32 %v723, %v723
        %v756 = vmul.f32 %v724, %v724
        %v757 = vmul.f32 %v725, %v725
        %v758 = vmul.f32 %v726, %v726
        %v759 = vmul.f32 %v727, %v727
        %v760 = vmul.f32 %v728, %v728
        %v761 = vmul.f32 %v729, %v729
        %v762 = vmul.f32 %v730, %v730
        %v763 = vmul.f32 %v731, %v731
        %v764 = vmul.f32 %v732, %v732
        %v765 = vmul.f32 %v733, %v733
        %v766 = vmul.f32 %v734, %v734
        %v767 = vmul.f32 %v735, %v735
        %v768 = vmul.f32 %v736, %v736
        %v769 = vmul.f32 %v737, %v737
        %v770 = vmul.f32 %v738, %v738
        %v771 = vmul.f32 %v739, %v739
        %v772 = vmul.f32 %v740, %v740
        %v773 = vmul.f32 %v741, %v741
        %v774 = vmul.f32 %v742, %v742
        %v775 = vmul.f32 %v743, %v743
        %v776 = vmul.f32 %v744, %v744
        %v777 = vmul.f32 %v745, %v745
        %v778 = vmul.f32 %v746, %v746
        %v779 = vmul.f32 %v747, %v747
        %v780 = vmul.f32 %v748, %v748
        %v781 = vmul.f32 %v749, %v749
        %v782 = vmul.f32 %v750, %v750
        %v783 = vmul.f32 %v751, %v751
        %v784 = vmul.f32 %v752, %v752
        %v785 = vpack.c.bf16 %v754, %v753
        %v786 = vpack.c.bf16 %v756, %v755
        %v787 = vpack.c.bf16 %v758, %v757
        %v788 = vpack.c.bf16 %v760, %v759
        %v789 = vpack.c.bf16 %v762, %v761
        %v790 = vpack.c.bf16 %v764, %v763
        %v791 = vpack.c.bf16 %v766, %v765
        %v792 = vpack.c.bf16 %v768, %v767
        %v793 = vpack.c.bf16 %v770, %v769
        %v794 = vpack.c.bf16 %v772, %v771
        %v795 = vpack.c.bf16 %v774, %v773
        %v796 = vpack.c.bf16 %v776, %v775
        %v797 = vpack.c.bf16 %v778, %v777
        %v798 = vpack.c.bf16 %v780, %v779
        %v799 = vpack.c.bf16 %v782, %v781
        %v800 = vpack.c.bf16 %v784, %v783
        %801 = vmatpush.bf16.msra.mxu0 %v623
        %802 = vmatpush.bf16.msra.mxu0 %v622
        %803 = vmatpush.bf16.msra.mxu0 %v621
        %804 = vmatpush.bf16.msra.mxu0 %v620
        %805 = vmatpush.bf16.msra.mxu0 %v619
        %806 = vmatpush.bf16.msra.mxu0 %v618
        %807 = vmatpush.bf16.msra.mxu0 %v617
        %808 = vmatpush.bf16.msra.mxu0 %v616
        %809 = vmatmul.bf16.gmra.mxu0 %v785
        %v810 = vpop.f32.mrf.mxu0
        %v811 = vadd.f32 1e-05, %v810
        %v812 = vpop.f32.mrf.mxu0
        %v813 = vadd.f32 1e-05, %v812
        %814 = vmatmul.bf16.gmra.mxu0 %v786
        %v815 = vpop.f32.mrf.mxu0
        %v816 = vadd.f32 1e-05, %v815
        %v817 = vpop.f32.mrf.mxu0
        %v818 = vadd.f32 1e-05, %v817
        %819 = vmatmul.bf16.gmra.mxu0 %v787
        %v820 = vpop.f32.mrf.mxu0
        %v821 = vadd.f32 1e-05, %v820
        %v822 = vpop.f32.mrf.mxu0
        %v823 = vadd.f32 1e-05, %v822
        %824 = vmatmul.bf16.gmra.mxu0 %v788
        %v825 = vpop.f32.mrf.mxu0
        %v826 = vadd.f32 1e-05, %v825
        %v827 = vpop.f32.mrf.mxu0
        %v828 = vadd.f32 1e-05, %v827
        %829 = vmatmul.bf16.gmra.mxu0 %v789
        %v830 = vpop.f32.mrf.mxu0
        %v831 = vadd.f32 1e-05, %v830
        %v832 = vpop.f32.mrf.mxu0
        %v833 = vadd.f32 1e-05, %v832
        %834 = vmatmul.bf16.gmra.mxu0 %v790
        %v835 = vpop.f32.mrf.mxu0
        %v836 = vadd.f32 1e-05, %v835
        %v837 = vpop.f32.mrf.mxu0
        %v838 = vadd.f32 1e-05, %v837
        %839 = vmatmul.bf16.gmra.mxu0 %v791
        %v840 = vpop.f32.mrf.mxu0
        %v841 = vadd.f32 1e-05, %v840
        %v842 = vpop.f32.mrf.mxu0
        %v843 = vadd.f32 1e-05, %v842
        %844 = vmatmul.bf16.gmra.mxu0 %v792
        %v845 = vpop.f32.mrf.mxu0
        %v846 = vadd.f32 1e-05, %v845
        %v847 = vpop.f32.mrf.mxu0
        %v848 = vadd.f32 1e-05, %v847
        %849 = vmatmul.bf16.gmra.mxu0 %v793
        %v850 = vpop.f32.mrf.mxu0
        %v851 = vadd.f32 1e-05, %v850
        %v852 = vpop.f32.mrf.mxu0
        %v853 = vadd.f32 1e-05, %v852
        %854 = vmatmul.bf16.gmra.mxu0 %v794
        %v855 = vpop.f32.mrf.mxu0
        %v856 = vadd.f32 1e-05, %v855
        %v857 = vpop.f32.mrf.mxu0
        %v858 = vadd.f32 1e-05, %v857
        %859 = vmatmul.bf16.gmra.mxu0 %v795
        %v860 = vpop.f32.mrf.mxu0
        %v861 = vadd.f32 1e-05, %v860
        %v862 = vpop.f32.mrf.mxu0
        %v863 = vadd.f32 1e-05, %v862
        %864 = vmatmul.bf16.gmra.mxu0 %v796
        %v865 = vpop.f32.mrf.mxu0
        %v866 = vadd.f32 1e-05, %v865
        %v867 = vpop.f32.mrf.mxu0
        %v868 = vadd.f32 1e-05, %v867
        %869 = vmatmul.bf16.gmra.mxu0 %v797
        %v870 = vpop.f32.mrf.mxu0
        %v871 = vadd.f32 1e-05, %v870
        %v872 = vpop.f32.mrf.mxu0
        %v873 = vadd.f32 1e-05, %v872
        %874 = vmatmul.bf16.gmra.mxu0 %v798
        %v875 = vpop.f32.mrf.mxu0
        %v876 = vadd.f32 1e-05, %v875
        %v877 = vpop.f32.mrf.mxu0
        %v878 = vadd.f32 1e-05, %v877
        %879 = vmatmul.bf16.gmra.mxu0 %v799
        %v880 = vpop.f32.mrf.mxu0
        %v881 = vadd.f32 1e-05, %v880
        %v882 = vpop.f32.mrf.mxu0
        %v883 = vadd.f32 1e-05, %v882
        %884 = vmatmul.bf16.gmra.mxu0 %v800
        %v885 = vpop.f32.mrf.mxu0
        %v886 = vadd.f32 1e-05, %v885
        %v887 = vpop.f32.mrf.mxu0
        %v888 = vadd.f32 1e-05, %v887
        %889 = vdwg.mxu0
        %v890 = vrsqrt.pop %v811
        %v891 = vmul.f32 %v890, %v811
        %v892 = vmul.f32 %v891, %v890
        %v893 = vmul.f32 0.5, %v892
        %v894 = vsub.f32 1.5, %v893
        %v895 = vmul.f32 %v890, %v894
        %vm896 = vweird.f32 %v811
        %vm897 = vweird.f32 %v890
        %vm898 = vmor %vm896, %vm897
        %v899 = vsel %vm898, %v890, %v895
        %v900 = vrsqrt.pop %v813
        %v901 = vmul.f32 %v900, %v813
        %v902 = vmul.f32 %v901, %v900
        %v903 = vmul.f32 0.5, %v902
        %v904 = vsub.f32 1.5, %v903
        %v905 = vmul.f32 %v900, %v904
        %vm906 = vweird.f32 %v813
        %vm907 = vweird.f32 %v900
        %vm908 = vmor %vm906, %vm907
        %v909 = vsel %vm908, %v900, %v905
        %v910 = vrsqrt.pop %v816
        %v911 = vmul.f32 %v910, %v816
        %v912 = vmul.f32 %v911, %v910
        %v913 = vmul.f32 0.5, %v912
        %v914 = vsub.f32 1.5, %v913
        %v915 = vmul.f32 %v910, %v914
        %vm916 = vweird.f32 %v816
        %vm917 = vweird.f32 %v910
        %vm918 = vmor %vm916, %vm917
        %v919 = vsel %vm918, %v910, %v915
        %v920 = vrsqrt.pop %v818
        %v921 = vmul.f32 %v920, %v818
        %v922 = vmul.f32 %v921, %v920
        %v923 = vmul.f32 0.5, %v922
        %v924 = vsub.f32 1.5, %v923
        %v925 = vmul.f32 %v920, %v924
        %vm926 = vweird.f32 %v818
        %vm927 = vweird.f32 %v920
        %vm928 = vmor %vm926, %vm927
        %v929 = vsel %vm928, %v920, %v925
        %v930 = vrsqrt.pop %v821
        %v931 = vmul.f32 %v930, %v821
        %v932 = vmul.f32 %v931, %v930
        %v933 = vmul.f32 0.5, %v932
        %v934 = vsub.f32 1.5, %v933
        %v935 = vmul.f32 %v930, %v934
        %vm936 = vweird.f32 %v821
        %vm937 = vweird.f32 %v930
        %vm938 = vmor %vm936, %vm937
        %v939 = vsel %vm938, %v930, %v935
        %v940 = vrsqrt.pop %v823
        %v941 = vmul.f32 %v940, %v823
        %v942 = vmul.f32 %v941, %v940
        %v943 = vmul.f32 0.5, %v942
        %v944 = vsub.f32 1.5, %v943
        %v945 = vmul.f32 %v940, %v944
        %vm946 = vweird.f32 %v823
        %vm947 = vweird.f32 %v940
        %vm948 = vmor %vm946, %vm947
        %v949 = vsel %vm948, %v940, %v945
        %v950 = vrsqrt.pop %v826
        %v951 = vmul.f32 %v950, %v826
        %v952 = vmul.f32 %v951, %v950
        %v953 = vmul.f32 0.5, %v952
        %v954 = vsub.f32 1.5, %v953
        %v955 = vmul.f32 %v950, %v954
        %vm956 = vweird.f32 %v826
        %vm957 = vweird.f32 %v950
        %vm958 = vmor %vm956, %vm957
        %v959 = vsel %vm958, %v950, %v955
        %v960 = vrsqrt.pop %v828
        %v961 = vmul.f32 %v960, %v828
        %v962 = vmul.f32 %v961, %v960
        %v963 = vmul.f32 0.5, %v962
        %v964 = vsub.f32 1.5, %v963
        %v965 = vmul.f32 %v960, %v964
        %vm966 = vweird.f32 %v828
        %vm967 = vweird.f32 %v960
        %vm968 = vmor %vm966, %vm967
        %v969 = vsel %vm968, %v960, %v965
        %v970 = vrsqrt.pop %v831
        %v971 = vmul.f32 %v970, %v831
        %v972 = vmul.f32 %v971, %v970
        %v973 = vmul.f32 0.5, %v972
        %v974 = vsub.f32 1.5, %v973
        %v975 = vmul.f32 %v970, %v974
        %vm976 = vweird.f32 %v831
        %vm977 = vweird.f32 %v970
        %vm978 = vmor %vm976, %vm977
        %v979 = vsel %vm978, %v970, %v975
        %v980 = vrsqrt.pop %v833
        %v981 = vmul.f32 %v980, %v833
        %v982 = vmul.f32 %v981, %v980
        %v983 = vmul.f32 0.5, %v982
        %v984 = vsub.f32 1.5, %v983
        %v985 = vmul.f32 %v980, %v984
        %vm986 = vweird.f32 %v833
        %vm987 = vweird.f32 %v980
        %vm988 = vmor %vm986, %vm987
        %v989 = vsel %vm988, %v980, %v985
        %v990 = vrsqrt.pop %v836
        %v991 = vmul.f32 %v990, %v836
        %v992 = vmul.f32 %v991, %v990
        %v993 = vmul.f32 0.5, %v992
        %v994 = vsub.f32 1.5, %v993
        %v995 = vmul.f32 %v990, %v994
        %vm996 = vweird.f32 %v836
        %vm997 = vweird.f32 %v990
        %vm998 = vmor %vm996, %vm997
        %v999 = vsel %vm998, %v990, %v995
        %v1000 = vrsqrt.pop %v838
        %v1001 = vmul.f32 %v1000, %v838
        %v1002 = vmul.f32 %v1001, %v1000
        %v1003 = vmul.f32 0.5, %v1002
        %v1004 = vsub.f32 1.5, %v1003
        %v1005 = vmul.f32 %v1000, %v1004
        %vm1006 = vweird.f32 %v838
        %vm1007 = vweird.f32 %v1000
        %vm1008 = vmor %vm1006, %vm1007
        %v1009 = vsel %vm1008, %v1000, %v1005
        %v1010 = vrsqrt.pop %v841
        %v1011 = vmul.f32 %v1010, %v841
        %v1012 = vmul.f32 %v1011, %v1010
        %v1013 = vmul.f32 0.5, %v1012
        %v1014 = vsub.f32 1.5, %v1013
        %v1015 = vmul.f32 %v1010, %v1014
        %vm1016 = vweird.f32 %v841
        %vm1017 = vweird.f32 %v1010
        %vm1018 = vmor %vm1016, %vm1017
        %v1019 = vsel %vm1018, %v1010, %v1015
        %v1020 = vrsqrt.pop %v843
        %v1021 = vmul.f32 %v1020, %v843
        %v1022 = vmul.f32 %v1021, %v1020
        %v1023 = vmul.f32 0.5, %v1022
        %v1024 = vsub.f32 1.5, %v1023
        %v1025 = vmul.f32 %v1020, %v1024
        %vm1026 = vweird.f32 %v843
        %vm1027 = vweird.f32 %v1020
        %vm1028 = vmor %vm1026, %vm1027
        %v1029 = vsel %vm1028, %v1020, %v1025
        %v1030 = vrsqrt.pop %v846
        %v1031 = vmul.f32 %v1030, %v846
        %v1032 = vmul.f32 %v1031, %v1030
        %v1033 = vmul.f32 0.5, %v1032
        %v1034 = vsub.f32 1.5, %v1033
        %v1035 = vmul.f32 %v1030, %v1034
        %vm1036 = vweird.f32 %v846
        %vm1037 = vweird.f32 %v1030
        %vm1038 = vmor %vm1036, %vm1037
        %v1039 = vsel %vm1038, %v1030, %v1035
        %v1040 = vrsqrt.pop %v848
        %v1041 = vmul.f32 %v1040, %v848
        %v1042 = vmul.f32 %v1041, %v1040
        %v1043 = vmul.f32 0.5, %v1042
        %v1044 = vsub.f32 1.5, %v1043
        %v1045 = vmul.f32 %v1040, %v1044
        %vm1046 = vweird.f32 %v848
        %vm1047 = vweird.f32 %v1040
        %vm1048 = vmor %vm1046, %vm1047
        %v1049 = vsel %vm1048, %v1040, %v1045
        %v1050 = vrsqrt.pop %v851
        %v1051 = vmul.f32 %v1050, %v851
        %v1052 = vmul.f32 %v1051, %v1050
        %v1053 = vmul.f32 0.5, %v1052
        %v1054 = vsub.f32 1.5, %v1053
        %v1055 = vmul.f32 %v1050, %v1054
        %vm1056 = vweird.f32 %v851
        %vm1057 = vweird.f32 %v1050
        %vm1058 = vmor %vm1056, %vm1057
        %v1059 = vsel %vm1058, %v1050, %v1055
        %v1060 = vrsqrt.pop %v853
        %v1061 = vmul.f32 %v1060, %v853
        %v1062 = vmul.f32 %v1061, %v1060
        %v1063 = vmul.f32 0.5, %v1062
        %v1064 = vsub.f32 1.5, %v1063
        %v1065 = vmul.f32 %v1060, %v1064
        %vm1066 = vweird.f32 %v853
        %vm1067 = vweird.f32 %v1060
        %vm1068 = vmor %vm1066, %vm1067
        %v1069 = vsel %vm1068, %v1060, %v1065
        %v1070 = vrsqrt.pop %v856
        %v1071 = vmul.f32 %v1070, %v856
        %v1072 = vmul.f32 %v1071, %v1070
        %v1073 = vmul.f32 0.5, %v1072
        %v1074 = vsub.f32 1.5, %v1073
        %v1075 = vmul.f32 %v1070, %v1074
        %vm1076 = vweird.f32 %v856
        %vm1077 = vweird.f32 %v1070
        %vm1078 = vmor %vm1076, %vm1077
        %v1079 = vsel %vm1078, %v1070, %v1075
        %v1080 = vrsqrt.pop %v858
        %v1081 = vmul.f32 %v1080, %v858
        %v1082 = vmul.f32 %v1081, %v1080
        %v1083 = vmul.f32 0.5, %v1082
        %v1084 = vsub.f32 1.5, %v1083
        %v1085 = vmul.f32 %v1080, %v1084
        %vm1086 = vweird.f32 %v858
        %vm1087 = vweird.f32 %v1080
        %vm1088 = vmor %vm1086, %vm1087
        %v1089 = vsel %vm1088, %v1080, %v1085
        %v1090 = vrsqrt.pop %v861
        %v1091 = vmul.f32 %v1090, %v861
        %v1092 = vmul.f32 %v1091, %v1090
        %v1093 = vmul.f32 0.5, %v1092
        %v1094 = vsub.f32 1.5, %v1093
        %v1095 = vmul.f32 %v1090, %v1094
        %vm1096 = vweird.f32 %v861
        %vm1097 = vweird.f32 %v1090
        %vm1098 = vmor %vm1096, %vm1097
        %v1099 = vsel %vm1098, %v1090, %v1095
        %v1100 = vrsqrt.pop %v863
        %v1101 = vmul.f32 %v1100, %v863
        %v1102 = vmul.f32 %v1101, %v1100
        %v1103 = vmul.f32 0.5, %v1102
        %v1104 = vsub.f32 1.5, %v1103
        %v1105 = vmul.f32 %v1100, %v1104
        %vm1106 = vweird.f32 %v863
        %vm1107 = vweird.f32 %v1100
        %vm1108 = vmor %vm1106, %vm1107
        %v1109 = vsel %vm1108, %v1100, %v1105
        %v1110 = vrsqrt.pop %v866
        %v1111 = vmul.f32 %v1110, %v866
        %v1112 = vmul.f32 %v1111, %v1110
        %v1113 = vmul.f32 0.5, %v1112
        %v1114 = vsub.f32 1.5, %v1113
        %v1115 = vmul.f32 %v1110, %v1114
        %vm1116 = vweird.f32 %v866
        %vm1117 = vweird.f32 %v1110
        %vm1118 = vmor %vm1116, %vm1117
        %v1119 = vsel %vm1118, %v1110, %v1115
        %v1120 = vrsqrt.pop %v868
        %v1121 = vmul.f32 %v1120, %v868
        %v1122 = vmul.f32 %v1121, %v1120
        %v1123 = vmul.f32 0.5, %v1122
        %v1124 = vsub.f32 1.5, %v1123
        %v1125 = vmul.f32 %v1120, %v1124
        %vm1126 = vweird.f32 %v868
        %vm1127 = vweird.f32 %v1120
        %vm1128 = vmor %vm1126, %vm1127
        %v1129 = vsel %vm1128, %v1120, %v1125
        %v1130 = vrsqrt.pop %v871
        %v1131 = vmul.f32 %v1130, %v871
        %v1132 = vmul.f32 %v1131, %v1130
        %v1133 = vmul.f32 0.5, %v1132
        %v1134 = vsub.f32 1.5, %v1133
        %v1135 = vmul.f32 %v1130, %v1134
        %vm1136 = vweird.f32 %v871
        %vm1137 = vweird.f32 %v1130
        %vm1138 = vmor %vm1136, %vm1137
        %v1139 = vsel %vm1138, %v1130, %v1135
        %v1140 = vrsqrt.pop %v873
        %v1141 = vmul.f32 %v1140, %v873
        %v1142 = vmul.f32 %v1141, %v1140
        %v1143 = vmul.f32 0.5, %v1142
        %v1144 = vsub.f32 1.5, %v1143
        %v1145 = vmul.f32 %v1140, %v1144
        %vm1146 = vweird.f32 %v873
        %vm1147 = vweird.f32 %v1140
        %vm1148 = vmor %vm1146, %vm1147
        %v1149 = vsel %vm1148, %v1140, %v1145
        %v1150 = vrsqrt.pop %v876
        %v1151 = vmul.f32 %v1150, %v876
        %v1152 = vmul.f32 %v1151, %v1150
        %v1153 = vmul.f32 0.5, %v1152
        %v1154 = vsub.f32 1.5, %v1153
        %v1155 = vmul.f32 %v1150, %v1154
        %vm1156 = vweird.f32 %v876
        %vm1157 = vweird.f32 %v1150
        %vm1158 = vmor %vm1156, %vm1157
        %v1159 = vsel %vm1158, %v1150, %v1155
        %v1160 = vrsqrt.pop %v878
        %v1161 = vmul.f32 %v1160, %v878
        %v1162 = vmul.f32 %v1161, %v1160
        %v1163 = vmul.f32 0.5, %v1162
        %v1164 = vsub.f32 1.5, %v1163
        %v1165 = vmul.f32 %v1160, %v1164
        %vm1166 = vweird.f32 %v878
        %vm1167 = vweird.f32 %v1160
        %vm1168 = vmor %vm1166, %vm1167
        %v1169 = vsel %vm1168, %v1160, %v1165
        %v1170 = vrsqrt.pop %v881
        %v1171 = vmul.f32 %v1170, %v881
        %v1172 = vmul.f32 %v1171, %v1170
        %v1173 = vmul.f32 0.5, %v1172
        %v1174 = vsub.f32 1.5, %v1173
        %v1175 = vmul.f32 %v1170, %v1174
        %vm1176 = vweird.f32 %v881
        %vm1177 = vweird.f32 %v1170
        %vm1178 = vmor %vm1176, %vm1177
        %v1179 = vsel %vm1178, %v1170, %v1175
        %v1180 = vrsqrt.pop %v883
        %v1181 = vmul.f32 %v1180, %v883
        %v1182 = vmul.f32 %v1181, %v1180
        %v1183 = vmul.f32 0.5, %v1182
        %v1184 = vsub.f32 1.5, %v1183
        %v1185 = vmul.f32 %v1180, %v1184
        %vm1186 = vweird.f32 %v883
        %vm1187 = vweird.f32 %v1180
        %vm1188 = vmor %vm1186, %vm1187
        %v1189 = vsel %vm1188, %v1180, %v1185
        %v1190 = vrsqrt.pop %v886
        %v1191 = vmul.f32 %v1190, %v886
        %v1192 = vmul.f32 %v1191, %v1190
        %v1193 = vmul.f32 0.5, %v1192
        %v1194 = vsub.f32 1.5, %v1193
        %v1195 = vmul.f32 %v1190, %v1194
        %vm1196 = vweird.f32 %v886
        %vm1197 = vweird.f32 %v1190
        %vm1198 = vmor %vm1196, %vm1197
        %v1199 = vsel %vm1198, %v1190, %v1195
        %v1200 = vrsqrt.pop %v888
        %v1201 = vmul.f32 %v1200, %v888
        %v1202 = vmul.f32 %v1201, %v1200
        %v1203 = vmul.f32 0.5, %v1202
        %v1204 = vsub.f32 1.5, %v1203
        %v1205 = vmul.f32 %v1200, %v1204
        %vm1206 = vweird.f32 %v888
        %vm1207 = vweird.f32 %v1200
        %vm1208 = vmor %vm1206, %vm1207
        %v1209 = vsel %vm1208, %v1200, %v1205
        %v1210 = vmul.f32 %v721, %v899
        %v1211 = vmul.f32 %v722, %v909
        %v1212 = vmul.f32 %v723, %v919
        %v1213 = vmul.f32 %v724, %v929
        %v1214 = vmul.f32 %v725, %v939
        %v1215 = vmul.f32 %v726, %v949
        %v1216 = vmul.f32 %v727, %v959
        %v1217 = vmul.f32 %v728, %v969
        %v1218 = vmul.f32 %v729, %v979
        %v1219 = vmul.f32 %v730, %v989
        %v1220 = vmul.f32 %v731, %v999
        %v1221 = vmul.f32 %v732, %v1009
        %v1222 = vmul.f32 %v733, %v1019
        %v1223 = vmul.f32 %v734, %v1029
        %v1224 = vmul.f32 %v735, %v1039
        %v1225 = vmul.f32 %v736, %v1049
        %v1226 = vmul.f32 %v737, %v1059
        %v1227 = vmul.f32 %v738, %v1069
        %v1228 = vmul.f32 %v739, %v1079
        %v1229 = vmul.f32 %v740, %v1089
        %v1230 = vmul.f32 %v741, %v1099
        %v1231 = vmul.f32 %v742, %v1109
        %v1232 = vmul.f32 %v743, %v1119
        %v1233 = vmul.f32 %v744, %v1129
        %v1234 = vmul.f32 %v745, %v1139
        %v1235 = vmul.f32 %v746, %v1149
        %v1236 = vmul.f32 %v747, %v1159
        %v1237 = vmul.f32 %v748, %v1169
        %v1238 = vmul.f32 %v749, %v1179
        %v1239 = vmul.f32 %v750, %v1189
        %v1240 = vmul.f32 %v751, %v1199
        %v1241 = vmul.f32 %v752, %v1209
        %v1242 = vld [vmem:[#allocation6] sm:$0x1]
        %v1244 = vperm.slane %v1242, 0
        %v1246 = vmul.f32 %v1210, %v1244
        %v1247 = vmul.f32 %v1211, %v1244
        %v1248 = vmul.f32 %v1212, %v1244
        %v1249 = vmul.f32 %v1213, %v1244
        %v1250 = vmul.f32 %v1214, %v1244
        %v1251 = vmul.f32 %v1215, %v1244
        %v1252 = vmul.f32 %v1216, %v1244
        %v1253 = vmul.f32 %v1217, %v1244
        %v1254 = vmul.f32 %v1218, %v1244
        %v1255 = vmul.f32 %v1219, %v1244
        %v1256 = vmul.f32 %v1220, %v1244
        %v1257 = vmul.f32 %v1221, %v1244
        %v1258 = vmul.f32 %v1222, %v1244
        %v1259 = vmul.f32 %v1223, %v1244
        %v1260 = vmul.f32 %v1224, %v1244
        %v1261 = vmul.f32 %v1225, %v1244
        %v1262 = vmul.f32 %v1226, %v1244
        %v1263 = vmul.f32 %v1227, %v1244
        %v1264 = vmul.f32 %v1228, %v1244
        %v1265 = vmul.f32 %v1229, %v1244
        %v1266 = vmul.f32 %v1230, %v1244
        %v1267 = vmul.f32 %v1231, %v1244
        %v1268 = vmul.f32 %v1232, %v1244
        %v1269 = vmul.f32 %v1233, %v1244
        %v1270 = vmul.f32 %v1234, %v1244
        %v1271 = vmul.f32 %v1235, %v1244
        %v1272 = vmul.f32 %v1236, %v1244
        %v1273 = vmul.f32 %v1237, %v1244
        %v1274 = vmul.f32 %v1238, %v1244
        %v1275 = vmul.f32 %v1239, %v1244
        %v1276 = vmul.f32 %v1240, %v1244
        %v1277 = vmul.f32 %v1241, %v1244
        %v1278 = vld [vmem:[%s2] sm:$0x1]
        %v1280 = vperm.slane %v1278, 0
        %v1282 = vadd.f32 %v1246, %v1280
        %v1283 = vadd.f32 %v1247, %v1280
        %v1284 = vadd.f32 %v1248, %v1280
        %v1285 = vadd.f32 %v1249, %v1280
        %v1286 = vadd.f32 %v1250, %v1280
        %v1287 = vadd.f32 %v1251, %v1280
        %v1288 = vadd.f32 %v1252, %v1280
        %v1289 = vadd.f32 %v1253, %v1280
        %v1290 = vadd.f32 %v1254, %v1280
        %v1291 = vadd.f32 %v1255, %v1280
        %v1292 = vadd.f32 %v1256, %v1280
        %v1293 = vadd.f32 %v1257, %v1280
        %v1294 = vadd.f32 %v1258, %v1280
        %v1295 = vadd.f32 %v1259, %v1280
        %v1296 = vadd.f32 %v1260, %v1280
        %v1297 = vadd.f32 %v1261, %v1280
        %v1298 = vadd.f32 %v1262, %v1280
        %v1299 = vadd.f32 %v1263, %v1280
        %v1300 = vadd.f32 %v1264, %v1280
        %v1301 = vadd.f32 %v1265, %v1280
        %v1302 = vadd.f32 %v1266, %v1280
        %v1303 = vadd.f32 %v1267, %v1280
        %v1304 = vadd.f32 %v1268, %v1280
        %v1305 = vadd.f32 %v1269, %v1280
        %v1306 = vadd.f32 %v1270, %v1280
        %v1307 = vadd.f32 %v1271, %v1280
        %v1308 = vadd.f32 %v1272, %v1280
        %v1309 = vadd.f32 %v1273, %v1280
        %v1310 = vadd.f32 %v1274, %v1280
        %v1311 = vadd.f32 %v1275, %v1280
        %v1312 = vadd.f32 %v1276, %v1280
        %v1313 = vadd.f32 %v1277, %v1280
        %v1314 = vpack.c.bf16 %v1283, %v1282
        %v1315 = vpack.c.bf16 %v1285, %v1284
        %v1316 = vpack.c.bf16 %v1287, %v1286
        %v1317 = vpack.c.bf16 %v1289, %v1288
        %v1318 = vpack.c.bf16 %v1291, %v1290
        %v1319 = vpack.c.bf16 %v1293, %v1292
        %v1320 = vpack.c.bf16 %v1295, %v1294
        %v1321 = vpack.c.bf16 %v1297, %v1296
        %v1322 = vpack.c.bf16 %v1299, %v1298
        %v1323 = vpack.c.bf16 %v1301, %v1300
        %v1324 = vpack.c.bf16 %v1303, %v1302
        %v1325 = vpack.c.bf16 %v1305, %v1304
        %v1326 = vpack.c.bf16 %v1307, %v1306
        %v1327 = vpack.c.bf16 %v1309, %v1308
        %v1328 = vpack.c.bf16 %v1311, %v1310
        %v1329 = vpack.c.bf16 %v1313, %v1312
        %v1330 = vld [vmem:[#allocation9] sm:$0xff]
        %v1331 = vld [vmem:[#allocation9 + $0x8] sm:$0xff]
        %v1332 = vld [vmem:[#allocation9 + $0x10] sm:$0xff]
        %v1333 = vld [vmem:[#allocation9 + $0x18] sm:$0xff]
        %v1334 = vld [vmem:[#allocation9 + $0x20] sm:$0xff]
        %v1335 = vld [vmem:[#allocation9 + $0x28] sm:$0xff]
        %v1336 = vld [vmem:[#allocation9 + $0x30] sm:$0xff]
        %v1337 = vld [vmem:[#allocation9 + $0x38] sm:$0xff]
        %v1338 = vld [vmem:[#allocation9 + $0x40] sm:$0xff]
        %v1339 = vld [vmem:[#allocation9 + $0x48] sm:$0xff]
        %v1340 = vld [vmem:[#allocation9 + $0x50] sm:$0xff]
        %v1341 = vld [vmem:[#allocation9 + $0x58] sm:$0xff]
        %v1342 = vld [vmem:[#allocation9 + $0x60] sm:$0xff]
        %v1343 = vld [vmem:[#allocation9 + $0x68] sm:$0xff]
        %v1344 = vld [vmem:[#allocation9 + $0x70] sm:$0xff]
        %v1345 = vld [vmem:[#allocation9 + $0x78] sm:$0xff]
        %v1346 = vld [vmem:[%s5] sm:$0x3]
        %v1348 = vperm.slane %v1346, 0
        %v1349 = vperm.slane %v1346, 1
        %v1368 = vunpack.c.l.b16 %v1330
        %v1369 = vunpack.c.h.b16 %v1330
        %v1370 = vunpack.c.l.b16 %v1331
        %v1371 = vunpack.c.h.b16 %v1331
        %v1372 = vunpack.c.l.b16 %v1332
        %v1373 = vunpack.c.h.b16 %v1332
        %v1374 = vunpack.c.l.b16 %v1333
        %v1375 = vunpack.c.h.b16 %v1333
        %v1376 = vunpack.c.l.b16 %v1334
        %v1377 = vunpack.c.h.b16 %v1334
        %v1378 = vunpack.c.l.b16 %v1335
        %v1379 = vunpack.c.h.b16 %v1335
        %v1380 = vunpack.c.l.b16 %v1336
        %v1381 = vunpack.c.h.b16 %v1336
        %v1382 = vunpack.c.l.b16 %v1337
        %v1383 = vunpack.c.h.b16 %v1337
        %v1384 = vunpack.c.l.b16 %v1338
        %v1385 = vunpack.c.h.b16 %v1338
        %v1386 = vunpack.c.l.b16 %v1339
        %v1387 = vunpack.c.h.b16 %v1339
        %v1388 = vunpack.c.l.b16 %v1340
        %v1389 = vunpack.c.h.b16 %v1340
        %v1390 = vunpack.c.l.b16 %v1341
        %v1391 = vunpack.c.h.b16 %v1341
        %v1392 = vunpack.c.l.b16 %v1342
        %v1393 = vunpack.c.h.b16 %v1342
        %v1394 = vunpack.c.l.b16 %v1343
        %v1395 = vunpack.c.h.b16 %v1343
        %v1396 = vunpack.c.l.b16 %v1344
        %v1397 = vunpack.c.h.b16 %v1344
        %v1398 = vunpack.c.l.b16 %v1345
        %v1399 = vunpack.c.h.b16 %v1345
        %v1400 = vpack.c.b16 %v1370, %v1368
        %v1401 = vpack.c.b16 %v1371, %v1369
        %v1402 = vpack.c.b16 %v1374, %v1372
        %v1403 = vpack.c.b16 %v1375, %v1373
        %v1404 = vpack.c.b16 %v1378, %v1376
        %v1405 = vpack.c.b16 %v1379, %v1377
        %v1406 = vpack.c.b16 %v1382, %v1380
        %v1407 = vpack.c.b16 %v1383, %v1381
        %v1408 = vpack.c.b16 %v1386, %v1384
        %v1409 = vpack.c.b16 %v1387, %v1385
        %v1410 = vpack.c.b16 %v1390, %v1388
        %v1411 = vpack.c.b16 %v1391, %v1389
        %v1412 = vpack.c.b16 %v1394, %v1392
        %v1413 = vpack.c.b16 %v1395, %v1393
        %v1414 = vpack.c.b16 %v1398, %v1396
        %v1415 = vpack.c.b16 %v1399, %v1397
        %1432 = vmatpush.bf16.msra.mxu0 %v1414
        %1433 = vmatpush.bf16.msra.mxu0 %v1412
        %1434 = vmatpush.bf16.msra.mxu0 %v1410
        %1435 = vmatpush.bf16.msra.mxu0 %v1408
        %1436 = vmatpush.bf16.msra.mxu0 %v1406
        %1437 = vmatpush.bf16.msra.mxu0 %v1404
        %1438 = vmatpush.bf16.msra.mxu0 %v1402
        %1439 = vmatpush.bf16.msra.mxu0 %v1400
        %1440 = vmatmul.bf16.gmra.mxu0 %v1314
        %v1441 = vpop.f32.mrf.mxu0
        %v1442 = vadd.f32 %v1348, %v1441
        %v1443 = vpop.f32.mrf.mxu0
        %v1444 = vadd.f32 %v1348, %v1443
        %1445 = vmatmul.bf16.gmra.mxu0 %v1315
        %v1446 = vpop.f32.mrf.mxu0
        %v1447 = vadd.f32 %v1348, %v1446
        %v1448 = vpop.f32.mrf.mxu0
        %v1449 = vadd.f32 %v1348, %v1448
        %1450 = vmatmul.bf16.gmra.mxu0 %v1316
        %v1451 = vpop.f32.mrf.mxu0
        %v1452 = vadd.f32 %v1348, %v1451
        %v1453 = vpop.f32.mrf.mxu0
        %v1454 = vadd.f32 %v1348, %v1453
        %1455 = vmatmul.bf16.gmra.mxu0 %v1317
        %v1456 = vpop.f32.mrf.mxu0
        %v1457 = vadd.f32 %v1348, %v1456
        %v1458 = vpop.f32.mrf.mxu0
        %v1459 = vadd.f32 %v1348, %v1458
        %1460 = vmatmul.bf16.gmra.mxu0 %v1318
        %v1461 = vpop.f32.mrf.mxu0
        %v1462 = vadd.f32 %v1348, %v1461
        %v1463 = vpop.f32.mrf.mxu0
        %v1464 = vadd.f32 %v1348, %v1463
        %1465 = vmatmul.bf16.gmra.mxu0 %v1319
        %v1466 = vpop.f32.mrf.mxu0
        %v1467 = vadd.f32 %v1348, %v1466
        %v1468 = vpop.f32.mrf.mxu0
        %v1469 = vadd.f32 %v1348, %v1468
        %1470 = vmatmul.bf16.gmra.mxu0 %v1320
        %v1471 = vpop.f32.mrf.mxu0
        %v1472 = vadd.f32 %v1348, %v1471
        %v1473 = vpop.f32.mrf.mxu0
        %v1474 = vadd.f32 %v1348, %v1473
        %1475 = vmatmul.bf16.gmra.mxu0 %v1321
        %v1476 = vpop.f32.mrf.mxu0
        %v1477 = vadd.f32 %v1348, %v1476
        %v1478 = vpop.f32.mrf.mxu0
        %v1479 = vadd.f32 %v1348, %v1478
        %1480 = vmatmul.bf16.gmra.mxu0 %v1322
        %v1481 = vpop.f32.mrf.mxu0
        %v1482 = vadd.f32 %v1348, %v1481
        %v1483 = vpop.f32.mrf.mxu0
        %v1484 = vadd.f32 %v1348, %v1483
        %1485 = vmatmul.bf16.gmra.mxu0 %v1323
        %v1486 = vpop.f32.mrf.mxu0
        %v1487 = vadd.f32 %v1348, %v1486
        %v1488 = vpop.f32.mrf.mxu0
        %v1489 = vadd.f32 %v1348, %v1488
        %1490 = vmatmul.bf16.gmra.mxu0 %v1324
        %v1491 = vpop.f32.mrf.mxu0
        %v1492 = vadd.f32 %v1348, %v1491
        %v1493 = vpop.f32.mrf.mxu0
        %v1494 = vadd.f32 %v1348, %v1493
        %1495 = vmatmul.bf16.gmra.mxu0 %v1325
        %v1496 = vpop.f32.mrf.mxu0
        %v1497 = vadd.f32 %v1348, %v1496
        %v1498 = vpop.f32.mrf.mxu0
        %v1499 = vadd.f32 %v1348, %v1498
        %1500 = vmatmul.bf16.gmra.mxu0 %v1326
        %v1501 = vpop.f32.mrf.mxu0
        %v1502 = vadd.f32 %v1348, %v1501
        %v1503 = vpop.f32.mrf.mxu0
        %v1504 = vadd.f32 %v1348, %v1503
        %1505 = vmatmul.bf16.gmra.mxu0 %v1327
        %v1506 = vpop.f32.mrf.mxu0
        %v1507 = vadd.f32 %v1348, %v1506
        %v1508 = vpop.f32.mrf.mxu0
        %v1509 = vadd.f32 %v1348, %v1508
        %1510 = vmatmul.bf16.gmra.mxu0 %v1328
        %v1511 = vpop.f32.mrf.mxu0
        %v1512 = vadd.f32 %v1348, %v1511
        %v1513 = vpop.f32.mrf.mxu0
        %v1514 = vadd.f32 %v1348, %v1513
        %1515 = vmatmul.bf16.gmra.mxu0 %v1329
        %v1516 = vpop.f32.mrf.mxu0
        %v1517 = vadd.f32 %v1348, %v1516
        %v1518 = vpop.f32.mrf.mxu0
        %v1519 = vadd.f32 %v1348, %v1518
        %1520 = vdwg.mxu0
        %1521 = vmatpush.bf16.msra.mxu0 %v1415
        %1522 = vmatpush.bf16.msra.mxu0 %v1413
        %1523 = vmatpush.bf16.msra.mxu0 %v1411
        %1524 = vmatpush.bf16.msra.mxu0 %v1409
        %1525 = vmatpush.bf16.msra.mxu0 %v1407
        %1526 = vmatpush.bf16.msra.mxu0 %v1405
        %1527 = vmatpush.bf16.msra.mxu0 %v1403
        %1528 = vmatpush.bf16.msra.mxu0 %v1401
        %1529 = vmatmul.bf16.gmra.mxu0 %v1314
        %v1530 = vpop.f32.mrf.mxu0
        %v1531 = vadd.f32 %v1349, %v1530
        %v1532 = vpop.f32.mrf.mxu0
        %v1533 = vadd.f32 %v1349, %v1532
        %1534 = vmatmul.bf16.gmra.mxu0 %v1315
        %v1535 = vpop.f32.mrf.mxu0
        %v1536 = vadd.f32 %v1349, %v1535
        %v1537 = vpop.f32.mrf.mxu0
        %v1538 = vadd.f32 %v1349, %v1537
        %1539 = vmatmul.bf16.gmra.mxu0 %v1316
        %v1540 = vpop.f32.mrf.mxu0
        %v1541 = vadd.f32 %v1349, %v1540
        %v1542 = vpop.f32.mrf.mxu0
        %v1543 = vadd.f32 %v1349, %v1542
        %1544 = vmatmul.bf16.gmra.mxu0 %v1317
        %v1545 = vpop.f32.mrf.mxu0
        %v1546 = vadd.f32 %v1349, %v1545
        %v1547 = vpop.f32.mrf.mxu0
        %v1548 = vadd.f32 %v1349, %v1547
        %1549 = vmatmul.bf16.gmra.mxu0 %v1318
        %v1550 = vpop.f32.mrf.mxu0
        %v1551 = vadd.f32 %v1349, %v1550
        %v1552 = vpop.f32.mrf.mxu0
        %v1553 = vadd.f32 %v1349, %v1552
        %1554 = vmatmul.bf16.gmra.mxu0 %v1319
        %v1555 = vpop.f32.mrf.mxu0
        %v1556 = vadd.f32 %v1349, %v1555
        %v1557 = vpop.f32.mrf.mxu0
        %v1558 = vadd.f32 %v1349, %v1557
        %1559 = vmatmul.bf16.gmra.mxu0 %v1320
        %v1560 = vpop.f32.mrf.mxu0
        %v1561 = vadd.f32 %v1349, %v1560
        %v1562 = vpop.f32.mrf.mxu0
        %v1563 = vadd.f32 %v1349, %v1562
        %1564 = vmatmul.bf16.gmra.mxu0 %v1321
        %v1565 = vpop.f32.mrf.mxu0
        %v1566 = vadd.f32 %v1349, %v1565
        %v1567 = vpop.f32.mrf.mxu0
        %v1568 = vadd.f32 %v1349, %v1567
        %1569 = vmatmul.bf16.gmra.mxu0 %v1322
        %v1570 = vpop.f32.mrf.mxu0
        %v1571 = vadd.f32 %v1349, %v1570
        %v1572 = vpop.f32.mrf.mxu0
        %v1573 = vadd.f32 %v1349, %v1572
        %1574 = vmatmul.bf16.gmra.mxu0 %v1323
        %v1575 = vpop.f32.mrf.mxu0
        %v1576 = vadd.f32 %v1349, %v1575
        %v1577 = vpop.f32.mrf.mxu0
        %v1578 = vadd.f32 %v1349, %v1577
        %1579 = vmatmul.bf16.gmra.mxu0 %v1324
        %v1580 = vpop.f32.mrf.mxu0
        %v1581 = vadd.f32 %v1349, %v1580
        %v1582 = vpop.f32.mrf.mxu0
        %v1583 = vadd.f32 %v1349, %v1582
        %1584 = vmatmul.bf16.gmra.mxu0 %v1325
        %v1585 = vpop.f32.mrf.mxu0
        %v1586 = vadd.f32 %v1349, %v1585
        %v1587 = vpop.f32.mrf.mxu0
        %v1588 = vadd.f32 %v1349, %v1587
        %1589 = vmatmul.bf16.gmra.mxu0 %v1326
        %v1590 = vpop.f32.mrf.mxu0
        %v1591 = vadd.f32 %v1349, %v1590
        %v1592 = vpop.f32.mrf.mxu0
        %v1593 = vadd.f32 %v1349, %v1592
        %1594 = vmatmul.bf16.gmra.mxu0 %v1327
        %v1595 = vpop.f32.mrf.mxu0
        %v1596 = vadd.f32 %v1349, %v1595
        %v1597 = vpop.f32.mrf.mxu0
        %v1598 = vadd.f32 %v1349, %v1597
        %1599 = vmatmul.bf16.gmra.mxu0 %v1328
        %v1600 = vpop.f32.mrf.mxu0
        %v1601 = vadd.f32 %v1349, %v1600
        %v1602 = vpop.f32.mrf.mxu0
        %v1603 = vadd.f32 %v1349, %v1602
        %1604 = vmatmul.bf16.gmra.mxu0 %v1329
        %v1605 = vpop.f32.mrf.mxu0
        %v1606 = vadd.f32 %v1349, %v1605
        %v1607 = vpop.f32.mrf.mxu0
        %v1608 = vadd.f32 %v1349, %v1607
        %1609 = vdwg.mxu0
        %v1610 = vmul.f32 %v1442, %v1442
        %v1611 = vmul.f32 %v1531, %v1531
        %v1612 = vmul.f32 %v1444, %v1444
        %v1613 = vmul.f32 %v1533, %v1533
        %v1614 = vmul.f32 %v1447, %v1447
        %v1615 = vmul.f32 %v1536, %v1536
        %v1616 = vmul.f32 %v1449, %v1449
        %v1617 = vmul.f32 %v1538, %v1538
        %v1618 = vmul.f32 %v1452, %v1452
        %v1619 = vmul.f32 %v1541, %v1541
        %v1620 = vmul.f32 %v1454, %v1454
        %v1621 = vmul.f32 %v1543, %v1543
        %v1622 = vmul.f32 %v1457, %v1457
        %v1623 = vmul.f32 %v1546, %v1546
        %v1624 = vmul.f32 %v1459, %v1459
        %v1625 = vmul.f32 %v1548, %v1548
        %v1626 = vmul.f32 %v1462, %v1462
        %v1627 = vmul.f32 %v1551, %v1551
        %v1628 = vmul.f32 %v1464, %v1464
        %v1629 = vmul.f32 %v1553, %v1553
        %v1630 = vmul.f32 %v1467, %v1467
        %v1631 = vmul.f32 %v1556, %v1556
        %v1632 = vmul.f32 %v1469, %v1469
        %v1633 = vmul.f32 %v1558, %v1558
        %v1634 = vmul.f32 %v1472, %v1472
        %v1635 = vmul.f32 %v1561, %v1561
        %v1636 = vmul.f32 %v1474, %v1474
        %v1637 = vmul.f32 %v1563, %v1563
        %v1638 = vmul.f32 %v1477, %v1477
        %v1639 = vmul.f32 %v1566, %v1566
        %v1640 = vmul.f32 %v1479, %v1479
        %v1641 = vmul.f32 %v1568, %v1568
        %v1642 = vmul.f32 %v1482, %v1482
        %v1643 = vmul.f32 %v1571, %v1571
        %v1644 = vmul.f32 %v1484, %v1484
        %v1645 = vmul.f32 %v1573, %v1573
        %v1646 = vmul.f32 %v1487, %v1487
        %v1647 = vmul.f32 %v1576, %v1576
        %v1648 = vmul.f32 %v1489, %v1489
        %v1649 = vmul.f32 %v1578, %v1578
        %v1650 = vmul.f32 %v1492, %v1492
        %v1651 = vmul.f32 %v1581, %v1581
        %v1652 = vmul.f32 %v1494, %v1494
        %v1653 = vmul.f32 %v1583, %v1583
        %v1654 = vmul.f32 %v1497, %v1497
        %v1655 = vmul.f32 %v1586, %v1586
        %v1656 = vmul.f32 %v1499, %v1499
        %v1657 = vmul.f32 %v1588, %v1588
        %v1658 = vmul.f32 %v1502, %v1502
        %v1659 = vmul.f32 %v1591, %v1591
        %v1660 = vmul.f32 %v1504, %v1504
        %v1661 = vmul.f32 %v1593, %v1593
        %v1662 = vmul.f32 %v1507, %v1507
        %v1663 = vmul.f32 %v1596, %v1596
        %v1664 = vmul.f32 %v1509, %v1509
        %v1665 = vmul.f32 %v1598, %v1598
        %v1666 = vmul.f32 %v1512, %v1512
        %v1667 = vmul.f32 %v1601, %v1601
        %v1668 = vmul.f32 %v1514, %v1514
        %v1669 = vmul.f32 %v1603, %v1603
        %v1670 = vmul.f32 %v1517, %v1517
        %v1671 = vmul.f32 %v1606, %v1606
        %v1672 = vmul.f32 %v1519, %v1519
        %v1673 = vmul.f32 %v1608, %v1608
        %v1674 = vmul.f32 %v1610, %v1442
        %v1675 = vmul.f32 %v1611, %v1531
        %v1676 = vmul.f32 %v1612, %v1444
        %v1677 = vmul.f32 %v1613, %v1533
        %v1678 = vmul.f32 %v1614, %v1447
        %v1679 = vmul.f32 %v1615, %v1536
        %v1680 = vmul.f32 %v1616, %v1449
        %v1681 = vmul.f32 %v1617, %v1538
        %v1682 = vmul.f32 %v1618, %v1452
        %v1683 = vmul.f32 %v1619, %v1541
        %v1684 = vmul.f32 %v1620, %v1454
        %v1685 = vmul.f32 %v1621, %v1543
        %v1686 = vmul.f32 %v1622, %v1457
        %v1687 = vmul.f32 %v1623, %v1546
        %v1688 = vmul.f32 %v1624, %v1459
        %v1689 = vmul.f32 %v1625, %v1548
        %v1690 = vmul.f32 %v1626, %v1462
        %v1691 = vmul.f32 %v1627, %v1551
        %v1692 = vmul.f32 %v1628, %v1464
        %v1693 = vmul.f32 %v1629, %v1553
        %v1694 = vmul.f32 %v1630, %v1467
        %v1695 = vmul.f32 %v1631, %v1556
        %v1696 = vmul.f32 %v1632, %v1469
        %v1697 = vmul.f32 %v1633, %v1558
        %v1698 = vmul.f32 %v1634, %v1472
        %v1699 = vmul.f32 %v1635, %v1561
        %v1700 = vmul.f32 %v1636, %v1474
        %v1701 = vmul.f32 %v1637, %v1563
        %v1702 = vmul.f32 %v1638, %v1477
        %v1703 = vmul.f32 %v1639, %v1566
        %v1704 = vmul.f32 %v1640, %v1479
        %v1705 = vmul.f32 %v1641, %v1568
        %v1706 = vmul.f32 %v1642, %v1482
        %v1707 = vmul.f32 %v1643, %v1571
        %v1708 = vmul.f32 %v1644, %v1484
        %v1709 = vmul.f32 %v1645, %v1573
        %v1710 = vmul.f32 %v1646, %v1487
        %v1711 = vmul.f32 %v1647, %v1576
        %v1712 = vmul.f32 %v1648, %v1489
        %v1713 = vmul.f32 %v1649, %v1578
        %v1714 = vmul.f32 %v1650, %v1492
        %v1715 = vmul.f32 %v1651, %v1581
        %v1716 = vmul.f32 %v1652, %v1494
        %v1717 = vmul.f32 %v1653, %v1583
        %v1718 = vmul.f32 %v1654, %v1497
        %v1719 = vmul.f32 %v1655, %v1586
        %v1720 = vmul.f32 %v1656, %v1499
        %v1721 = vmul.f32 %v1657, %v1588
        %v1722 = vmul.f32 %v1658, %v1502
        %v1723 = vmul.f32 %v1659, %v1591
        %v1724 = vmul.f32 %v1660, %v1504
        %v1725 = vmul.f32 %v1661, %v1593
        %v1726 = vmul.f32 %v1662, %v1507
        %v1727 = vmul.f32 %v1663, %v1596
        %v1728 = vmul.f32 %v1664, %v1509
        %v1729 = vmul.f32 %v1665, %v1598
        %v1730 = vmul.f32 %v1666, %v1512
        %v1731 = vmul.f32 %v1667, %v1601
        %v1732 = vmul.f32 %v1668, %v1514
        %v1733 = vmul.f32 %v1669, %v1603
        %v1734 = vmul.f32 %v1670, %v1517
        %v1735 = vmul.f32 %v1671, %v1606
        %v1736 = vmul.f32 %v1672, %v1519
        %v1737 = vmul.f32 %v1673, %v1608
        %v1738 = vmul.f32 %v1674, 0.044715
        %v1739 = vmul.f32 %v1675, 0.044715
        %v1740 = vmul.f32 %v1676, 0.044715
        %v1741 = vmul.f32 %v1677, 0.044715
        %v1742 = vmul.f32 %v1678, 0.044715
        %v1743 = vmul.f32 %v1679, 0.044715
        %v1744 = vmul.f32 %v1680, 0.044715
        %v1745 = vmul.f32 %v1681, 0.044715
        %v1746 = vmul.f32 %v1682, 0.044715
        %v1747 = vmul.f32 %v1683, 0.044715
        %v1748 = vmul.f32 %v1684, 0.044715
        %v1749 = vmul.f32 %v1685, 0.044715
        %v1750 = vmul.f32 %v1686, 0.044715
        %v1751 = vmul.f32 %v1687, 0.044715
        %v1752 = vmul.f32 %v1688, 0.044715
        %v1753 = vmul.f32 %v1689, 0.044715
        %v1754 = vmul.f32 %v1690, 0.044715
        %v1755 = vmul.f32 %v1691, 0.044715
        %v1756 = vmul.f32 %v1692, 0.044715
        %v1757 = vmul.f32 %v1693, 0.044715
        %v1758 = vmul.f32 %v1694, 0.044715
        %v1759 = vmul.f32 %v1695, 0.044715
        %v1760 = vmul.f32 %v1696, 0.044715
        %v1761 = vmul.f32 %v1697, 0.044715
        %v1762 = vmul.f32 %v1698, 0.044715
        %v1763 = vmul.f32 %v1699, 0.044715
        %v1764 = vmul.f32 %v1700, 0.044715
        %v1765 = vmul.f32 %v1701, 0.044715
        %v1766 = vmul.f32 %v1702, 0.044715
        %v1767 = vmul.f32 %v1703, 0.044715
        %v1768 = vmul.f32 %v1704, 0.044715
        %v1769 = vmul.f32 %v1705, 0.044715
        %v1770 = vmul.f32 %v1706, 0.044715
        %v1771 = vmul.f32 %v1707, 0.044715
        %v1772 = vmul.f32 %v1708, 0.044715
        %v1773 = vmul.f32 %v1709, 0.044715
        %v1774 = vmul.f32 %v1710, 0.044715
        %v1775 = vmul.f32 %v1711, 0.044715
        %v1776 = vmul.f32 %v1712, 0.044715
        %v1777 = vmul.f32 %v1713, 0.044715
        %v1778 = vmul.f32 %v1714, 0.044715
        %v1779 = vmul.f32 %v1715, 0.044715
        %v1780 = vmul.f32 %v1716, 0.044715
        %v1781 = vmul.f32 %v1717, 0.044715
        %v1782 = vmul.f32 %v1718, 0.044715
        %v1783 = vmul.f32 %v1719, 0.044715
        %v1784 = vmul.f32 %v1720, 0.044715
        %v1785 = vmul.f32 %v1721, 0.044715
        %v1786 = vmul.f32 %v1722, 0.044715
        %v1787 = vmul.f32 %v1723, 0.044715
        %v1788 = vmul.f32 %v1724, 0.044715
        %v1789 = vmul.f32 %v1725, 0.044715
        %v1790 = vmul.f32 %v1726, 0.044715
        %v1791 = vmul.f32 %v1727, 0.044715
        %v1792 = vmul.f32 %v1728, 0.044715
        %v1793 = vmul.f32 %v1729, 0.044715
        %v1794 = vmul.f32 %v1730, 0.044715
        %v1795 = vmul.f32 %v1731, 0.044715
        %v1796 = vmul.f32 %v1732, 0.044715
        %v1797 = vmul.f32 %v1733, 0.044715
        %v1798 = vmul.f32 %v1734, 0.044715
        %v1799 = vmul.f32 %v1735, 0.044715
        %v1800 = vmul.f32 %v1736, 0.044715
        %v1801 = vmul.f32 %v1737, 0.044715
        %v1802 = vadd.f32 %v1442, %v1738
        %v1803 = vadd.f32 %v1531, %v1739
        %v1804 = vadd.f32 %v1444, %v1740
        %v1805 = vadd.f32 %v1533, %v1741
        %v1806 = vadd.f32 %v1447, %v1742
        %v1807 = vadd.f32 %v1536, %v1743
        %v1808 = vadd.f32 %v1449, %v1744
        %v1809 = vadd.f32 %v1538, %v1745
        %v1810 = vadd.f32 %v1452, %v1746
        %v1811 = vadd.f32 %v1541, %v1747
        %v1812 = vadd.f32 %v1454, %v1748
        %v1813 = vadd.f32 %v1543, %v1749
        %v1814 = vadd.f32 %v1457, %v1750
        %v1815 = vadd.f32 %v1546, %v1751
        %v1816 = vadd.f32 %v1459, %v1752
        %v1817 = vadd.f32 %v1548, %v1753
        %v1818 = vadd.f32 %v1462, %v1754
        %v1819 = vadd.f32 %v1551, %v1755
        %v1820 = vadd.f32 %v1464, %v1756
        %v1821 = vadd.f32 %v1553, %v1757
        %v1822 = vadd.f32 %v1467, %v1758
        %v1823 = vadd.f32 %v1556, %v1759
        %v1824 = vadd.f32 %v1469, %v1760
        %v1825 = vadd.f32 %v1558, %v1761
        %v1826 = vadd.f32 %v1472, %v1762
        %v1827 = vadd.f32 %v1561, %v1763
        %v1828 = vadd.f32 %v1474, %v1764
        %v1829 = vadd.f32 %v1563, %v1765
        %v1830 = vadd.f32 %v1477, %v1766
        %v1831 = vadd.f32 %v1566, %v1767
        %v1832 = vadd.f32 %v1479, %v1768
        %v1833 = vadd.f32 %v1568, %v1769
        %v1834 = vadd.f32 %v1482, %v1770
        %v1835 = vadd.f32 %v1571, %v1771
        %v1836 = vadd.f32 %v1484, %v1772
        %v1837 = vadd.f32 %v1573, %v1773
        %v1838 = vadd.f32 %v1487, %v1774
        %v1839 = vadd.f32 %v1576, %v1775
        %v1840 = vadd.f32 %v1489, %v1776
        %v1841 = vadd.f32 %v1578, %v1777
        %v1842 = vadd.f32 %v1492, %v1778
        %v1843 = vadd.f32 %v1581, %v1779
        %v1844 = vadd.f32 %v1494, %v1780
        %v1845 = vadd.f32 %v1583, %v1781
        %v1846 = vadd.f32 %v1497, %v1782
        %v1847 = vadd.f32 %v1586, %v1783
        %v1848 = vadd.f32 %v1499, %v1784
        %v1849 = vadd.f32 %v1588, %v1785
        %v1850 = vadd.f32 %v1502, %v1786
        %v1851 = vadd.f32 %v1591, %v1787
        %v1852 = vadd.f32 %v1504, %v1788
        %v1853 = vadd.f32 %v1593, %v1789
        %v1854 = vadd.f32 %v1507, %v1790
        %v1855 = vadd.f32 %v1596, %v1791
        %v1856 = vadd.f32 %v1509, %v1792
        %v1857 = vadd.f32 %v1598, %v1793
        %v1858 = vadd.f32 %v1512, %v1794
        %v1859 = vadd.f32 %v1601, %v1795
        %v1860 = vadd.f32 %v1514, %v1796
        %v1861 = vadd.f32 %v1603, %v1797
        %v1862 = vadd.f32 %v1517, %v1798
        %v1863 = vadd.f32 %v1606, %v1799
        %v1864 = vadd.f32 %v1519, %v1800
        %v1865 = vadd.f32 %v1608, %v1801
        %v1866 = vmul.f32 %v1802, 0.7978846
        %v1867 = vmul.f32 %v1803, 0.7978846
        %v1868 = vmul.f32 %v1804, 0.7978846
        %v1869 = vmul.f32 %v1805, 0.7978846
        %v1870 = vmul.f32 %v1806, 0.7978846
        %v1871 = vmul.f32 %v1807, 0.7978846
        %v1872 = vmul.f32 %v1808, 0.7978846
        %v1873 = vmul.f32 %v1809, 0.7978846
        %v1874 = vmul.f32 %v1810, 0.7978846
        %v1875 = vmul.f32 %v1811, 0.7978846
        %v1876 = vmul.f32 %v1812, 0.7978846
        %v1877 = vmul.f32 %v1813, 0.7978846
        %v1878 = vmul.f32 %v1814, 0.7978846
        %v1879 = vmul.f32 %v1815, 0.7978846
        %v1880 = vmul.f32 %v1816, 0.7978846
        %v1881 = vmul.f32 %v1817, 0.7978846
        %v1882 = vmul.f32 %v1818, 0.7978846
        %v1883 = vmul.f32 %v1819, 0.7978846
        %v1884 = vmul.f32 %v1820, 0.7978846
        %v1885 = vmul.f32 %v1821, 0.7978846
        %v1886 = vmul.f32 %v1822, 0.7978846
        %v1887 = vmul.f32 %v1823, 0.7978846
        %v1888 = vmul.f32 %v1824, 0.7978846
        %v1889 = vmul.f32 %v1825, 0.7978846
        %v1890 = vmul.f32 %v1826, 0.7978846
        %v1891 = vmul.f32 %v1827, 0.7978846
        %v1892 = vmul.f32 %v1828, 0.7978846
        %v1893 = vmul.f32 %v1829, 0.7978846
        %v1894 = vmul.f32 %v1830, 0.7978846
        %v1895 = vmul.f32 %v1831, 0.7978846
        %v1896 = vmul.f32 %v1832, 0.7978846
        %v1897 = vmul.f32 %v1833, 0.7978846
        %v1898 = vmul.f32 %v1834, 0.7978846
        %v1899 = vmul.f32 %v1835, 0.7978846
        %v1900 = vmul.f32 %v1836, 0.7978846
        %v1901 = vmul.f32 %v1837, 0.7978846
        %v1902 = vmul.f32 %v1838, 0.7978846
        %v1903 = vmul.f32 %v1839, 0.7978846
        %v1904 = vmul.f32 %v1840, 0.7978846
        %v1905 = vmul.f32 %v1841, 0.7978846
        %v1906 = vmul.f32 %v1842, 0.7978846
        %v1907 = vmul.f32 %v1843, 0.7978846
        %v1908 = vmul.f32 %v1844, 0.7978846
        %v1909 = vmul.f32 %v1845, 0.7978846
        %v1910 = vmul.f32 %v1846, 0.7978846
        %v1911 = vmul.f32 %v1847, 0.7978846
        %v1912 = vmul.f32 %v1848, 0.7978846
        %v1913 = vmul.f32 %v1849, 0.7978846
        %v1914 = vmul.f32 %v1850, 0.7978846
        %v1915 = vmul.f32 %v1851, 0.7978846
        %v1916 = vmul.f32 %v1852, 0.7978846
        %v1917 = vmul.f32 %v1853, 0.7978846
        %v1918 = vmul.f32 %v1854, 0.7978846
        %v1919 = vmul.f32 %v1855, 0.7978846
        %v1920 = vmul.f32 %v1856, 0.7978846
        %v1921 = vmul.f32 %v1857, 0.7978846
        %v1922 = vmul.f32 %v1858, 0.7978846
        %v1923 = vmul.f32 %v1859, 0.7978846
        %v1924 = vmul.f32 %v1860, 0.7978846
        %v1925 = vmul.f32 %v1861, 0.7978846
        %v1926 = vmul.f32 %v1862, 0.7978846
        %v1927 = vmul.f32 %v1863, 0.7978846
        %v1928 = vmul.f32 %v1864, 0.7978846
        %v1929 = vmul.f32 %v1865, 0.7978846
        %v1930 = vmul.f32 %v1442, 0.5
        %v1931 = vmul.f32 %v1531, 0.5
        %v1932 = vmul.f32 %v1444, 0.5
        %v1933 = vmul.f32 %v1533, 0.5
        %v1934 = vmul.f32 %v1447, 0.5
        %v1935 = vmul.f32 %v1536, 0.5
        %v1936 = vmul.f32 %v1449, 0.5
        %v1937 = vmul.f32 %v1538, 0.5
        %v1938 = vmul.f32 %v1452, 0.5
        %v1939 = vmul.f32 %v1541, 0.5
        %v1940 = vmul.f32 %v1454, 0.5
        %v1941 = vmul.f32 %v1543, 0.5
        %v1942 = vmul.f32 %v1457, 0.5
        %v1943 = vmul.f32 %v1546, 0.5
        %v1944 = vmul.f32 %v1459, 0.5
        %v1945 = vmul.f32 %v1548, 0.5
        %v1946 = vmul.f32 %v1462, 0.5
        %v1947 = vmul.f32 %v1551, 0.5
        %v1948 = vmul.f32 %v1464, 0.5
        %v1949 = vmul.f32 %v1553, 0.5
        %v1950 = vmul.f32 %v1467, 0.5
        %v1951 = vmul.f32 %v1556, 0.5
        %v1952 = vmul.f32 %v1469, 0.5
        %v1953 = vmul.f32 %v1558, 0.5
        %v1954 = vmul.f32 %v1472, 0.5
        %v1955 = vmul.f32 %v1561, 0.5
        %v1956 = vmul.f32 %v1474, 0.5
        %v1957 = vmul.f32 %v1563, 0.5
        %v1958 = vmul.f32 %v1477, 0.5
        %v1959 = vmul.f32 %v1566, 0.5
        %v1960 = vmul.f32 %v1479, 0.5
        %v1961 = vmul.f32 %v1568, 0.5
        %v1962 = vmul.f32 %v1482, 0.5
        %v1963 = vmul.f32 %v1571, 0.5
        %v1964 = vmul.f32 %v1484, 0.5
        %v1965 = vmul.f32 %v1573, 0.5
        %v1966 = vmul.f32 %v1487, 0.5
        %v1967 = vmul.f32 %v1576, 0.5
        %v1968 = vmul.f32 %v1489, 0.5
        %v1969 = vmul.f32 %v1578, 0.5
        %v1970 = vmul.f32 %v1492, 0.5
        %v1971 = vmul.f32 %v1581, 0.5
        %v1972 = vmul.f32 %v1494, 0.5
        %v1973 = vmul.f32 %v1583, 0.5
        %v1974 = vmul.f32 %v1497, 0.5
        %v1975 = vmul.f32 %v1586, 0.5
        %v1976 = vmul.f32 %v1499, 0.5
        %v1977 = vmul.f32 %v1588, 0.5
        %v1978 = vmul.f32 %v1502, 0.5
        %v1979 = vmul.f32 %v1591, 0.5
        %v1980 = vmul.f32 %v1504, 0.5
        %v1981 = vmul.f32 %v1593, 0.5
        %v1982 = vmul.f32 %v1507, 0.5
        %v1983 = vmul.f32 %v1596, 0.5
        %v1984 = vmul.f32 %v1509, 0.5
        %v1985 = vmul.f32 %v1598, 0.5
        %v1986 = vmul.f32 %v1512, 0.5
        %v1987 = vmul.f32 %v1601, 0.5
        %v1988 = vmul.f32 %v1514, 0.5
        %v1989 = vmul.f32 %v1603, 0.5
        %v1990 = vmul.f32 %v1517, 0.5
        %v1991 = vmul.f32 %v1606, 0.5
        %v1992 = vmul.f32 %v1519, 0.5
        %v1993 = vmul.f32 %v1608, 0.5
        %v1994 = vtanh.pop %v1866
        %v1995 = vtanh.pop %v1867
        %v1996 = vtanh.pop %v1868
        %v1997 = vtanh.pop %v1869
        %v1998 = vtanh.pop %v1870
        %v1999 = vtanh.pop %v1871
        %v2000 = vtanh.pop %v1872
        %v2001 = vtanh.pop %v1873
        %v2002 = vtanh.pop %v1874
        %v2003 = vtanh.pop %v1875
        %v2004 = vtanh.pop %v1876
        %v2005 = vtanh.pop %v1877
        %v2006 = vtanh.pop %v1878
        %v2007 = vtanh.pop %v1879
        %v2008 = vtanh.pop %v1880
        %v2009 = vtanh.pop %v1881
        %v2010 = vtanh.pop %v1882
        %v2011 = vtanh.pop %v1883
        %v2012 = vtanh.pop %v1884
        %v2013 = vtanh.pop %v1885
        %v2014 = vtanh.pop %v1886
        %v2015 = vtanh.pop %v1887
        %v2016 = vtanh.pop %v1888
        %v2017 = vtanh.pop %v1889
        %v2018 = vtanh.pop %v1890
        %v2019 = vtanh.pop %v1891
        %v2020 = vtanh.pop %v1892
        %v2021 = vtanh.pop %v1893
        %v2022 = vtanh.pop %v1894
        %v2023 = vtanh.pop %v1895
        %v2024 = vtanh.pop %v1896
        %v2025 = vtanh.pop %v1897
        %v2026 = vtanh.pop %v1898
        %v2027 = vtanh.pop %v1899
        %v2028 = vtanh.pop %v1900
        %v2029 = vtanh.pop %v1901
        %v2030 = vtanh.pop %v1902
        %v2031 = vtanh.pop %v1903
        %v2032 = vtanh.pop %v1904
        %v2033 = vtanh.pop %v1905
        %v2034 = vtanh.pop %v1906
        %v2035 = vtanh.pop %v1907
        %v2036 = vtanh.pop %v1908
        %v2037 = vtanh.pop %v1909
        %v2038 = vtanh.pop %v1910
        %v2039 = vtanh.pop %v1911
        %v2040 = vtanh.pop %v1912
        %v2041 = vtanh.pop %v1913
        %v2042 = vtanh.pop %v1914
        %v2043 = vtanh.pop %v1915
        %v2044 = vtanh.pop %v1916
        %v2045 = vtanh.pop %v1917
        %v2046 = vtanh.pop %v1918
        %v2047 = vtanh.pop %v1919
        %v2048 = vtanh.pop %v1920
        %v2049 = vtanh.pop %v1921
        %v2050 = vtanh.pop %v1922
        %v2051 = vtanh.pop %v1923
        %v2052 = vtanh.pop %v1924
        %v2053 = vtanh.pop %v1925
        %v2054 = vtanh.pop %v1926
        %v2055 = vtanh.pop %v1927
        %v2056 = vtanh.pop %v1928
        %v2057 = vtanh.pop %v1929
        %v2058 = vadd.f32 %v1994, 1.0
        %v2059 = vadd.f32 %v1995, 1.0
        %v2060 = vadd.f32 %v1996, 1.0
        %v2061 = vadd.f32 %v1997, 1.0
        %v2062 = vadd.f32 %v1998, 1.0
        %v2063 = vadd.f32 %v1999, 1.0
        %v2064 = vadd.f32 %v2000, 1.0
        %v2065 = vadd.f32 %v2001, 1.0
        %v2066 = vadd.f32 %v2002, 1.0
        %v2067 = vadd.f32 %v2003, 1.0
        %v2068 = vadd.f32 %v2004, 1.0
        %v2069 = vadd.f32 %v2005, 1.0
        %v2070 = vadd.f32 %v2006, 1.0
        %v2071 = vadd.f32 %v2007, 1.0
        %v2072 = vadd.f32 %v2008, 1.0
        %v2073 = vadd.f32 %v2009, 1.0
        %v2074 = vadd.f32 %v2010, 1.0
        %v2075 = vadd.f32 %v2011, 1.0
        %v2076 = vadd.f32 %v2012, 1.0
        %v2077 = vadd.f32 %v2013, 1.0
        %v2078 = vadd.f32 %v2014, 1.0
        %v2079 = vadd.f32 %v2015, 1.0
        %v2080 = vadd.f32 %v2016, 1.0
        %v2081 = vadd.f32 %v2017, 1.0
        %v2082 = vadd.f32 %v2018, 1.0
        %v2083 = vadd.f32 %v2019, 1.0
        %v2084 = vadd.f32 %v2020, 1.0
        %v2085 = vadd.f32 %v2021, 1.0
        %v2086 = vadd.f32 %v2022, 1.0
        %v2087 = vadd.f32 %v2023, 1.0
        %v2088 = vadd.f32 %v2024, 1.0
        %v2089 = vadd.f32 %v2025, 1.0
        %v2090 = vadd.f32 %v2026, 1.0
        %v2091 = vadd.f32 %v2027, 1.0
        %v2092 = vadd.f32 %v2028, 1.0
        %v2093 = vadd.f32 %v2029, 1.0
        %v2094 = vadd.f32 %v2030, 1.0
        %v2095 = vadd.f32 %v2031, 1.0
        %v2096 = vadd.f32 %v2032, 1.0
        %v2097 = vadd.f32 %v2033, 1.0
        %v2098 = vadd.f32 %v2034, 1.0
        %v2099 = vadd.f32 %v2035, 1.0
        %v2100 = vadd.f32 %v2036, 1.0
        %v2101 = vadd.f32 %v2037, 1.0
        %v2102 = vadd.f32 %v2038, 1.0
        %v2103 = vadd.f32 %v2039, 1.0
        %v2104 = vadd.f32 %v2040, 1.0
        %v2105 = vadd.f32 %v2041, 1.0
        %v2106 = vadd.f32 %v2042, 1.0
        %v2107 = vadd.f32 %v2043, 1.0
        %v2108 = vadd.f32 %v2044, 1.0
        %v2109 = vadd.f32 %v2045, 1.0
        %v2110 = vadd.f32 %v2046, 1.0
        %v2111 = vadd.f32 %v2047, 1.0
        %v2112 = vadd.f32 %v2048, 1.0
        %v2113 = vadd.f32 %v2049, 1.0
        %v2114 = vadd.f32 %v2050, 1.0
        %v2115 = vadd.f32 %v2051, 1.0
        %v2116 = vadd.f32 %v2052, 1.0
        %v2117 = vadd.f32 %v2053, 1.0
        %v2118 = vadd.f32 %v2054, 1.0
        %v2119 = vadd.f32 %v2055, 1.0
        %v2120 = vadd.f32 %v2056, 1.0
        %v2121 = vadd.f32 %v2057, 1.0
        %v2122 = vmul.f32 %v1930, %v2058
        %v2123 = vmul.f32 %v1931, %v2059
        %v2124 = vmul.f32 %v1932, %v2060
        %v2125 = vmul.f32 %v1933, %v2061
        %v2126 = vmul.f32 %v1934, %v2062
        %v2127 = vmul.f32 %v1935, %v2063
        %v2128 = vmul.f32 %v1936, %v2064
        %v2129 = vmul.f32 %v1937, %v2065
        %v2130 = vmul.f32 %v1938, %v2066
        %v2131 = vmul.f32 %v1939, %v2067
        %v2132 = vmul.f32 %v1940, %v2068
        %v2133 = vmul.f32 %v1941, %v2069
        %v2134 = vmul.f32 %v1942, %v2070
        %v2135 = vmul.f32 %v1943, %v2071
        %v2136 = vmul.f32 %v1944, %v2072
        %v2137 = vmul.f32 %v1945, %v2073
        %v2138 = vmul.f32 %v1946, %v2074
        %v2139 = vmul.f32 %v1947, %v2075
        %v2140 = vmul.f32 %v1948, %v2076
        %v2141 = vmul.f32 %v1949, %v2077
        %v2142 = vmul.f32 %v1950, %v2078
        %v2143 = vmul.f32 %v1951, %v2079
        %v2144 = vmul.f32 %v1952, %v2080
        %v2145 = vmul.f32 %v1953, %v2081
        %v2146 = vmul.f32 %v1954, %v2082
        %v2147 = vmul.f32 %v1955, %v2083
        %v2148 = vmul.f32 %v1956, %v2084
        %v2149 = vmul.f32 %v1957, %v2085
        %v2150 = vmul.f32 %v1958, %v2086
        %v2151 = vmul.f32 %v1959, %v2087
        %v2152 = vmul.f32 %v1960, %v2088
        %v2153 = vmul.f32 %v1961, %v2089
        %v2154 = vmul.f32 %v1962, %v2090
        %v2155 = vmul.f32 %v1963, %v2091
        %v2156 = vmul.f32 %v1964, %v2092
        %v2157 = vmul.f32 %v1965, %v2093
        %v2158 = vmul.f32 %v1966, %v2094
        %v2159 = vmul.f32 %v1967, %v2095
        %v2160 = vmul.f32 %v1968, %v2096
        %v2161 = vmul.f32 %v1969, %v2097
        %v2162 = vmul.f32 %v1970, %v2098
        %v2163 = vmul.f32 %v1971, %v2099
        %v2164 = vmul.f32 %v1972, %v2100
        %v2165 = vmul.f32 %v1973, %v2101
        %v2166 = vmul.f32 %v1974, %v2102
        %v2167 = vmul.f32 %v1975, %v2103
        %v2168 = vmul.f32 %v1976, %v2104
        %v2169 = vmul.f32 %v1977, %v2105
        %v2170 = vmul.f32 %v1978, %v2106
        %v2171 = vmul.f32 %v1979, %v2107
        %v2172 = vmul.f32 %v1980, %v2108
        %v2173 = vmul.f32 %v1981, %v2109
        %v2174 = vmul.f32 %v1982, %v2110
        %v2175 = vmul.f32 %v1983, %v2111
        %v2176 = vmul.f32 %v1984, %v2112
        %v2177 = vmul.f32 %v1985, %v2113
        %v2178 = vmul.f32 %v1986, %v2114
        %v2179 = vmul.f32 %v1987, %v2115
        %v2180 = vmul.f32 %v1988, %v2116
        %v2181 = vmul.f32 %v1989, %v2117
        %v2182 = vmul.f32 %v1990, %v2118
        %v2183 = vmul.f32 %v1991, %v2119
        %v2184 = vmul.f32 %v1992, %v2120
        %v2185 = vmul.f32 %v1993, %v2121
        %v2186 = vld [vmem:[#allocation13] sm:$0xf]
        %v2187 = vld [vmem:[#allocation13 + $0x4] sm:$0xf]
        %v2188 = vld [vmem:[#allocation13 + $0x8] sm:$0xf]
        %v2189 = vld [vmem:[#allocation13 + $0xc] sm:$0xf]
        %v2190 = vld [vmem:[#allocation13 + $0x10] sm:$0xf]
        %v2191 = vld [vmem:[#allocation13 + $0x14] sm:$0xf]
        %v2192 = vld [vmem:[#allocation13 + $0x18] sm:$0xf]
        %v2193 = vld [vmem:[#allocation13 + $0x1c] sm:$0xf]
        %v2194 = vld [vmem:[#allocation13 + $0x20] sm:$0xf]
        %v2195 = vld [vmem:[#allocation13 + $0x24] sm:$0xf]
        %v2196 = vld [vmem:[#allocation13 + $0x28] sm:$0xf]
        %v2197 = vld [vmem:[#allocation13 + $0x2c] sm:$0xf]
        %v2198 = vld [vmem:[#allocation13 + $0x30] sm:$0xf]
        %v2199 = vld [vmem:[#allocation13 + $0x34] sm:$0xf]
        %v2200 = vld [vmem:[#allocation13 + $0x38] sm:$0xf]
        %v2201 = vld [vmem:[#allocation13 + $0x3c] sm:$0xf]
        %v2202 = vld [vmem:[%s9] sm:$0x1]
        %v2203 = vld [vmem:[#allocation11] sm:$0xff]
        %v2204 = vperm.slane %v2203, 0
        %v2205 = vmul.f32 %v2204, %v2122
        %v2206 = vmul.f32 %v2204, %v2124
        %v2207 = vmul.f32 %v2204, %v2126
        %v2208 = vmul.f32 %v2204, %v2128
        %v2209 = vperm.slane %v2203, 1
        %v2210 = vmul.f32 %v2209, %v2130
        %v2211 = vmul.f32 %v2209, %v2132
        %v2212 = vmul.f32 %v2209, %v2134
        %v2213 = vmul.f32 %v2209, %v2136
        %v2214 = vadd.f32 %v2205, %v2210
        %v2215 = vadd.f32 %v2206, %v2211
        %v2216 = vadd.f32 %v2207, %v2212
        %v2217 = vadd.f32 %v2208, %v2213
        %v2218 = vperm.slane %v2203, 2
        %v2219 = vmul.f32 %v2218, %v2138
        %v2220 = vmul.f32 %v2218, %v2140
        %v2221 = vmul.f32 %v2218, %v2142
        %v2222 = vmul.f32 %v2218, %v2144
        %v2223 = vadd.f32 %v2214, %v2219
        %v2224 = vadd.f32 %v2215, %v2220
        %v2225 = vadd.f32 %v2216, %v2221
        %v2226 = vadd.f32 %v2217, %v2222
        %v2227 = vperm.slane %v2203, 3
        %v2228 = vmul.f32 %v2227, %v2146
        %v2229 = vmul.f32 %v2227, %v2148
        %v2230 = vmul.f32 %v2227, %v2150
        %v2231 = vmul.f32 %v2227, %v2152
        %v2232 = vadd.f32 %v2223, %v2228
        %v2233 = vadd.f32 %v2224, %v2229
        %v2234 = vadd.f32 %v2225, %v2230
        %v2235 = vadd.f32 %v2226, %v2231
        %v2236 = vperm.slane %v2203, 4
        %v2237 = vmul.f32 %v2236, %v2154
        %v2238 = vmul.f32 %v2236, %v2156
        %v2239 = vmul.f32 %v2236, %v2158
        %v2240 = vmul.f32 %v2236, %v2160
        %v2241 = vadd.f32 %v2232, %v2237
        %v2242 = vadd.f32 %v2233, %v2238
        %v2243 = vadd.f32 %v2234, %v2239
        %v2244 = vadd.f32 %v2235, %v2240
        %v2245 = vperm.slane %v2203, 5
        %v2246 = vmul.f32 %v2245, %v2162
        %v2247 = vmul.f32 %v2245, %v2164
        %v2248 = vmul.f32 %v2245, %v2166
        %v2249 = vmul.f32 %v2245, %v2168
        %v2250 = vadd.f32 %v2241, %v2246
        %v2251 = vadd.f32 %v2242, %v2247
        %v2252 = vadd.f32 %v2243, %v2248
        %v2253 = vadd.f32 %v2244, %v2249
        %v2254 = vperm.slane %v2203, 6
        %v2255 = vmul.f32 %v2254, %v2170
        %v2256 = vmul.f32 %v2254, %v2172
        %v2257 = vmul.f32 %v2254, %v2174
        %v2258 = vmul.f32 %v2254, %v2176
        %v2259 = vadd.f32 %v2250, %v2255
        %v2260 = vadd.f32 %v2251, %v2256
        %v2261 = vadd.f32 %v2252, %v2257
        %v2262 = vadd.f32 %v2253, %v2258
        %v2263 = vperm.slane %v2203, 7
        %v2264 = vmul.f32 %v2263, %v2178
        %v2265 = vmul.f32 %v2263, %v2180
        %v2266 = vmul.f32 %v2263, %v2182
        %v2267 = vmul.f32 %v2263, %v2184
        %v2268 = vadd.f32 %v2259, %v2264
        %v2269 = vadd.f32 %v2260, %v2265
        %v2270 = vadd.f32 %v2261, %v2266
        %v2271 = vadd.f32 %v2262, %v2267
        %s2272 = sld [smem:[#allocation12]]
        %v2273 = vstv %s2272
        %v2274 = vadd.f32 %v2268, %v2273
        %v2275 = vadd.f32 %v2269, %v2273
        %v2276 = vadd.f32 %v2270, %v2273
        %v2277 = vadd.f32 %v2271, %v2273
        %v2278 = vmul.f32 %v2274, %v2123
        %v2279 = vmul.f32 %v2275, %v2125
        %v2280 = vmul.f32 %v2276, %v2127
        %v2281 = vmul.f32 %v2277, %v2129
        %v2282 = vpack.c.bf16 %v2279, %v2278
        %v2283 = vpack.c.bf16 %v2281, %v2280
        %v2285 = vperm.slane %v2202, 0
        %v2303 = vunpack.c.l.b16 %v2186
        %v2304 = vunpack.c.l.b16 %v2187
        %v2305 = vunpack.c.l.b16 %v2188
        %v2306 = vunpack.c.l.b16 %v2189
        %v2307 = vunpack.c.l.b16 %v2190
        %v2308 = vunpack.c.l.b16 %v2191
        %v2309 = vunpack.c.l.b16 %v2192
        %v2310 = vunpack.c.l.b16 %v2193
        %v2311 = vunpack.c.l.b16 %v2194
        %v2312 = vunpack.c.l.b16 %v2195
        %v2313 = vunpack.c.l.b16 %v2196
        %v2314 = vunpack.c.l.b16 %v2197
        %v2315 = vunpack.c.l.b16 %v2198
        %v2316 = vunpack.c.l.b16 %v2199
        %v2317 = vunpack.c.l.b16 %v2200
        %v2318 = vunpack.c.l.b16 %v2201
        %v2319 = vpack.c.b16 %v2304, %v2303
        %v2320 = vpack.c.b16 %v2306, %v2305
        %v2321 = vpack.c.b16 %v2308, %v2307
        %v2322 = vpack.c.b16 %v2310, %v2309
        %v2323 = vpack.c.b16 %v2312, %v2311
        %v2324 = vpack.c.b16 %v2314, %v2313
        %v2325 = vpack.c.b16 %v2316, %v2315
        %v2326 = vpack.c.b16 %v2318, %v2317
        %2335 = vmatpush.bf16.msra.mxu0 %v2326
        %2336 = vmatpush.bf16.msra.mxu0 %v2325
        %2337 = vmatpush.bf16.msra.mxu0 %v2324
        %2338 = vmatpush.bf16.msra.mxu0 %v2323
        %2339 = vmatpush.bf16.msra.mxu0 %v2322
        %2340 = vmatpush.bf16.msra.mxu0 %v2321
        %2341 = vmatpush.bf16.msra.mxu0 %v2320
        %2342 = vmatpush.bf16.msra.mxu0 %v2319
        %2343 = vmatmul.bf16.gmra.mxu0 %v2282
        %v2344 = vpop.f32.mrf.mxu0
        %v2345 = vadd.f32 %v2285, %v2344
        %v2346 = vpop.f32.mrf.mxu0
        %v2347 = vadd.f32 %v2285, %v2346
        %2348 = vmatmul.bf16.gmra.mxu0 %v2283
        %v2349 = vpop.f32.mrf.mxu0
        %v2350 = vadd.f32 %v2285, %v2349
        %v2351 = vpop.f32.mrf.mxu0
        %v2352 = vadd.f32 %v2285, %v2351
        %2353 = vdwg.mxu0
        %2354 = vst [vmem:[%s517] sm:$0xff] %v2345
        %2355 = vst [vmem:[%s517 + $0x8] sm:$0xff] %v2347
        %2356 = vst [vmem:[%s517 + $0x10] sm:$0xff] %v2350
        %2357 = vst [vmem:[%s517 + $0x18] sm:$0xff] %v2352
        %s2358 = scalar_lea.vmem [#allocation11], 8
        %v2359 = vld [vmem:[%s2358] sm:$0xff]
        %v2360 = vperm.slane %v2359, 0
        %v2361 = vmul.f32 %v2360, %v2122
        %v2362 = vmul.f32 %v2360, %v2124
        %v2363 = vmul.f32 %v2360, %v2126
        %v2364 = vmul.f32 %v2360, %v2128
        %v2365 = vperm.slane %v2359, 1
        %v2366 = vmul.f32 %v2365, %v2130
        %v2367 = vmul.f32 %v2365, %v2132
        %v2368 = vmul.f32 %v2365, %v2134
        %v2369 = vmul.f32 %v2365, %v2136
        %v2370 = vadd.f32 %v2361, %v2366
        %v2371 = vadd.f32 %v2362, %v2367
        %v2372 = vadd.f32 %v2363, %v2368
        %v2373 = vadd.f32 %v2364, %v2369
        %v2374 = vperm.slane %v2359, 2
        %v2375 = vmul.f32 %v2374, %v2138
        %v2376 = vmul.f32 %v2374, %v2140
        %v2377 = vmul.f32 %v2374, %v2142
        %v2378 = vmul.f32 %v2374, %v2144
        %v2379 = vadd.f32 %v2370, %v2375
        %v2380 = vadd.f32 %v2371, %v2376
        %v2381 = vadd.f32 %v2372, %v2377
        %v2382 = vadd.f32 %v2373, %v2378
        %v2383 = vperm.slane %v2359, 3
        %v2384 = vmul.f32 %v2383, %v2146
        %v2385 = vmul.f32 %v2383, %v2148
        %v2386 = vmul.f32 %v2383, %v2150
        %v2387 = vmul.f32 %v2383, %v2152
        %v2388 = vadd.f32 %v2379, %v2384
        %v2389 = vadd.f32 %v2380, %v2385
        %v2390 = vadd.f32 %v2381, %v2386
        %v2391 = vadd.f32 %v2382, %v2387
        %v2392 = vperm.slane %v2359, 4
        %v2393 = vmul.f32 %v2392, %v2154
        %v2394 = vmul.f32 %v2392, %v2156
        %v2395 = vmul.f32 %v2392, %v2158
        %v2396 = vmul.f32 %v2392, %v2160
        %v2397 = vadd.f32 %v2388, %v2393
        %v2398 = vadd.f32 %v2389, %v2394
        %v2399 = vadd.f32 %v2390, %v2395
        %v2400 = vadd.f32 %v2391, %v2396
        %v2401 = vperm.slane %v2359, 5
        %v2402 = vmul.f32 %v2401, %v2162
        %v2403 = vmul.f32 %v2401, %v2164
        %v2404 = vmul.f32 %v2401, %v2166
        %v2405 = vmul.f32 %v2401, %v2168
        %v2406 = vadd.f32 %v2397, %v2402
        %v2407 = vadd.f32 %v2398, %v2403
        %v2408 = vadd.f32 %v2399, %v2404
        %v2409 = vadd.f32 %v2400, %v2405
        %v2410 = vperm.slane %v2359, 6
        %v2411 = vmul.f32 %v2410, %v2170
        %v2412 = vmul.f32 %v2410, %v2172
        %v2413 = vmul.f32 %v2410, %v2174
        %v2414 = vmul.f32 %v2410, %v2176
        %v2415 = vadd.f32 %v2406, %v2411
        %v2416 = vadd.f32 %v2407, %v2412
        %v2417 = vadd.f32 %v2408, %v2413
        %v2418 = vadd.f32 %v2409, %v2414
        %v2419 = vperm.slane %v2359, 7
        %v2420 = vmul.f32 %v2419, %v2178
        %v2421 = vmul.f32 %v2419, %v2180
        %v2422 = vmul.f32 %v2419, %v2182
        %v2423 = vmul.f32 %v2419, %v2184
        %v2424 = vadd.f32 %v2415, %v2420
        %v2425 = vadd.f32 %v2416, %v2421
        %v2426 = vadd.f32 %v2417, %v2422
        %v2427 = vadd.f32 %v2418, %v2423
        %s2428 = sld [smem:[#allocation12 + $0x1]]
        %v2429 = vstv %s2428
        %v2430 = vadd.f32 %v2424, %v2429
        %v2431 = vadd.f32 %v2425, %v2429
        %v2432 = vadd.f32 %v2426, %v2429
        %v2433 = vadd.f32 %v2427, %v2429
        %v2434 = vmul.f32 %v2430, %v2131
        %v2435 = vmul.f32 %v2431, %v2133
        %v2436 = vmul.f32 %v2432, %v2135
        %v2437 = vmul.f32 %v2433, %v2137
        %v2438 = vpack.c.bf16 %v2435, %v2434
        %v2439 = vpack.c.bf16 %v2437, %v2436
        %2440 = vmatpush.bf16.msra.mxu0 %v2326
        %2441 = vmatpush.bf16.msra.mxu0 %v2325
        %2442 = vmatpush.bf16.msra.mxu0 %v2324
        %2443 = vmatpush.bf16.msra.mxu0 %v2323
        %2444 = vmatpush.bf16.msra.mxu0 %v2322
        %2445 = vmatpush.bf16.msra.mxu0 %v2321
        %2446 = vmatpush.bf16.msra.mxu0 %v2320
        %2447 = vmatpush.bf16.msra.mxu0 %v2319
        %2448 = vmatmul.bf16.gmra.mxu0 %v2438
        %v2449 = vpop.f32.mrf.mxu0
        %v2450 = vadd.f32 %v2285, %v2449
        %v2451 = vpop.f32.mrf.mxu0
        %v2452 = vadd.f32 %v2285, %v2451
        %2453 = vmatmul.bf16.gmra.mxu0 %v2439
        %v2454 = vpop.f32.mrf.mxu0
        %v2455 = vadd.f32 %v2285, %v2454
        %v2456 = vpop.f32.mrf.mxu0
        %v2457 = vadd.f32 %v2285, %v2456
        %2458 = vdwg.mxu0
        %s2459 = scalar_lea.vmem %s517, 32 [#allocation15]
        %2460 = vst [vmem:[%s2459] sm:$0xff] %v2450
        %2461 = vst [vmem:[%s2459 + $0x8] sm:$0xff] %v2452
        %2462 = vst [vmem:[%s2459 + $0x10] sm:$0xff] %v2455
        %2463 = vst [vmem:[%s2459 + $0x18] sm:$0xff] %v2457
        %s2464 = scalar_lea.vmem [#allocation11], 16
        %v2465 = vld [vmem:[%s2464] sm:$0xff]
        %v2466 = vperm.slane %v2465, 0
        %v2467 = vmul.f32 %v2466, %v2122
        %v2468 = vmul.f32 %v2466, %v2124
        %v2469 = vmul.f32 %v2466, %v2126
        %v2470 = vmul.f32 %v2466, %v2128
        %v2471 = vperm.slane %v2465, 1
        %v2472 = vmul.f32 %v2471, %v2130
        %v2473 = vmul.f32 %v2471, %v2132
        %v2474 = vmul.f32 %v2471, %v2134
        %v2475 = vmul.f32 %v2471, %v2136
        %v2476 = vadd.f32 %v2467, %v2472
        %v2477 = vadd.f32 %v2468, %v2473
        %v2478 = vadd.f32 %v2469, %v2474
        %v2479 = vadd.f32 %v2470, %v2475
        %v2480 = vperm.slane %v2465, 2
        %v2481 = vmul.f32 %v2480, %v2138
        %v2482 = vmul.f32 %v2480, %v2140
        %v2483 = vmul.f32 %v2480, %v2142
        %v2484 = vmul.f32 %v2480, %v2144
        %v2485 = vadd.f32 %v2476, %v2481
        %v2486 = vadd.f32 %v2477, %v2482
        %v2487 = vadd.f32 %v2478, %v2483
        %v2488 = vadd.f32 %v2479, %v2484
        %v2489 = vperm.slane %v2465, 3
        %v2490 = vmul.f32 %v2489, %v2146
        %v2491 = vmul.f32 %v2489, %v2148
        %v2492 = vmul.f32 %v2489, %v2150
        %v2493 = vmul.f32 %v2489, %v2152
        %v2494 = vadd.f32 %v2485, %v2490
        %v2495 = vadd.f32 %v2486, %v2491
        %v2496 = vadd.f32 %v2487, %v2492
        %v2497 = vadd.f32 %v2488, %v2493
        %v2498 = vperm.slane %v2465, 4
        %v2499 = vmul.f32 %v2498, %v2154
        %v2500 = vmul.f32 %v2498, %v2156
        %v2501 = vmul.f32 %v2498, %v2158
        %v2502 = vmul.f32 %v2498, %v2160
        %v2503 = vadd.f32 %v2494, %v2499
        %v2504 = vadd.f32 %v2495, %v2500
        %v2505 = vadd.f32 %v2496, %v2501
        %v2506 = vadd.f32 %v2497, %v2502
        %v2507 = vperm.slane %v2465, 5
        %v2508 = vmul.f32 %v2507, %v2162
        %v2509 = vmul.f32 %v2507, %v2164
        %v2510 = vmul.f32 %v2507, %v2166
        %v2511 = vmul.f32 %v2507, %v2168
        %v2512 = vadd.f32 %v2503, %v2508
        %v2513 = vadd.f32 %v2504, %v2509
        %v2514 = vadd.f32 %v2505, %v2510
        %v2515 = vadd.f32 %v2506, %v2511
        %v2516 = vperm.slane %v2465, 6
        %v2517 = vmul.f32 %v2516, %v2170
        %v2518 = vmul.f32 %v2516, %v2172
        %v2519 = vmul.f32 %v2516, %v2174
        %v2520 = vmul.f32 %v2516, %v2176
        %v2521 = vadd.f32 %v2512, %v2517
        %v2522 = vadd.f32 %v2513, %v2518
        %v2523 = vadd.f32 %v2514, %v2519
        %v2524 = vadd.f32 %v2515, %v2520
        %v2525 = vperm.slane %v2465, 7
        %v2526 = vmul.f32 %v2525, %v2178
        %v2527 = vmul.f32 %v2525, %v2180
        %v2528 = vmul.f32 %v2525, %v2182
        %v2529 = vmul.f32 %v2525, %v2184
        %v2530 = vadd.f32 %v2521, %v2526
        %v2531 = vadd.f32 %v2522, %v2527
        %v2532 = vadd.f32 %v2523, %v2528
        %v2533 = vadd.f32 %v2524, %v2529
        %s2534 = sld [smem:[#allocation12 + $0x2]]
        %v2535 = vstv %s2534
        %v2536 = vadd.f32 %v2530, %v2535
        %v2537 = vadd.f32 %v2531, %v2535
        %v2538 = vadd.f32 %v2532, %v2535
        %v2539 = vadd.f32 %v2533, %v2535
        %v2540 = vmul.f32 %v2536, %v2139
        %v2541 = vmul.f32 %v2537, %v2141
        %v2542 = vmul.f32 %v2538, %v2143
        %v2543 = vmul.f32 %v2539, %v2145
        %v2544 = vpack.c.bf16 %v2541, %v2540
        %v2545 = vpack.c.bf16 %v2543, %v2542
        %2546 = vmatpush.bf16.msra.mxu0 %v2326
        %2547 = vmatpush.bf16.msra.mxu0 %v2325
        %2548 = vmatpush.bf16.msra.mxu0 %v2324
        %2549 = vmatpush.bf16.msra.mxu0 %v2323
        %2550 = vmatpush.bf16.msra.mxu0 %v2322
        %2551 = vmatpush.bf16.msra.mxu0 %v2321
        %2552 = vmatpush.bf16.msra.mxu0 %v2320
        %2553 = vmatpush.bf16.msra.mxu0 %v2319
        %2554 = vmatmul.bf16.gmra.mxu0 %v2544
        %v2555 = vpop.f32.mrf.mxu0
        %v2556 = vadd.f32 %v2285, %v2555
        %v2557 = vpop.f32.mrf.mxu0
        %v2558 = vadd.f32 %v2285, %v2557
        %2559 = vmatmul.bf16.gmra.mxu0 %v2545
        %v2560 = vpop.f32.mrf.mxu0
        %v2561 = vadd.f32 %v2285, %v2560
        %v2562 = vpop.f32.mrf.mxu0
        %v2563 = vadd.f32 %v2285, %v2562
        %2564 = vdwg.mxu0
        %s2565 = scalar_lea.vmem %s517, 64 [#allocation15]
        %2566 = vst [vmem:[%s2565] sm:$0xff] %v2556
        %2567 = vst [vmem:[%s2565 + $0x8] sm:$0xff] %v2558
        %2568 = vst [vmem:[%s2565 + $0x10] sm:$0xff] %v2561
        %2569 = vst [vmem:[%s2565 + $0x18] sm:$0xff] %v2563
        %s2570 = scalar_lea.vmem [#allocation11], 24
        %v2571 = vld [vmem:[%s2570] sm:$0xff]
        %v2572 = vperm.slane %v2571, 0
        %v2573 = vmul.f32 %v2572, %v2122
        %v2574 = vmul.f32 %v2572, %v2124
        %v2575 = vmul.f32 %v2572, %v2126
        %v2576 = vmul.f32 %v2572, %v2128
        %v2577 = vperm.slane %v2571, 1
        %v2578 = vmul.f32 %v2577, %v2130
        %v2579 = vmul.f32 %v2577, %v2132
        %v2580 = vmul.f32 %v2577, %v2134
        %v2581 = vmul.f32 %v2577, %v2136
        %v2582 = vadd.f32 %v2573, %v2578
        %v2583 = vadd.f32 %v2574, %v2579
        %v2584 = vadd.f32 %v2575, %v2580
        %v2585 = vadd.f32 %v2576, %v2581
        %v2586 = vperm.slane %v2571, 2
        %v2587 = vmul.f32 %v2586, %v2138
        %v2588 = vmul.f32 %v2586, %v2140
        %v2589 = vmul.f32 %v2586, %v2142
        %v2590 = vmul.f32 %v2586, %v2144
        %v2591 = vadd.f32 %v2582, %v2587
        %v2592 = vadd.f32 %v2583, %v2588
        %v2593 = vadd.f32 %v2584, %v2589
        %v2594 = vadd.f32 %v2585, %v2590
        %v2595 = vperm.slane %v2571, 3
        %v2596 = vmul.f32 %v2595, %v2146
        %v2597 = vmul.f32 %v2595, %v2148
        %v2598 = vmul.f32 %v2595, %v2150
        %v2599 = vmul.f32 %v2595, %v2152
        %v2600 = vadd.f32 %v2591, %v2596
        %v2601 = vadd.f32 %v2592, %v2597
        %v2602 = vadd.f32 %v2593, %v2598
        %v2603 = vadd.f32 %v2594, %v2599
        %v2604 = vperm.slane %v2571, 4
        %v2605 = vmul.f32 %v2604, %v2154
        %v2606 = vmul.f32 %v2604, %v2156
        %v2607 = vmul.f32 %v2604, %v2158
        %v2608 = vmul.f32 %v2604, %v2160
        %v2609 = vadd.f32 %v2600, %v2605
        %v2610 = vadd.f32 %v2601, %v2606
        %v2611 = vadd.f32 %v2602, %v2607
        %v2612 = vadd.f32 %v2603, %v2608
        %v2613 = vperm.slane %v2571, 5
        %v2614 = vmul.f32 %v2613, %v2162
        %v2615 = vmul.f32 %v2613, %v2164
        %v2616 = vmul.f32 %v2613, %v2166
        %v2617 = vmul.f32 %v2613, %v2168
        %v2618 = vadd.f32 %v2609, %v2614
        %v2619 = vadd.f32 %v2610, %v2615
        %v2620 = vadd.f32 %v2611, %v2616
        %v2621 = vadd.f32 %v2612, %v2617
        %v2622 = vperm.slane %v2571, 6
        %v2623 = vmul.f32 %v2622, %v2170
        %v2624 = vmul.f32 %v2622, %v2172
        %v2625 = vmul.f32 %v2622, %v2174
        %v2626 = vmul.f32 %v2622, %v2176
        %v2627 = vadd.f32 %v2618, %v2623
        %v2628 = vadd.f32 %v2619, %v2624
        %v2629 = vadd.f32 %v2620, %v2625
        %v2630 = vadd.f32 %v2621, %v2626
        %v2631 = vperm.slane %v2571, 7
        %v2632 = vmul.f32 %v2631, %v2178
        %v2633 = vmul.f32 %v2631, %v2180
        %v2634 = vmul.f32 %v2631, %v2182
        %v2635 = vmul.f32 %v2631, %v2184
        %v2636 = vadd.f32 %v2627, %v2632
        %v2637 = vadd.f32 %v2628, %v2633
        %v2638 = vadd.f32 %v2629, %v2634
        %v2639 = vadd.f32 %v2630, %v2635
        %s2640 = sld [smem:[#allocation12 + $0x3]]
        %v2641 = vstv %s2640
        %v2642 = vadd.f32 %v2636, %v2641
        %v2643 = vadd.f32 %v2637, %v2641
        %v2644 = vadd.f32 %v2638, %v2641
        %v2645 = vadd.f32 %v2639, %v2641
        %v2646 = vmul.f32 %v2642, %v2147
        %v2647 = vmul.f32 %v2643, %v2149
        %v2648 = vmul.f32 %v2644, %v2151
        %v2649 = vmul.f32 %v2645, %v2153
        %v2650 = vpack.c.bf16 %v2647, %v2646
        %v2651 = vpack.c.bf16 %v2649, %v2648
        %2652 = vmatpush.bf16.msra.mxu0 %v2326
        %2653 = vmatpush.bf16.msra.mxu0 %v2325
        %2654 = vmatpush.bf16.msra.mxu0 %v2324
        %2655 = vmatpush.bf16.msra.mxu0 %v2323
        %2656 = vmatpush.bf16.msra.mxu0 %v2322
        %2657 = vmatpush.bf16.msra.mxu0 %v2321
        %2658 = vmatpush.bf16.msra.mxu0 %v2320
        %2659 = vmatpush.bf16.msra.mxu0 %v2319
        %2660 = vmatmul.bf16.gmra.mxu0 %v2650
        %v2661 = vpop.f32.mrf.mxu0
        %v2662 = vadd.f32 %v2285, %v2661
        %v2663 = vpop.f32.mrf.mxu0
        %v2664 = vadd.f32 %v2285, %v2663
        %2665 = vmatmul.bf16.gmra.mxu0 %v2651
        %v2666 = vpop.f32.mrf.mxu0
        %v2667 = vadd.f32 %v2285, %v2666
        %v2668 = vpop.f32.mrf.mxu0
        %v2669 = vadd.f32 %v2285, %v2668
        %2670 = vdwg.mxu0
        %s2671 = scalar_lea.vmem %s517, 96 [#allocation15]
        %2672 = vst [vmem:[%s2671] sm:$0xff] %v2662
        %2673 = vst [vmem:[%s2671 + $0x8] sm:$0xff] %v2664
        %2674 = vst [vmem:[%s2671 + $0x10] sm:$0xff] %v2667
        %2675 = vst [vmem:[%s2671 + $0x18] sm:$0xff] %v2669
        %s2676 = scalar_lea.vmem [#allocation11], 32
        %v2677 = vld [vmem:[%s2676] sm:$0xff]
        %v2678 = vperm.slane %v2677, 0
        %v2679 = vmul.f32 %v2678, %v2122
        %v2680 = vmul.f32 %v2678, %v2124
        %v2681 = vmul.f32 %v2678, %v2126
        %v2682 = vmul.f32 %v2678, %v2128
        %v2683 = vperm.slane %v2677, 1
        %v2684 = vmul.f32 %v2683, %v2130
        %v2685 = vmul.f32 %v2683, %v2132
        %v2686 = vmul.f32 %v2683, %v2134
        %v2687 = vmul.f32 %v2683, %v2136
        %v2688 = vadd.f32 %v2679, %v2684
        %v2689 = vadd.f32 %v2680, %v2685
        %v2690 = vadd.f32 %v2681, %v2686
        %v2691 = vadd.f32 %v2682, %v2687
        %v2692 = vperm.slane %v2677, 2
        %v2693 = vmul.f32 %v2692, %v2138
        %v2694 = vmul.f32 %v2692, %v2140
        %v2695 = vmul.f32 %v2692, %v2142
        %v2696 = vmul.f32 %v2692, %v2144
        %v2697 = vadd.f32 %v2688, %v2693
        %v2698 = vadd.f32 %v2689, %v2694
        %v2699 = vadd.f32 %v2690, %v2695
        %v2700 = vadd.f32 %v2691, %v2696
        %v2701 = vperm.slane %v2677, 3
        %v2702 = vmul.f32 %v2701, %v2146
        %v2703 = vmul.f32 %v2701, %v2148
        %v2704 = vmul.f32 %v2701, %v2150
        %v2705 = vmul.f32 %v2701, %v2152
        %v2706 = vadd.f32 %v2697, %v2702
        %v2707 = vadd.f32 %v2698, %v2703
        %v2708 = vadd.f32 %v2699, %v2704
        %v2709 = vadd.f32 %v2700, %v2705
        %v2710 = vperm.slane %v2677, 4
        %v2711 = vmul.f32 %v2710, %v2154
        %v2712 = vmul.f32 %v2710, %v2156
        %v2713 = vmul.f32 %v2710, %v2158
        %v2714 = vmul.f32 %v2710, %v2160
        %v2715 = vadd.f32 %v2706, %v2711
        %v2716 = vadd.f32 %v2707, %v2712
        %v2717 = vadd.f32 %v2708, %v2713
        %v2718 = vadd.f32 %v2709, %v2714
        %v2719 = vperm.slane %v2677, 5
        %v2720 = vmul.f32 %v2719, %v2162
        %v2721 = vmul.f32 %v2719, %v2164
        %v2722 = vmul.f32 %v2719, %v2166
        %v2723 = vmul.f32 %v2719, %v2168
        %v2724 = vadd.f32 %v2715, %v2720
        %v2725 = vadd.f32 %v2716, %v2721
        %v2726 = vadd.f32 %v2717, %v2722
        %v2727 = vadd.f32 %v2718, %v2723
        %v2728 = vperm.slane %v2677, 6
        %v2729 = vmul.f32 %v2728, %v2170
        %v2730 = vmul.f32 %v2728, %v2172
        %v2731 = vmul.f32 %v2728, %v2174
        %v2732 = vmul.f32 %v2728, %v2176
        %v2733 = vadd.f32 %v2724, %v2729
        %v2734 = vadd.f32 %v2725, %v2730
        %v2735 = vadd.f32 %v2726, %v2731
        %v2736 = vadd.f32 %v2727, %v2732
        %v2737 = vperm.slane %v2677, 7
        %v2738 = vmul.f32 %v2737, %v2178
        %v2739 = vmul.f32 %v2737, %v2180
        %v2740 = vmul.f32 %v2737, %v2182
        %v2741 = vmul.f32 %v2737, %v2184
        %v2742 = vadd.f32 %v2733, %v2738
        %v2743 = vadd.f32 %v2734, %v2739
        %v2744 = vadd.f32 %v2735, %v2740
        %v2745 = vadd.f32 %v2736, %v2741
        %s2746 = sld [smem:[#allocation12 + $0x4]]
        %v2747 = vstv %s2746
        %v2748 = vadd.f32 %v2742, %v2747
        %v2749 = vadd.f32 %v2743, %v2747
        %v2750 = vadd.f32 %v2744, %v2747
        %v2751 = vadd.f32 %v2745, %v2747
        %v2752 = vmul.f32 %v2748, %v2155
        %v2753 = vmul.f32 %v2749, %v2157
        %v2754 = vmul.f32 %v2750, %v2159
        %v2755 = vmul.f32 %v2751, %v2161
        %v2756 = vpack.c.bf16 %v2753, %v2752
        %v2757 = vpack.c.bf16 %v2755, %v2754
        %2758 = vmatpush.bf16.msra.mxu0 %v2326
        %2759 = vmatpush.bf16.msra.mxu0 %v2325
        %2760 = vmatpush.bf16.msra.mxu0 %v2324
        %2761 = vmatpush.bf16.msra.mxu0 %v2323
        %2762 = vmatpush.bf16.msra.mxu0 %v2322
        %2763 = vmatpush.bf16.msra.mxu0 %v2321
        %2764 = vmatpush.bf16.msra.mxu0 %v2320
        %2765 = vmatpush.bf16.msra.mxu0 %v2319
        %2766 = vmatmul.bf16.gmra.mxu0 %v2756
        %v2767 = vpop.f32.mrf.mxu0
        %v2768 = vadd.f32 %v2285, %v2767
        %v2769 = vpop.f32.mrf.mxu0
        %v2770 = vadd.f32 %v2285, %v2769
        %2771 = vmatmul.bf16.gmra.mxu0 %v2757
        %v2772 = vpop.f32.mrf.mxu0
        %v2773 = vadd.f32 %v2285, %v2772
        %v2774 = vpop.f32.mrf.mxu0
        %v2775 = vadd.f32 %v2285, %v2774
        %2776 = vdwg.mxu0
        %s2777 = scalar_lea.vmem %s517, 128 [#allocation15]
        %2778 = vst [vmem:[%s2777] sm:$0xff] %v2768
        %2779 = vst [vmem:[%s2777 + $0x8] sm:$0xff] %v2770
        %2780 = vst [vmem:[%s2777 + $0x10] sm:$0xff] %v2773
        %2781 = vst [vmem:[%s2777 + $0x18] sm:$0xff] %v2775
        %s2782 = scalar_lea.vmem [#allocation11], 40
        %v2783 = vld [vmem:[%s2782] sm:$0xff]
        %v2784 = vperm.slane %v2783, 0
        %v2785 = vmul.f32 %v2784, %v2122
        %v2786 = vmul.f32 %v2784, %v2124
        %v2787 = vmul.f32 %v2784, %v2126
        %v2788 = vmul.f32 %v2784, %v2128
        %v2789 = vperm.slane %v2783, 1
        %v2790 = vmul.f32 %v2789, %v2130
        %v2791 = vmul.f32 %v2789, %v2132
        %v2792 = vmul.f32 %v2789, %v2134
        %v2793 = vmul.f32 %v2789, %v2136
        %v2794 = vadd.f32 %v2785, %v2790
        %v2795 = vadd.f32 %v2786, %v2791
        %v2796 = vadd.f32 %v2787, %v2792
        %v2797 = vadd.f32 %v2788, %v2793
        %v2798 = vperm.slane %v2783, 2
        %v2799 = vmul.f32 %v2798, %v2138
        %v2800 = vmul.f32 %v2798, %v2140
        %v2801 = vmul.f32 %v2798, %v2142
        %v2802 = vmul.f32 %v2798, %v2144
        %v2803 = vadd.f32 %v2794, %v2799
        %v2804 = vadd.f32 %v2795, %v2800
        %v2805 = vadd.f32 %v2796, %v2801
        %v2806 = vadd.f32 %v2797, %v2802
        %v2807 = vperm.slane %v2783, 3
        %v2808 = vmul.f32 %v2807, %v2146
        %v2809 = vmul.f32 %v2807, %v2148
        %v2810 = vmul.f32 %v2807, %v2150
        %v2811 = vmul.f32 %v2807, %v2152
        %v2812 = vadd.f32 %v2803, %v2808
        %v2813 = vadd.f32 %v2804, %v2809
        %v2814 = vadd.f32 %v2805, %v2810
        %v2815 = vadd.f32 %v2806, %v2811
        %v2816 = vperm.slane %v2783, 4
        %v2817 = vmul.f32 %v2816, %v2154
        %v2818 = vmul.f32 %v2816, %v2156
        %v2819 = vmul.f32 %v2816, %v2158
        %v2820 = vmul.f32 %v2816, %v2160
        %v2821 = vadd.f32 %v2812, %v2817
        %v2822 = vadd.f32 %v2813, %v2818
        %v2823 = vadd.f32 %v2814, %v2819
        %v2824 = vadd.f32 %v2815, %v2820
        %v2825 = vperm.slane %v2783, 5
        %v2826 = vmul.f32 %v2825, %v2162
        %v2827 = vmul.f32 %v2825, %v2164
        %v2828 = vmul.f32 %v2825, %v2166
        %v2829 = vmul.f32 %v2825, %v2168
        %v2830 = vadd.f32 %v2821, %v2826
        %v2831 = vadd.f32 %v2822, %v2827
        %v2832 = vadd.f32 %v2823, %v2828
        %v2833 = vadd.f32 %v2824, %v2829
        %v2834 = vperm.slane %v2783, 6
        %v2835 = vmul.f32 %v2834, %v2170
        %v2836 = vmul.f32 %v2834, %v2172
        %v2837 = vmul.f32 %v2834, %v2174
        %v2838 = vmul.f32 %v2834, %v2176
        %v2839 = vadd.f32 %v2830, %v2835
        %v2840 = vadd.f32 %v2831, %v2836
        %v2841 = vadd.f32 %v2832, %v2837
        %v2842 = vadd.f32 %v2833, %v2838
        %v2843 = vperm.slane %v2783, 7
        %v2844 = vmul.f32 %v2843, %v2178
        %v2845 = vmul.f32 %v2843, %v2180
        %v2846 = vmul.f32 %v2843, %v2182
        %v2847 = vmul.f32 %v2843, %v2184
        %v2848 = vadd.f32 %v2839, %v2844
        %v2849 = vadd.f32 %v2840, %v2845
        %v2850 = vadd.f32 %v2841, %v2846
        %v2851 = vadd.f32 %v2842, %v2847
        %s2852 = sld [smem:[#allocation12 + $0x5]]
        %v2853 = vstv %s2852
        %v2854 = vadd.f32 %v2848, %v2853
        %v2855 = vadd.f32 %v2849, %v2853
        %v2856 = vadd.f32 %v2850, %v2853
        %v2857 = vadd.f32 %v2851, %v2853
        %v2858 = vmul.f32 %v2854, %v2163
        %v2859 = vmul.f32 %v2855, %v2165
        %v2860 = vmul.f32 %v2856, %v2167
        %v2861 = vmul.f32 %v2857, %v2169
        %v2862 = vpack.c.bf16 %v2859, %v2858
        %v2863 = vpack.c.bf16 %v2861, %v2860
        %2864 = vmatpush.bf16.msra.mxu0 %v2326
        %2865 = vmatpush.bf16.msra.mxu0 %v2325
        %2866 = vmatpush.bf16.msra.mxu0 %v2324
        %2867 = vmatpush.bf16.msra.mxu0 %v2323
        %2868 = vmatpush.bf16.msra.mxu0 %v2322
        %2869 = vmatpush.bf16.msra.mxu0 %v2321
        %2870 = vmatpush.bf16.msra.mxu0 %v2320
        %2871 = vmatpush.bf16.msra.mxu0 %v2319
        %2872 = vmatmul.bf16.gmra.mxu0 %v2862
        %v2873 = vpop.f32.mrf.mxu0
        %v2874 = vadd.f32 %v2285, %v2873
        %v2875 = vpop.f32.mrf.mxu0
        %v2876 = vadd.f32 %v2285, %v2875
        %2877 = vmatmul.bf16.gmra.mxu0 %v2863
        %v2878 = vpop.f32.mrf.mxu0
        %v2879 = vadd.f32 %v2285, %v2878
        %v2880 = vpop.f32.mrf.mxu0
        %v2881 = vadd.f32 %v2285, %v2880
        %2882 = vdwg.mxu0
        %s2883 = scalar_lea.vmem %s517, 160 [#allocation15]
        %2884 = vst [vmem:[%s2883] sm:$0xff] %v2874
        %2885 = vst [vmem:[%s2883 + $0x8] sm:$0xff] %v2876
        %2886 = vst [vmem:[%s2883 + $0x10] sm:$0xff] %v2879
        %2887 = vst [vmem:[%s2883 + $0x18] sm:$0xff] %v2881
        %s2888 = scalar_lea.vmem [#allocation11], 48
        %v2889 = vld [vmem:[%s2888] sm:$0xff]
        %v2890 = vperm.slane %v2889, 0
        %v2891 = vmul.f32 %v2890, %v2122
        %v2892 = vmul.f32 %v2890, %v2124
        %v2893 = vmul.f32 %v2890, %v2126
        %v2894 = vmul.f32 %v2890, %v2128
        %v2895 = vperm.slane %v2889, 1
        %v2896 = vmul.f32 %v2895, %v2130
        %v2897 = vmul.f32 %v2895, %v2132
        %v2898 = vmul.f32 %v2895, %v2134
        %v2899 = vmul.f32 %v2895, %v2136
        %v2900 = vadd.f32 %v2891, %v2896
        %v2901 = vadd.f32 %v2892, %v2897
        %v2902 = vadd.f32 %v2893, %v2898
        %v2903 = vadd.f32 %v2894, %v2899
        %v2904 = vperm.slane %v2889, 2
        %v2905 = vmul.f32 %v2904, %v2138
        %v2906 = vmul.f32 %v2904, %v2140
        %v2907 = vmul.f32 %v2904, %v2142
        %v2908 = vmul.f32 %v2904, %v2144
        %v2909 = vadd.f32 %v2900, %v2905
        %v2910 = vadd.f32 %v2901, %v2906
        %v2911 = vadd.f32 %v2902, %v2907
        %v2912 = vadd.f32 %v2903, %v2908
        %v2913 = vperm.slane %v2889, 3
        %v2914 = vmul.f32 %v2913, %v2146
        %v2915 = vmul.f32 %v2913, %v2148
        %v2916 = vmul.f32 %v2913, %v2150
        %v2917 = vmul.f32 %v2913, %v2152
        %v2918 = vadd.f32 %v2909, %v2914
        %v2919 = vadd.f32 %v2910, %v2915
        %v2920 = vadd.f32 %v2911, %v2916
        %v2921 = vadd.f32 %v2912, %v2917
        %v2922 = vperm.slane %v2889, 4
        %v2923 = vmul.f32 %v2922, %v2154
        %v2924 = vmul.f32 %v2922, %v2156
        %v2925 = vmul.f32 %v2922, %v2158
        %v2926 = vmul.f32 %v2922, %v2160
        %v2927 = vadd.f32 %v2918, %v2923
        %v2928 = vadd.f32 %v2919, %v2924
        %v2929 = vadd.f32 %v2920, %v2925
        %v2930 = vadd.f32 %v2921, %v2926
        %v2931 = vperm.slane %v2889, 5
        %v2932 = vmul.f32 %v2931, %v2162
        %v2933 = vmul.f32 %v2931, %v2164
        %v2934 = vmul.f32 %v2931, %v2166
        %v2935 = vmul.f32 %v2931, %v2168
        %v2936 = vadd.f32 %v2927, %v2932
        %v2937 = vadd.f32 %v2928, %v2933
        %v2938 = vadd.f32 %v2929, %v2934
        %v2939 = vadd.f32 %v2930, %v2935
        %v2940 = vperm.slane %v2889, 6
        %v2941 = vmul.f32 %v2940, %v2170
        %v2942 = vmul.f32 %v2940, %v2172
        %v2943 = vmul.f32 %v2940, %v2174
        %v2944 = vmul.f32 %v2940, %v2176
        %v2945 = vadd.f32 %v2936, %v2941
        %v2946 = vadd.f32 %v2937, %v2942
        %v2947 = vadd.f32 %v2938, %v2943
        %v2948 = vadd.f32 %v2939, %v2944
        %v2949 = vperm.slane %v2889, 7
        %v2950 = vmul.f32 %v2949, %v2178
        %v2951 = vmul.f32 %v2949, %v2180
        %v2952 = vmul.f32 %v2949, %v2182
        %v2953 = vmul.f32 %v2949, %v2184
        %v2954 = vadd.f32 %v2945, %v2950
        %v2955 = vadd.f32 %v2946, %v2951
        %v2956 = vadd.f32 %v2947, %v2952
        %v2957 = vadd.f32 %v2948, %v2953
        %s2958 = sld [smem:[#allocation12 + $0x6]]
        %v2959 = vstv %s2958
        %v2960 = vadd.f32 %v2954, %v2959
        %v2961 = vadd.f32 %v2955, %v2959
        %v2962 = vadd.f32 %v2956, %v2959
        %v2963 = vadd.f32 %v2957, %v2959
        %v2964 = vmul.f32 %v2960, %v2171
        %v2965 = vmul.f32 %v2961, %v2173
        %v2966 = vmul.f32 %v2962, %v2175
        %v2967 = vmul.f32 %v2963, %v2177
        %v2968 = vpack.c.bf16 %v2965, %v2964
        %v2969 = vpack.c.bf16 %v2967, %v2966
        %2970 = vmatpush.bf16.msra.mxu0 %v2326
        %2971 = vmatpush.bf16.msra.mxu0 %v2325
        %2972 = vmatpush.bf16.msra.mxu0 %v2324
        %2973 = vmatpush.bf16.msra.mxu0 %v2323
        %2974 = vmatpush.bf16.msra.mxu0 %v2322
        %2975 = vmatpush.bf16.msra.mxu0 %v2321
        %2976 = vmatpush.bf16.msra.mxu0 %v2320
        %2977 = vmatpush.bf16.msra.mxu0 %v2319
        %2978 = vmatmul.bf16.gmra.mxu0 %v2968
        %v2979 = vpop.f32.mrf.mxu0
        %v2980 = vadd.f32 %v2285, %v2979
        %v2981 = vpop.f32.mrf.mxu0
        %v2982 = vadd.f32 %v2285, %v2981
        %2983 = vmatmul.bf16.gmra.mxu0 %v2969
        %v2984 = vpop.f32.mrf.mxu0
        %v2985 = vadd.f32 %v2285, %v2984
        %v2986 = vpop.f32.mrf.mxu0
        %v2987 = vadd.f32 %v2285, %v2986
        %2988 = vdwg.mxu0
        %s2989 = scalar_lea.vmem %s517, 192 [#allocation15]
        %2990 = vst [vmem:[%s2989] sm:$0xff] %v2980
        %2991 = vst [vmem:[%s2989 + $0x8] sm:$0xff] %v2982
        %2992 = vst [vmem:[%s2989 + $0x10] sm:$0xff] %v2985
        %2993 = vst [vmem:[%s2989 + $0x18] sm:$0xff] %v2987
        %s2994 = scalar_lea.vmem [#allocation11], 56
        %v2995 = vld [vmem:[%s2994] sm:$0xff]
        %v2996 = vperm.slane %v2995, 0
        %v2997 = vmul.f32 %v2996, %v2122
        %v2998 = vmul.f32 %v2996, %v2124
        %v2999 = vmul.f32 %v2996, %v2126
        %v3000 = vmul.f32 %v2996, %v2128
        %v3001 = vperm.slane %v2995, 1
        %v3002 = vmul.f32 %v3001, %v2130
        %v3003 = vmul.f32 %v3001, %v2132
        %v3004 = vmul.f32 %v3001, %v2134
        %v3005 = vmul.f32 %v3001, %v2136
        %v3006 = vadd.f32 %v2997, %v3002
        %v3007 = vadd.f32 %v2998, %v3003
        %v3008 = vadd.f32 %v2999, %v3004
        %v3009 = vadd.f32 %v3000, %v3005
        %v3010 = vperm.slane %v2995, 2
        %v3011 = vmul.f32 %v3010, %v2138
        %v3012 = vmul.f32 %v3010, %v2140
        %v3013 = vmul.f32 %v3010, %v2142
        %v3014 = vmul.f32 %v3010, %v2144
        %v3015 = vadd.f32 %v3006, %v3011
        %v3016 = vadd.f32 %v3007, %v3012
        %v3017 = vadd.f32 %v3008, %v3013
        %v3018 = vadd.f32 %v3009, %v3014
        %v3019 = vperm.slane %v2995, 3
        %v3020 = vmul.f32 %v3019, %v2146
        %v3021 = vmul.f32 %v3019, %v2148
        %v3022 = vmul.f32 %v3019, %v2150
        %v3023 = vmul.f32 %v3019, %v2152
        %v3024 = vadd.f32 %v3015, %v3020
        %v3025 = vadd.f32 %v3016, %v3021
        %v3026 = vadd.f32 %v3017, %v3022
        %v3027 = vadd.f32 %v3018, %v3023
        %v3028 = vperm.slane %v2995, 4
        %v3029 = vmul.f32 %v3028, %v2154
        %v3030 = vmul.f32 %v3028, %v2156
        %v3031 = vmul.f32 %v3028, %v2158
        %v3032 = vmul.f32 %v3028, %v2160
        %v3033 = vadd.f32 %v3024, %v3029
        %v3034 = vadd.f32 %v3025, %v3030
        %v3035 = vadd.f32 %v3026, %v3031
        %v3036 = vadd.f32 %v3027, %v3032
        %v3037 = vperm.slane %v2995, 5
        %v3038 = vmul.f32 %v3037, %v2162
        %v3039 = vmul.f32 %v3037, %v2164
        %v3040 = vmul.f32 %v3037, %v2166
        %v3041 = vmul.f32 %v3037, %v2168
        %v3042 = vadd.f32 %v3033, %v3038
        %v3043 = vadd.f32 %v3034, %v3039
        %v3044 = vadd.f32 %v3035, %v3040
        %v3045 = vadd.f32 %v3036, %v3041
        %v3046 = vperm.slane %v2995, 6
        %v3047 = vmul.f32 %v3046, %v2170
        %v3048 = vmul.f32 %v3046, %v2172
        %v3049 = vmul.f32 %v3046, %v2174
        %v3050 = vmul.f32 %v3046, %v2176
        %v3051 = vadd.f32 %v3042, %v3047
        %v3052 = vadd.f32 %v3043, %v3048
        %v3053 = vadd.f32 %v3044, %v3049
        %v3054 = vadd.f32 %v3045, %v3050
        %v3055 = vperm.slane %v2995, 7
        %v3056 = vmul.f32 %v3055, %v2178
        %v3057 = vmul.f32 %v3055, %v2180
        %v3058 = vmul.f32 %v3055, %v2182
        %v3059 = vmul.f32 %v3055, %v2184
        %v3060 = vadd.f32 %v3051, %v3056
        %v3061 = vadd.f32 %v3052, %v3057
        %v3062 = vadd.f32 %v3053, %v3058
        %v3063 = vadd.f32 %v3054, %v3059
        %s3064 = sld [smem:[#allocation12 + $0x7]]
        %v3065 = vstv %s3064
        %v3066 = vadd.f32 %v3060, %v3065
        %v3067 = vadd.f32 %v3061, %v3065
        %v3068 = vadd.f32 %v3062, %v3065
        %v3069 = vadd.f32 %v3063, %v3065
        %v3070 = vmul.f32 %v3066, %v2179
        %v3071 = vmul.f32 %v3067, %v2181
        %v3072 = vmul.f32 %v3068, %v2183
        %v3073 = vmul.f32 %v3069, %v2185
        %v3074 = vpack.c.bf16 %v3071, %v3070
        %v3075 = vpack.c.bf16 %v3073, %v3072
        %3076 = vmatpush.bf16.msra.mxu0 %v2326
        %3077 = vmatpush.bf16.msra.mxu0 %v2325
        %3078 = vmatpush.bf16.msra.mxu0 %v2324
        %3079 = vmatpush.bf16.msra.mxu0 %v2323
        %3080 = vmatpush.bf16.msra.mxu0 %v2322
        %3081 = vmatpush.bf16.msra.mxu0 %v2321
        %3082 = vmatpush.bf16.msra.mxu0 %v2320
        %3083 = vmatpush.bf16.msra.mxu0 %v2319
        %3084 = vmatmul.bf16.gmra.mxu0 %v3074
        %v3085 = vpop.f32.mrf.mxu0
        %v3086 = vadd.f32 %v2285, %v3085
        %v3087 = vpop.f32.mrf.mxu0
        %v3088 = vadd.f32 %v2285, %v3087
        %3089 = vmatmul.bf16.gmra.mxu0 %v3075
        %v3090 = vpop.f32.mrf.mxu0
        %v3091 = vadd.f32 %v2285, %v3090
        %v3092 = vpop.f32.mrf.mxu0
        %v3093 = vadd.f32 %v2285, %v3092
        %3094 = vdwg.mxu0
        %s3095 = scalar_lea.vmem %s517, 224 [#allocation15]
        %3096 = vst [vmem:[%s3095] sm:$0xff] %v3086
        %3097 = vst [vmem:[%s3095 + $0x8] sm:$0xff] %v3088
        %3098 = vst [vmem:[%s3095 + $0x10] sm:$0xff] %v3091
        %3099 = vst [vmem:[%s3095 + $0x18] sm:$0xff] %v3093
        %s3100 = sand.u32 %s270, 1
        %s3101 = scalar_lea.sflag [#allocation4], %s3100
        %s3102 = sand.u32 %s270, 1
        %s3103 = smul.addr %s3102, 256
        %s3104 = scalar_lea.vmem [#allocation15], %s3103
        // Predicated region
        $region89: #{tpu_custom_call.1} parent=59 // pred_check
          %p3105 = pneg %p280
        $region90: #{tpu_custom_call.1} parent=59 // pred_check_branch
          %3107 = sbr.rel (%p3105) target = $region92
        $region91: #{tpu_custom_call.1} parent=59 // pred_region
          #allocation19 [shape = 'u32[6]{0}', space=smem, size = 0x18, scoped, tag = 'DMA stride descriptor']
          %s3108 = smul.u32 4, %s36
          %3110 = vsyncadd %s3101, 0
          %s3111 = smul.addr %s35, 64
          %s3112 = sadd.s32 %s3108, %s3111
          %s3113 = smul.addr %s3112, 8
          %s3114 = scalar_lea.hbm %s10, %s3113
          %s3116 = sshll.u32 1, 14
          %s3117 = sxor.u32 4294967295, %s3116
          %s3120 = sshll.u32 7, 18
          %s3121 = sxor.u32 4294967295, %s3120
          %s3122 = sand.u32 0, %s3121
          %s3124 = sor.u32 %s3122, 0
          %s3125 = sshll.u32 %s3104, 4
          %s3126 = int_to_ptr.vmem [resolvable:$true] %s3125
          %s3127 = sshll.u32 %s3114, 4
          %s3128 = int_to_ptr.hbm [resolvable:$true] %s3127
          %3134 = sst [smem:[#allocation19]] 512
          %s3135 = scalar_lea.smem [#allocation19], 1
          %3136 = sst [smem:[%s3135]] 1024
          %s3137 = scalar_lea.smem [#allocation19], 2
          %3138 = sst [smem:[%s3137]] 4
          %s3139 = scalar_lea.smem [#allocation19], 3
          %3140 = sst [smem:[%s3139]] 128
          %s3141 = scalar_lea.smem [#allocation19], 4
          %3142 = sst [smem:[%s3141]] 128
          %s3143 = scalar_lea.smem [#allocation19], 5
          %3144 = sst [smem:[%s3143]] 8
          %3146 = dma.general %s3126, 4096, %s3128, %s3101, [#allocation18], [#allocation19], %s3124, 0
        $region92: #{tpu_custom_call.1} parent=59 // pred_fallthru
          _
      $region60: #{tpu_custom_call.1} parent=5 // pred_fallthru
        _
      %p3147 = scmp.le.s32.totalorder 2, %s26
      // Predicated region
      $region93: #{tpu_custom_call.1} parent=5 // pred_check
        %p3148 = pneg %p3147
      $region94: #{tpu_custom_call.1} parent=5 // pred_check_branch
        %3150 = sbr.rel (%p3148) target = $region96
      $region95: #{tpu_custom_call.1} parent=5 // pred_region
        %s3151 = ssub.s32 %s26, 2
        // Predicated region
        $region97: #{tpu_custom_call.1} parent=95 // pred_check
          %p3152 = pneg %p286
        $region98: #{tpu_custom_call.1} parent=95 // pred_check_branch
          %3154 = sbr.rel (%p3152) target = $region100
        $region99: #{tpu_custom_call.1} parent=95 // pred_region
          %s3155 = sand.u32 %s271, 1
          %s3156 = scalar_lea.sflag [#allocation4], %s3155
          %s3157 = sand.u32 %s271, 1
          %s3158 = smul.addr %s3157, 256
          %s3159 = scalar_lea.vmem [#allocation15], %s3158
          %3161 = dma.done %s3156, 4096
        $region100: #{tpu_custom_call.1} parent=95 // pred_fallthru
          _
      $region96: #{tpu_custom_call.1} parent=5 // pred_fallthru
        _
    $region6: #{tpu_custom_call.1} parent=1 // loop_footer
      %s30 = sadd.s32 1, %s26
    $region7: #{tpu_custom_call.1} parent=1 // loop_footer_branch
      %25 = sbr.rel target = $region3
    $region8: #{tpu_custom_call.1} parent=1 // loop_exit
      _
    %3162 = vsyncpa [#allocation3], 1
    %s3163 = scalar_lea.sflag [#allocation3], 1
    %3164 = vsyncpa %s3163, 1
    %3165 = vsyncpa [#allocation7], 1
    %3166 = vsyncpa [#allocation10], 1
    %3167 = vsyncpa [#allocation14], 1
    %3168 = vsyncpa [#allocation4], 1
    %s3169 = scalar_lea.sflag [#allocation4], 1
    %3170 = vsyncpa %s3169, 1
    %3171 = vsyncpa [#allocation5], 1
    %s3172 = scalar_lea.sflag [#allocation5], 1
    %3173 = vsyncpa %s3172, 1

</llo_original>
